<compile_context>
chip_gen: v5e
topology: v5e:2x2
jax: 0.10.0
libtpu: 0.0.40
codegen_flags: <defaults>
</compile_context>

<pallas_src>
import functools

import numpy as np
import jax
import jax.numpy as jnp
from jax.experimental import pallas as pl
from jax.experimental.pallas import tpu as pltpu

LEAKY_SLOPE = 0.01   # PyTorch F.leaky_relu default negative_slope
LANE = 128


def _round_up(x, m):
    return ((x + m - 1) // m) * m


def _leaky_relu(x):
    return jnp.where(x > 0, x, LEAKY_SLOPE * x)


def _elu(x):
    # never evaluate exp of a large positive in the dead branch
    return jnp.where(x > 0, x, jnp.exp(jnp.minimum(x, 0.0)) - 1.0)


def _mm(x, w):
    """MXU matmul: bf16 operands, f32 accumulation."""
    return jnp.dot(x.astype(jnp.bfloat16), w.astype(jnp.bfloat16),
                   preferred_element_type=jnp.float32)


# --------------------------------------------------------------------------
# Single fused kernel.  One grid step == BM molecules.
# --------------------------------------------------------------------------
def _fingerprint_kernel(
        atom_ref, bond_ref, adeg_ref, bdeg_ref, mask_ref,
        afc_w_ref, afc_b_ref, nfc_wa_ref, nfc_wb_ref, nfc_b_ref,
        align_wf_ref, align_wn_ref, align_b_ref,
        attend_w_ref, attend_b_ref,
        gwih_ref, gwhh_ref, gbih_ref, gbhh_ref,
        mol_wm_ref, mol_wa_ref, mol_b_ref,
        mattend_w_ref, mattend_b_ref,
        mgwih_ref, mgwhh_ref, mgbih_ref, mgbhh_ref,
        out_w_ref, out_b_ref,
        out_ref,
        *, radius, T, BM, M, K, D):
    f32 = jnp.float32
    bf16 = jnp.bfloat16
    N = BM * M          # atoms in this block
    NK = N * K          # neighbor slots in this block

    a = atom_ref[...].reshape(N, atom_ref.shape[-1])        # (N, Fa)
    bd = bond_ref[...].reshape(N, bond_ref.shape[-1])        # (N, Fb)
    ia = adeg_ref[...]                                        # (BM, M, K) int32
    ib = bdeg_ref[...]                                        # (BM, M, K) int32

    # In-molecule neighbor indices -> block-flat atom indices (block-diagonal
    # gather expressed as one big one-hot matmul).
    mol_off = jax.lax.broadcasted_iota(jnp.int32, (BM, M, K), 0) * M
    ga = (ia + mol_off).reshape(N, K)
    gb = (ib + mol_off).reshape(N, K)

    iota_n = jax.lax.broadcasted_iota(jnp.int32, (N, K, N), 2)
    oh_a = jnp.where(ga[:, :, None] == iota_n, 1.0, 0.0).reshape(NK, N).astype(bf16)
    oh_b = jnp.where(gb[:, :, None] == iota_n, 1.0, 0.0).reshape(NK, N).astype(bf16)

    # Padding-neighbor masks (in-molecule index M-1 is the padding atom).
    pad = (ia == M - 1).reshape(N, K)
    attend_mask = jnp.where(pad, 0.0, 1.0)                    # (N, K)
    softmax_mask = jnp.where(pad, -9.0e8, 0.0)                # (N, K)

    # atom_fc + leaky_relu
    atom_feature = _leaky_relu(_mm(a, afc_w_ref[...]) + afc_b_ref[...])       # (N, D)

    # neighbor_fc on in-kernel gathered raw atom/bond features.  Split weight
    # (Wa | Wb) avoids materialising the concat; bf16 gather is exact for the
    # one-hot and matches the bf16 cast the following matmul does anyway.
    atom_nbr = jnp.dot(oh_a, a.astype(bf16), preferred_element_type=f32)      # (NK, Fa)
    bond_nbr = jnp.dot(oh_b, bd.astype(bf16), preferred_element_type=f32)     # (NK, Fb)
    nbr = _leaky_relu(_mm(atom_nbr, nfc_wa_ref[...]) +
                      _mm(bond_nbr, nfc_wb_ref[...]) + nfc_b_ref[...])        # (NK, D)

    h = atom_feature            # GRU hidden state (VMEM / vreg resident)
    feat = atom_feature         # attention query features at d = 0

    # radius is a static Python int -> fully unrolled, all weight indexing static.
    for d in range(radius):
        if d > 0:
            feat = jnp.maximum(h, 0.0)                                        # relu
            nbr = jnp.dot(oh_a, feat.astype(bf16), preferred_element_type=f32)

        # align Linear(2D -> 1) as split-weight VPU reduce (no concat, no N=1 matmul)
        wf = align_wf_ref[d:d + 1, :]                                         # (1, D)
        wn = align_wn_ref[d:d + 1, :].reshape(1, 1, D)
        ab = align_b_ref[d:d + 1, :]                                          # (1, 1)
        nbr3 = nbr.reshape(N, K, D)
        s_feat = jnp.sum(feat * wf, axis=-1, keepdims=True)                   # (N, 1)
        s_nbr = jnp.sum(nbr3 * wn, axis=-1)                                   # (N, K)
        score = _leaky_relu(s_feat + s_nbr + ab)                              # (N, K)

        # masked softmax over the K neighbors
        s = score + softmax_mask
        s = s - jnp.max(s, axis=-1, keepdims=True)
        e = jnp.exp(s)
        attn = e * pl.reciprocal(jnp.sum(e, axis=-1, keepdims=True), approx=True)
        attn = attn * attend_mask                                             # (N, K)

        # attend transform + context
        nt = (_mm(nbr, attend_w_ref[d]) + attend_b_ref[d]).reshape(N, K, D)   # (N, K, D)
        ctx = _elu(jnp.sum(attn[:, :, None] * nt, axis=1))                    # (N, D)

        # GRUCell, PyTorch gate order (r, z, n); gates merged into one matmul
        # per side -- slices are lane-aligned because D is a 128 multiple.
        gi = _mm(ctx, gwih_ref[d]) + gbih_ref[d]                              # (N, 3D)
        gh = _mm(h, gwhh_ref[d]) + gbhh_ref[d]                                # (N, 3D)
        r = jax.nn.sigmoid(gi[:, 0:D] + gh[:, 0:D])
        z = jax.nn.sigmoid(gi[:, D:2 * D] + gh[:, D:2 * D])
        n = jnp.tanh(gi[:, 2 * D:3 * D] + r * gh[:, 2 * D:3 * D])
        h = (1.0 - z) * n + z * h

    act = jnp.maximum(h, 0.0)                                                 # (N, D)

    # ---------------------- molecule phase (fused) ----------------------
    mask2 = mask_ref[...]                                                     # (BM, M)
    act3 = act.reshape(BM, M, D)
    mol = jnp.sum(act3 * mask2[:, :, None], axis=1)                           # (BM, D)
    act_mol = jnp.maximum(mol, 0.0)

    msmask = jnp.where(mask2 == 0.0, -9.0e8, 0.0)                             # (BM, M)

    # T-invariant pieces hoisted out of the loop.
    ft3 = (_mm(act, mattend_w_ref[...]) + mattend_b_ref[...]).reshape(BM, M, D)
    s_atom = jnp.sum(act3 * mol_wa_ref[...].reshape(1, 1, D), axis=-1)        # (BM, M)
    mb = mol_b_ref[...]                                                       # (1, 1)

    for _ in range(T):
        s_mol = jnp.sum(act_mol * mol_wm_ref[...], axis=-1, keepdims=True)    # (BM, 1)
        score = _leaky_relu(s_mol + s_atom + mb)                              # (BM, M)

        s = score + msmask
        s = s - jnp.max(s, axis=-1, keepdims=True)
        e = jnp.exp(s)
        attn = e * pl.reciprocal(jnp.sum(e, axis=-1, keepdims=True), approx=True)
        attn = attn * mask2                                                   # (BM, M)

        mctx = _elu(jnp.sum(attn[:, :, None] * ft3, axis=1))                  # (BM, D)

        gi = _mm(mctx, mgwih_ref[...]) + mgbih_ref[...]                       # (BM, 3D)
        gh = _mm(mol, mgwhh_ref[...]) + mgbhh_ref[...]
        r = jax.nn.sigmoid(gi[:, 0:D] + gh[:, 0:D])
        z = jax.nn.sigmoid(gi[:, D:2 * D] + gh[:, D:2 * D])
        n = jnp.tanh(gi[:, 2 * D:3 * D] + r * gh[:, 2 * D:3 * D])
        mol = (1.0 - z) * n + z * mol
        act_mol = jnp.maximum(mol, 0.0)

    # output Linear -- lane-dense (BM, Up) store.
    out_ref[...] = (_mm(mol, out_w_ref[...]) + out_b_ref[...]).astype(out_ref.dtype)


# --------------------------------------------------------------------------
# Parameter construction (mirrors nn.Module shapes; align Linear split into
# (feat, nbr) halves, GRU weights kept per gate -- packing happens later).
# --------------------------------------------------------------------------
def init_params(key, radius, fa, fb, D, out_units):
    def nrm(k, shape):
        return 0.1 * jax.random.normal(k, shape, jnp.float32)

    keys = iter(jax.random.split(key, 40))
    nk = lambda: next(keys)
    p = {}
    p["atom_fc_w"] = nrm(nk(), (fa, D));           p["atom_fc_b"] = nrm(nk(), (D,))
    p["nfc_wa"] = nrm(nk(), (fa, D));              p["nfc_wb"] = nrm(nk(), (fb, D))
    p["nfc_b"] = nrm(nk(), (D,))
    p["align_wf"] = nrm(nk(), (radius, D));        p["align_wn"] = nrm(nk(), (radius, D))
    p["align_b"] = nrm(nk(), (radius,))
    p["attend_w"] = nrm(nk(), (radius, D, D));     p["attend_b"] = nrm(nk(), (radius, D))
    p["gru_wih"] = nrm(nk(), (radius, 3, D, D));   p["gru_whh"] = nrm(nk(), (radius, 3, D, D))
    p["gru_bih"] = nrm(nk(), (radius, 3, D));      p["gru_bhh"] = nrm(nk(), (radius, 3, D))
    p["mol_align_wm"] = nrm(nk(), (D,));           p["mol_align_wa"] = nrm(nk(), (D,))
    p["mol_align_b"] = nrm(nk(), (1,))
    p["mol_attend_w"] = nrm(nk(), (D, D));         p["mol_attend_b"] = nrm(nk(), (D,))
    p["mol_gru_wih"] = nrm(nk(), (3, D, D));       p["mol_gru_whh"] = nrm(nk(), (3, D, D))
    p["mol_gru_bih"] = nrm(nk(), (3, D));          p["mol_gru_bhh"] = nrm(nk(), (3, D))
    p["out_w"] = nrm(nk(), (D, out_units));        p["out_b"] = nrm(nk(), (out_units,))
    return p


def _pad_last(x, n):
    p = n - x.shape[-1]
    if p == 0:
        return x
    return jnp.pad(x, [(0, 0)] * (x.ndim - 1) + [(0, p)])


def _pad_last2(x, n0, n1):
    p0 = n0 - x.shape[-2]
    p1 = n1 - x.shape[-1]
    if p0 == 0 and p1 == 0:
        return x
    return jnp.pad(x, [(0, 0)] * (x.ndim - 2) + [(0, p0), (0, p1)])


def _prepare_params(p, Dp, Up):
    """Zero-pad fingerprint/output dims to 128-lane multiples (padded lanes stay 0
    through every nonlinearity and GRU update), pack per-gate GRU weights into a
    single lane-aligned (Dp, 3*Dp) matrix, and pre-cast matmul weights to bf16."""
    bf16 = jnp.bfloat16
    radius = p["align_wf"].shape[0]
    D = p["atom_fc_w"].shape[1]
    U = p["out_w"].shape[1]

    def packW(w):   # (..., 3, D, D) -> (..., Dp, 3*Dp), column order r|z|n
        w = _pad_last2(w, Dp, Dp)
        w = jnp.swapaxes(w, -3, -2)                       # (..., Dp, 3, Dp)
        return w.reshape(w.shape[:-3] + (Dp, 3 * Dp)).astype(bf16)

    def packB(b):   # (..., 3, D) -> (..., 1, 3*Dp)
        b = _pad_last(b, Dp)
        return b.reshape(b.shape[:-2] + (1, 3 * Dp))

    return {
        "afc_w": _pad_last(p["atom_fc_w"], Dp).astype(bf16),
        "afc_b": _pad_last(p["atom_fc_b"].reshape(1, D), Dp),
        "nfc_wa": _pad_last(p["nfc_wa"], Dp).astype(bf16),
        "nfc_wb": _pad_last(p["nfc_wb"], Dp).astype(bf16),
        "nfc_b": _pad_last(p["nfc_b"].reshape(1, D), Dp),
        "align_wf": _pad_last(p["align_wf"], Dp),
        "align_wn": _pad_last(p["align_wn"], Dp),
        "align_b": p["align_b"].reshape(radius, 1),
        "attend_w": _pad_last2(p["attend_w"], Dp, Dp).astype(bf16),
        "attend_b": _pad_last(p["attend_b"].reshape(radius, 1, D), Dp),
        "gru_wih": packW(p["gru_wih"]),
        "gru_whh": packW(p["gru_whh"]),
        "gru_bih": packB(p["gru_bih"]),
        "gru_bhh": packB(p["gru_bhh"]),
        "mol_wm": _pad_last(p["mol_align_wm"].reshape(1, D), Dp),
        "mol_wa": _pad_last(p["mol_align_wa"].reshape(1, D), Dp),
        "mol_b": p["mol_align_b"].reshape(1, 1),
        "mattend_w": _pad_last2(p["mol_attend_w"], Dp, Dp).astype(bf16),
        "mattend_b": _pad_last(p["mol_attend_b"].reshape(1, D), Dp),
        "mgru_wih": packW(p["mol_gru_wih"]),
        "mgru_whh": packW(p["mol_gru_whh"]),
        "mgru_bih": packB(p["mol_gru_bih"]),
        "mgru_bhh": packB(p["mol_gru_bhh"]),
        "out_w": _pad_last2(p["out_w"], Dp, Up).astype(bf16),
        "out_b": _pad_last(p["out_b"].reshape(1, U), Up),
    }


# --------------------------------------------------------------------------
# Forward pass: ONE pallas_call, batched over molecules.
# --------------------------------------------------------------------------
def fingerprint_forward(params, atom_list, bond_list, atom_degree_list,
                        bond_degree_list, atom_mask, *, radius, T,
                        batch_block=None):
    B, M, Fa = atom_list.shape
    Fb = bond_list.shape[-1]
    K = atom_degree_list.shape[-1]
    D = params["atom_fc_w"].shape[1]
    U = params["out_w"].shape[1]
    Dp = _round_up(D, LANE)
    Up = _round_up(U, LANE)

    # TODO(synk): dropout (p_dropout) implemented as identity (eval-mode forward);
    # batch_normalization=True branch not implemented (module default is False).

    # Molecules per grid step (amortize per-step overhead, fill MXU/sublanes).
    if batch_block is None:
        bm = B if B <= 16 else 16
    else:
        bm = max(1, min(batch_block, B))
    if bm < B:
        bm = max(8, (bm // 8) * 8)      # output-block sublane constraint
    Bp = ((B + bm - 1) // bm) * bm

    if Bp != B:
        pb = Bp - B
        atom_list = jnp.pad(atom_list, ((0, pb), (0, 0), (0, 0)))
        bond_list = jnp.pad(bond_list, ((0, pb), (0, 0), (0, 0)))
        atom_degree_list = jnp.pad(atom_degree_list, ((0, pb), (0, 0), (0, 0)),
                                   constant_values=M - 1)
        bond_degree_list = jnp.pad(bond_degree_list, ((0, pb), (0, 0), (0, 0)),
                                   constant_values=M - 1)
        atom_mask = jnp.pad(atom_mask, ((0, pb), (0, 0)))

    pp = _prepare_params(params, Dp, Up)
    weights = [
        pp["afc_w"], pp["afc_b"], pp["nfc_wa"], pp["nfc_wb"], pp["nfc_b"],
        pp["align_wf"], pp["align_wn"], pp["align_b"],
        pp["attend_w"], pp["attend_b"],
        pp["gru_wih"], pp["gru_whh"], pp["gru_bih"], pp["gru_bhh"],
        pp["mol_wm"], pp["mol_wa"], pp["mol_b"],
        pp["mattend_w"], pp["mattend_b"],
        pp["mgru_wih"], pp["mgru_whh"], pp["mgru_bih"], pp["mgru_bhh"],
        pp["out_w"], pp["out_b"],
    ]

    def _wspec(x):
        nd = x.ndim
        return pl.BlockSpec(tuple(x.shape), lambda b, _nd=nd: (0,) * _nd)

    def _bspec(tail):
        nd = len(tail)
        return pl.BlockSpec((bm,) + tuple(tail),
                            lambda b, _nd=nd: (b,) + (0,) * _nd)

    in_specs = ([_bspec((M, Fa)), _bspec((M, Fb)), _bspec((M, K)),
                 _bspec((M, K)), _bspec((M,))]
                + [_wspec(w) for w in weights])

    out = pl.pallas_call(
        functools.partial(_fingerprint_kernel, radius=radius, T=T,
                          BM=bm, M=M, K=K, D=Dp),
        out_shape=jax.ShapeDtypeStruct((Bp, Up), jnp.float32),
        grid=(Bp // bm,),
        in_specs=in_specs,
        out_specs=pl.BlockSpec((bm, Up), lambda b: (b, 0)),
        compiler_params=pltpu.CompilerParams(dimension_semantics=("parallel",)),
    )(atom_list.astype(jnp.float32), bond_list.astype(jnp.float32),
      atom_degree_list.astype(jnp.int32), bond_degree_list.astype(jnp.int32),
      atom_mask.astype(jnp.float32), *weights)

    return out[:B, :U]


# --------------------------------------------------------------------------
# Pure-JAX f32 reference (direct port of the PyTorch forward, eval mode).
# --------------------------------------------------------------------------
def fingerprint_reference(params, atom_list, bond_list, adeg, bdeg, atom_mask,
                          *, radius, T):
    B, M, _ = atom_list.shape
    mask = atom_mask[..., None]                                        # (B, M, 1)

    def gather(feats, idx):
        return jax.vmap(lambda f, i: f[i])(feats, idx)                 # (B, M, K, F)

    feat = _leaky_relu(atom_list @ params["atom_fc_w"] + params["atom_fc_b"])
    atom_nbr = gather(atom_list, adeg)
    bond_nbr = gather(bond_list, bdeg)
    nbr = _leaky_relu(atom_nbr @ params["nfc_wa"] + bond_nbr @ params["nfc_wb"]
                      + params["nfc_b"])
    attend_mask = jnp.where(adeg == M - 1, 0.0, 1.0)[..., None]
    softmax_mask = jnp.where(adeg == M - 1, -9.0e8, 0.0)[..., None]

    h = feat
    q = feat
    for d in range(radius):
        if d > 0:
            q = jax.nn.relu(h)
            nbr = gather(q, adeg)
        s_feat = jnp.einsum("bmd,d->bm", q, params["align_wf"][d])[:, :, None, None]
        s_nbr = jnp.einsum("bmkd,d->bmk", nbr, params["align_wn"][d])[..., None]
        score = _leaky_relu(s_feat + s_nbr + params["align_b"][d]) + softmax_mask
        attn = jax.nn.softmax(score, axis=-2) * attend_mask
        nt = nbr @ params["attend_w"][d] + params["attend_b"][d]
        ctx = _elu(jnp.sum(attn * nt, axis=-2))
        wih, whh = params["gru_wih"][d], params["gru_whh"][d]
        bih, bhh = params["gru_bih"][d], params["gru_bhh"][d]
        r = jax.nn.sigmoid(ctx @ wih[0] + bih[0] + h @ whh[0] + bhh[0])
        z = jax.nn.sigmoid(ctx @ wih[1] + bih[1] + h @ whh[1] + bhh[1])
        n = jnp.tanh(ctx @ wih[2] + bih[2] + r * (h @ whh[2] + bhh[2]))
        h = (1.0 - z) * n + z * h

    act = jax.nn.relu(h)
    mol = jnp.sum(act * mask, axis=1)
    act_mol = jax.nn.relu(mol)
    msmask = jnp.where(mask == 0, -9.0e8, 0.0)
    for _ in range(T):
        s_mol = jnp.einsum("bd,d->b", act_mol, params["mol_align_wm"])[:, None, None]
        s_atom = jnp.einsum("bmd,d->bm", act, params["mol_align_wa"])[..., None]
        score = _leaky_relu(s_mol + s_atom + params["mol_align_b"]) + msmask
        attn = jax.nn.softmax(score, axis=1) * mask
        ft = act @ params["mol_attend_w"] + params["mol_attend_b"]
        mctx = _elu(jnp.sum(attn * ft, axis=1))
        wih, whh = params["mol_gru_wih"], params["mol_gru_whh"]
        bih, bhh = params["mol_gru_bih"], params["mol_gru_bhh"]
        r = jax.nn.sigmoid(mctx @ wih[0] + bih[0] + mol @ whh[0] + bhh[0])
        z = jax.nn.sigmoid(mctx @ wih[1] + bih[1] + mol @ whh[1] + bhh[1])
        n = jnp.tanh(mctx @ wih[2] + bih[2] + r * (mol @ whh[2] + bhh[2]))
        mol = (1.0 - z) * n + z * mol
        act_mol = jax.nn.relu(mol)
    return mol @ params["out_w"] + params["out_b"]


# --------------------------------------------------------------------------
if __name__ == "__main__":
    radius, T = 2, 2
    B, M, K = 2, 8, 4          # batch, mol_length, max_neighbor_num
    Fa, Fb = 16, 8             # atom / bond feature dims
    D = 32                     # fingerprint_dim
    out_units = 4

    key = jax.random.PRNGKey(0)
    k_par, k_atom, k_bond, k_adeg, k_bdeg = jax.random.split(key, 5)

    params = init_params(k_par, radius, Fa, Fb, D, out_units)

    atom_list = jax.random.normal(k_atom, (B, M, Fa), jnp.float32)
    bond_list = jax.random.normal(k_bond, (B, M, Fb), jnp.float32)
    atom_degree_list = jax.random.randint(k_adeg, (B, M, K), 0, M)   # M-1 == padding idx
    bond_degree_list = jax.random.randint(k_bdeg, (B, M, K), 0, M)
    # last atom of each molecule is the padding atom (mask = 0)
    atom_mask = jnp.concatenate(
        [jnp.ones((B, M - 1), jnp.float32), jnp.zeros((B, 1), jnp.float32)], axis=1)

    fwd = jax.jit(functools.partial(fingerprint_forward, radius=radius, T=T))
    out = jax.block_until_ready(
        fwd(params, atom_list, bond_list, atom_degree_list, bond_degree_list,
            atom_mask))

    ref = fingerprint_reference(params, atom_list, bond_list, atom_degree_list,
                                bond_degree_list, atom_mask, radius=radius, T=T)

    assert out.shape == (B, out_units)
    assert bool(jnp.all(jnp.isfinite(out)))
    np.testing.assert_allclose(np.asarray(out), np.asarray(ref), rtol=5e-2, atol=5e-2)
    print("KERNEL_OK")
</pallas_src>

<mosaic_0001>
module attributes {stable_mosaic.version = 11 : i64} {
  func.func @_fingerprint_kernel(%arg0: i32, %arg1: memref<2x8x16xf32, #tpu.memory_space<vmem>>, %arg2: memref<2x8x8xf32, #tpu.memory_space<vmem>>, %arg3: memref<2x8x4xi32, #tpu.memory_space<vmem>>, %arg4: memref<2x8x4xi32, #tpu.memory_space<vmem>>, %arg5: memref<2x8xf32, #tpu.memory_space<vmem>>, %arg6: memref<16x128xbf16, #tpu.memory_space<vmem>>, %arg7: memref<1x128xf32, #tpu.memory_space<vmem>>, %arg8: memref<16x128xbf16, #tpu.memory_space<vmem>>, %arg9: memref<8x128xbf16, #tpu.memory_space<vmem>>, %arg10: memref<1x128xf32, #tpu.memory_space<vmem>>, %arg11: memref<2x128xf32, #tpu.memory_space<vmem>>, %arg12: memref<2x128xf32, #tpu.memory_space<vmem>>, %arg13: memref<2x1xf32, #tpu.memory_space<vmem>>, %arg14: memref<2x128x128xbf16, #tpu.memory_space<vmem>>, %arg15: memref<2x1x128xf32, #tpu.memory_space<vmem>>, %arg16: memref<2x128x384xbf16, #tpu.memory_space<vmem>>, %arg17: memref<2x128x384xbf16, #tpu.memory_space<vmem>>, %arg18: memref<2x1x384xf32, #tpu.memory_space<vmem>>, %arg19: memref<2x1x384xf32, #tpu.memory_space<vmem>>, %arg20: memref<1x128xf32, #tpu.memory_space<vmem>>, %arg21: memref<1x128xf32, #tpu.memory_space<vmem>>, %arg22: memref<1x1xf32, #tpu.memory_space<vmem>>, %arg23: memref<128x128xbf16, #tpu.memory_space<vmem>>, %arg24: memref<1x128xf32, #tpu.memory_space<vmem>>, %arg25: memref<128x384xbf16, #tpu.memory_space<vmem>>, %arg26: memref<128x384xbf16, #tpu.memory_space<vmem>>, %arg27: memref<1x384xf32, #tpu.memory_space<vmem>>, %arg28: memref<1x384xf32, #tpu.memory_space<vmem>>, %arg29: memref<128x128xbf16, #tpu.memory_space<vmem>>, %arg30: memref<1x128xf32, #tpu.memory_space<vmem>>, %arg31: memref<2x128xf32, #tpu.memory_space<vmem>>) attributes {dimension_semantics = [#tpu.dimension_semantics<parallel>], iteration_bounds = array<i64: 1>, scalar_prefetch = 0 : i64, scratch_operands = 0 : i64, tpu.core_type = #tpu.core_type<tc>, window_params = [{transform_indices = @transform_0, window_bounds = array<i64: 2, 8, 16>}, {transform_indices = @transform_1, window_bounds = array<i64: 2, 8, 8>}, {transform_indices = @transform_2, window_bounds = array<i64: 2, 8, 4>}, {transform_indices = @transform_3, window_bounds = array<i64: 2, 8, 4>}, {transform_indices = @transform_4, window_bounds = array<i64: 2, 8>}, {pipeline_mode = #tpu.pipeline_mode<synchronous>, transform_indices = @transform_5, window_bounds = array<i64: 16, 128>}, {pipeline_mode = #tpu.pipeline_mode<synchronous>, transform_indices = @transform_6, window_bounds = array<i64: 1, 128>}, {pipeline_mode = #tpu.pipeline_mode<synchronous>, transform_indices = @transform_7, window_bounds = array<i64: 16, 128>}, {pipeline_mode = #tpu.pipeline_mode<synchronous>, transform_indices = @transform_8, window_bounds = array<i64: 8, 128>}, {pipeline_mode = #tpu.pipeline_mode<synchronous>, transform_indices = @transform_9, window_bounds = array<i64: 1, 128>}, {pipeline_mode = #tpu.pipeline_mode<synchronous>, transform_indices = @transform_10, window_bounds = array<i64: 2, 128>}, {pipeline_mode = #tpu.pipeline_mode<synchronous>, transform_indices = @transform_11, window_bounds = array<i64: 2, 128>}, {pipeline_mode = #tpu.pipeline_mode<synchronous>, transform_indices = @transform_12, window_bounds = array<i64: 2, 1>}, {pipeline_mode = #tpu.pipeline_mode<synchronous>, transform_indices = @transform_13, window_bounds = array<i64: 2, 128, 128>}, {pipeline_mode = #tpu.pipeline_mode<synchronous>, transform_indices = @transform_14, window_bounds = array<i64: 2, 1, 128>}, {pipeline_mode = #tpu.pipeline_mode<synchronous>, transform_indices = @transform_15, window_bounds = array<i64: 2, 128, 384>}, {pipeline_mode = #tpu.pipeline_mode<synchronous>, transform_indices = @transform_16, window_bounds = array<i64: 2, 128, 384>}, {pipeline_mode = #tpu.pipeline_mode<synchronous>, transform_indices = @transform_17, window_bounds = array<i64: 2, 1, 384>}, {pipeline_mode = #tpu.pipeline_mode<synchronous>, transform_indices = @transform_18, window_bounds = array<i64: 2, 1, 384>}, {pipeline_mode = #tpu.pipeline_mode<synchronous>, transform_indices = @transform_19, window_bounds = array<i64: 1, 128>}, {pipeline_mode = #tpu.pipeline_mode<synchronous>, transform_indices = @transform_20, window_bounds = array<i64: 1, 128>}, {pipeline_mode = #tpu.pipeline_mode<synchronous>, transform_indices = @transform_21, window_bounds = array<i64: 1, 1>}, {pipeline_mode = #tpu.pipeline_mode<synchronous>, transform_indices = @transform_22, window_bounds = array<i64: 128, 128>}, {pipeline_mode = #tpu.pipeline_mode<synchronous>, transform_indices = @transform_23, window_bounds = array<i64: 1, 128>}, {pipeline_mode = #tpu.pipeline_mode<synchronous>, transform_indices = @transform_24, window_bounds = array<i64: 128, 384>}, {pipeline_mode = #tpu.pipeline_mode<synchronous>, transform_indices = @transform_25, window_bounds = array<i64: 128, 384>}, {pipeline_mode = #tpu.pipeline_mode<synchronous>, transform_indices = @transform_26, window_bounds = array<i64: 1, 384>}, {pipeline_mode = #tpu.pipeline_mode<synchronous>, transform_indices = @transform_27, window_bounds = array<i64: 1, 384>}, {pipeline_mode = #tpu.pipeline_mode<synchronous>, transform_indices = @transform_28, window_bounds = array<i64: 128, 128>}, {pipeline_mode = #tpu.pipeline_mode<synchronous>, transform_indices = @transform_29, window_bounds = array<i64: 1, 128>}, {transform_indices = @transform_30, window_bounds = array<i64: 2, 128>}]} {
    %c0 = arith.constant 0 : index
    %c0_0 = arith.constant 0 : index
    %c0_1 = arith.constant 0 : index
    %0 = vector.load %arg1[%c0, %c0_0, %c0_1] : memref<2x8x16xf32, #tpu.memory_space<vmem>>, vector<2x8x16xf32>
    %1 = vector.shape_cast %0 : vector<2x8x16xf32> to vector<16x16xf32>
    %c0_2 = arith.constant 0 : index
    %c0_3 = arith.constant 0 : index
    %c0_4 = arith.constant 0 : index
    %2 = vector.load %arg2[%c0_2, %c0_3, %c0_4] : memref<2x8x8xf32, #tpu.memory_space<vmem>>, vector<2x8x8xf32>
    %3 = vector.shape_cast %2 : vector<2x8x8xf32> to vector<16x8xf32>
    %c0_5 = arith.constant 0 : index
    %c0_6 = arith.constant 0 : index
    %c0_7 = arith.constant 0 : index
    %4 = vector.load %arg3[%c0_5, %c0_6, %c0_7] : memref<2x8x4xi32, #tpu.memory_space<vmem>>, vector<2x8x4xi32>
    %c0_8 = arith.constant 0 : index
    %c0_9 = arith.constant 0 : index
    %c0_10 = arith.constant 0 : index
    %5 = vector.load %arg4[%c0_8, %c0_9, %c0_10] : memref<2x8x4xi32, #tpu.memory_space<vmem>>, vector<2x8x4xi32>
    %6 = tpu.iota {dimensions = array<i32: 0>} : vector<2x8x4xi32>
    %c8_i32 = arith.constant 8 : i32
    %7 = vector.broadcast %c8_i32 : i32 to vector<2x8x4xi32>
    %8 = arith.muli %6, %7 : vector<2x8x4xi32>
    %9 = arith.addi %4, %8 : vector<2x8x4xi32>
    %10 = vector.shape_cast %9 : vector<2x8x4xi32> to vector<16x4xi32>
    %11 = arith.addi %5, %8 : vector<2x8x4xi32>
    %12 = vector.shape_cast %11 : vector<2x8x4xi32> to vector<16x4xi32>
    %13 = tpu.iota {dimensions = array<i32: 2>} : vector<16x4x16xi32>
    %14 = vector.shape_cast %10 : vector<16x4xi32> to vector<16x4x1xi32>
    %15 = vector.broadcast %14 : vector<16x4x1xi32> to vector<16x4x16xi32>
    %16 = arith.cmpi eq, %15, %13 : vector<16x4x16xi32>
    %cst = arith.constant 1.000000e+00 : f32
    %cst_11 = arith.constant 0.000000e+00 : f32
    %17 = vector.broadcast %cst : f32 to vector<16x4x16xf32>
    %18 = vector.broadcast %cst_11 : f32 to vector<16x4x16xf32>
    %19 = arith.select %16, %17, %18 : vector<16x4x16xi1>, vector<16x4x16xf32>
    %20 = vector.shape_cast %19 : vector<16x4x16xf32> to vector<64x16xf32>
    %21 = arith.truncf %20 : vector<64x16xf32> to vector<64x16xbf16>
    %22 = vector.shape_cast %12 : vector<16x4xi32> to vector<16x4x1xi32>
    %23 = vector.broadcast %22 : vector<16x4x1xi32> to vector<16x4x16xi32>
    %24 = arith.cmpi eq, %23, %13 : vector<16x4x16xi32>
    %cst_12 = arith.constant 1.000000e+00 : f32
    %cst_13 = arith.constant 0.000000e+00 : f32
    %25 = vector.broadcast %cst_12 : f32 to vector<16x4x16xf32>
    %26 = vector.broadcast %cst_13 : f32 to vector<16x4x16xf32>
    %27 = arith.select %24, %25, %26 : vector<16x4x16xi1>, vector<16x4x16xf32>
    %28 = vector.shape_cast %27 : vector<16x4x16xf32> to vector<64x16xf32>
    %29 = arith.truncf %28 : vector<64x16xf32> to vector<64x16xbf16>
    %c7_i32 = arith.constant 7 : i32
    %30 = vector.broadcast %c7_i32 : i32 to vector<2x8x4xi32>
    %31 = arith.cmpi eq, %4, %30 : vector<2x8x4xi32>
    %32 = vector.shape_cast %31 : vector<2x8x4xi1> to vector<16x4xi1>
    %cst_14 = arith.constant 0.000000e+00 : f32
    %cst_15 = arith.constant 1.000000e+00 : f32
    %33 = vector.broadcast %cst_14 : f32 to vector<16x4xf32>
    %34 = vector.broadcast %cst_15 : f32 to vector<16x4xf32>
    %35 = arith.select %32, %33, %34 : vector<16x4xi1>, vector<16x4xf32>
    %cst_16 = arith.constant -9.000000e+08 : f32
    %cst_17 = arith.constant 0.000000e+00 : f32
    %36 = vector.broadcast %cst_16 : f32 to vector<16x4xf32>
    %37 = vector.broadcast %cst_17 : f32 to vector<16x4xf32>
    %38 = arith.select %32, %36, %37 : vector<16x4xi1>, vector<16x4xf32>
    %c0_18 = arith.constant 0 : index
    %c0_19 = arith.constant 0 : index
    %39 = vector.load %arg6[%c0_18, %c0_19] : memref<16x128xbf16, #tpu.memory_space<vmem>>, vector<16x128xbf16>
    %40 = arith.truncf %1 : vector<16x16xf32> to vector<16x16xbf16>
    %cst_20 = arith.constant dense<0.000000e+00> : vector<16x128xf32>
    %41 = tpu.matmul %40, %39, %cst_20 {dimension_numbers = #tpu.dot_dimension_numbers<[1], [0], [0], [1], [0, 0, 1, 1], [], []>} : vector<16x16xbf16>, vector<16x128xbf16>, vector<16x128xf32> -> vector<16x128xf32>
    %c0_21 = arith.constant 0 : index
    %c0_22 = arith.constant 0 : index
    %42 = vector.load %arg7[%c0_21, %c0_22] : memref<1x128xf32, #tpu.memory_space<vmem>>, vector<1x128xf32>
    %43 = vector.broadcast %42 : vector<1x128xf32> to vector<16x128xf32>
    %44 = arith.addf %41, %43 : vector<16x128xf32>
    %cst_23 = arith.constant 0.000000e+00 : f32
    %45 = vector.broadcast %cst_23 : f32 to vector<16x128xf32>
    %46 = arith.cmpf ogt, %44, %45 : vector<16x128xf32>
    %cst_24 = arith.constant 0.00999999977 : f32
    %47 = vector.broadcast %cst_24 : f32 to vector<16x128xf32>
    %48 = arith.mulf %47, %44 : vector<16x128xf32>
    %49 = arith.select %46, %44, %48 : vector<16x128xi1>, vector<16x128xf32>
    %50 = arith.truncf %1 : vector<16x16xf32> to vector<16x16xbf16>
    %cst_25 = arith.constant dense<0.000000e+00> : vector<64x16xf32>
    %51 = tpu.matmul %21, %50, %cst_25 {dimension_numbers = #tpu.dot_dimension_numbers<[1], [0], [0], [1], [0, 0, 1, 1], [], []>} : vector<64x16xbf16>, vector<16x16xbf16>, vector<64x16xf32> -> vector<64x16xf32>
    %52 = arith.truncf %3 : vector<16x8xf32> to vector<16x8xbf16>
    %cst_26 = arith.constant dense<0.000000e+00> : vector<64x8xf32>
    %53 = tpu.matmul %29, %52, %cst_26 {dimension_numbers = #tpu.dot_dimension_numbers<[1], [0], [0], [1], [0, 0, 1, 1], [], []>} : vector<64x16xbf16>, vector<16x8xbf16>, vector<64x8xf32> -> vector<64x8xf32>
    %c0_27 = arith.constant 0 : index
    %c0_28 = arith.constant 0 : index
    %54 = vector.load %arg8[%c0_27, %c0_28] : memref<16x128xbf16, #tpu.memory_space<vmem>>, vector<16x128xbf16>
    %55 = arith.truncf %51 : vector<64x16xf32> to vector<64x16xbf16>
    %cst_29 = arith.constant dense<0.000000e+00> : vector<64x128xf32>
    %56 = tpu.matmul %55, %54, %cst_29 {dimension_numbers = #tpu.dot_dimension_numbers<[1], [0], [0], [1], [0, 0, 1, 1], [], []>} : vector<64x16xbf16>, vector<16x128xbf16>, vector<64x128xf32> -> vector<64x128xf32>
    %c0_30 = arith.constant 0 : index
    %c0_31 = arith.constant 0 : index
    %57 = vector.load %arg9[%c0_30, %c0_31] : memref<8x128xbf16, #tpu.memory_space<vmem>>, vector<8x128xbf16>
    %58 = arith.truncf %53 : vector<64x8xf32> to vector<64x8xbf16>
    %cst_32 = arith.constant dense<0.000000e+00> : vector<64x128xf32>
    %59 = tpu.matmul %58, %57, %cst_32 {dimension_numbers = #tpu.dot_dimension_numbers<[1], [0], [0], [1], [0, 0, 1, 1], [], []>} : vector<64x8xbf16>, vector<8x128xbf16>, vector<64x128xf32> -> vector<64x128xf32>
    %60 = arith.addf %56, %59 : vector<64x128xf32>
    %c0_33 = arith.constant 0 : index
    %c0_34 = arith.constant 0 : index
    %61 = vector.load %arg10[%c0_33, %c0_34] : memref<1x128xf32, #tpu.memory_space<vmem>>, vector<1x128xf32>
    %62 = vector.broadcast %61 : vector<1x128xf32> to vector<64x128xf32>
    %63 = arith.addf %60, %62 : vector<64x128xf32>
    %cst_35 = arith.constant 0.000000e+00 : f32
    %64 = vector.broadcast %cst_35 : f32 to vector<64x128xf32>
    %65 = arith.cmpf ogt, %63, %64 : vector<64x128xf32>
    %cst_36 = arith.constant 0.00999999977 : f32
    %66 = vector.broadcast %cst_36 : f32 to vector<64x128xf32>
    %67 = arith.mulf %66, %63 : vector<64x128xf32>
    %68 = arith.select %65, %63, %67 : vector<64x128xi1>, vector<64x128xf32>
    %c0_37 = arith.constant 0 : index
    %c0_38 = arith.constant 0 : index
    %69 = vector.load %arg11[%c0_37, %c0_38] : memref<2x128xf32, #tpu.memory_space<vmem>>, vector<1x128xf32>
    %c0_39 = arith.constant 0 : index
    %c0_40 = arith.constant 0 : index
    %70 = vector.load %arg12[%c0_39, %c0_40] : memref<2x128xf32, #tpu.memory_space<vmem>>, vector<1x128xf32>
    %71 = vector.shape_cast %70 : vector<1x128xf32> to vector<1x1x128xf32>
    %c0_41 = arith.constant 0 : index
    %c0_42 = arith.constant 0 : index
    %72 = vector.load %arg13[%c0_41, %c0_42] : memref<2x1xf32, #tpu.memory_space<vmem>>, vector<1x1xf32>
    %73 = vector.shape_cast %68 : vector<64x128xf32> to vector<16x4x128xf32>
    %74 = vector.broadcast %69 : vector<1x128xf32> to vector<16x128xf32>
    %75 = arith.mulf %49, %74 : vector<16x128xf32>
    %cst_43 = arith.constant dense<0.000000e+00> : vector<16xf32>
    %76 = vector.multi_reduction <add>, %75, %cst_43 [1] : vector<16x128xf32> to vector<16xf32>
    %77 = vector.shape_cast %76 : vector<16xf32> to vector<16x1xf32>
    %78 = vector.broadcast %71 : vector<1x1x128xf32> to vector<16x4x128xf32>
    %79 = arith.mulf %73, %78 : vector<16x4x128xf32>
    %cst_44 = arith.constant dense<0.000000e+00> : vector<16x4xf32>
    %80 = vector.multi_reduction <add>, %79, %cst_44 [2] : vector<16x4x128xf32> to vector<16x4xf32>
    %81 = vector.broadcast %77 : vector<16x1xf32> to vector<16x4xf32>
    %82 = arith.addf %81, %80 : vector<16x4xf32>
    %83 = vector.broadcast %72 : vector<1x1xf32> to vector<16x4xf32>
    %84 = arith.addf %82, %83 : vector<16x4xf32>
    %cst_45 = arith.constant 0.000000e+00 : f32
    %85 = vector.broadcast %cst_45 : f32 to vector<16x4xf32>
    %86 = arith.cmpf ogt, %84, %85 : vector<16x4xf32>
    %cst_46 = arith.constant 0.00999999977 : f32
    %87 = vector.broadcast %cst_46 : f32 to vector<16x4xf32>
    %88 = arith.mulf %87, %84 : vector<16x4xf32>
    %89 = arith.select %86, %84, %88 : vector<16x4xi1>, vector<16x4xf32>
    %90 = arith.addf %89, %38 : vector<16x4xf32>
    %cst_47 = arith.constant dense<0xFF800000> : vector<16xf32>
    %91 = vector.multi_reduction <maximumf>, %90, %cst_47 [1] : vector<16x4xf32> to vector<16xf32>
    %92 = vector.shape_cast %91 : vector<16xf32> to vector<16x1xf32>
    %93 = vector.broadcast %92 : vector<16x1xf32> to vector<16x4xf32>
    %94 = arith.subf %90, %93 : vector<16x4xf32>
    %95 = math.exp %94 : vector<16x4xf32>
    %cst_48 = arith.constant dense<0.000000e+00> : vector<16xf32>
    %96 = vector.multi_reduction <add>, %95, %cst_48 [1] : vector<16x4xf32> to vector<16xf32>
    %97 = vector.shape_cast %96 : vector<16xf32> to vector<16x1xf32>
    %98 = tpu.reciprocal %97 {approx = true} : vector<16x1xf32> -> vector<16x1xf32>
    %99 = vector.broadcast %98 : vector<16x1xf32> to vector<16x4xf32>
    %100 = arith.mulf %95, %99 : vector<16x4xf32>
    %101 = arith.mulf %100, %35 : vector<16x4xf32>
    %c0_49 = arith.constant 0 : index
    %c0_50 = arith.constant 0 : index
    %c0_51 = arith.constant 0 : index
    %102 = vector.load %arg14[%c0_49, %c0_50, %c0_51] : memref<2x128x128xbf16, #tpu.memory_space<vmem>>, vector<1x128x128xbf16>
    %103 = vector.shape_cast %102 : vector<1x128x128xbf16> to vector<128x128xbf16>
    %104 = arith.truncf %68 : vector<64x128xf32> to vector<64x128xbf16>
    %cst_52 = arith.constant dense<0.000000e+00> : vector<64x128xf32>
    %105 = tpu.matmul %104, %103, %cst_52 {dimension_numbers = #tpu.dot_dimension_numbers<[1], [0], [0], [1], [0, 0, 1, 1], [], []>} : vector<64x128xbf16>, vector<128x128xbf16>, vector<64x128xf32> -> vector<64x128xf32>
    %c0_53 = arith.constant 0 : index
    %c0_54 = arith.constant 0 : index
    %c0_55 = arith.constant 0 : index
    %106 = vector.load %arg15[%c0_53, %c0_54, %c0_55] : memref<2x1x128xf32, #tpu.memory_space<vmem>>, vector<1x1x128xf32>
    %107 = vector.shape_cast %106 : vector<1x1x128xf32> to vector<1x128xf32>
    %108 = vector.broadcast %107 : vector<1x128xf32> to vector<64x128xf32>
    %109 = arith.addf %105, %108 : vector<64x128xf32>
    %110 = vector.shape_cast %109 : vector<64x128xf32> to vector<16x4x128xf32>
    %111 = vector.shape_cast %101 : vector<16x4xf32> to vector<16x4x1xf32>
    %112 = vector.broadcast %111 : vector<16x4x1xf32> to vector<16x4x128xf32>
    %113 = arith.mulf %112, %110 : vector<16x4x128xf32>
    %cst_56 = arith.constant dense<0.000000e+00> : vector<16x128xf32>
    %114 = vector.multi_reduction <add>, %113, %cst_56 [1] : vector<16x4x128xf32> to vector<16x128xf32>
    %cst_57 = arith.constant 0.000000e+00 : f32
    %115 = vector.broadcast %cst_57 : f32 to vector<16x128xf32>
    %116 = arith.cmpf ogt, %114, %115 : vector<16x128xf32>
    %cst_58 = arith.constant 0.000000e+00 : f32
    %117 = vector.broadcast %cst_58 : f32 to vector<16x128xf32>
    %118 = arith.minimumf %114, %117 : vector<16x128xf32>
    %119 = math.exp %118 : vector<16x128xf32>
    %cst_59 = arith.constant 1.000000e+00 : f32
    %120 = vector.broadcast %cst_59 : f32 to vector<16x128xf32>
    %121 = arith.subf %119, %120 : vector<16x128xf32>
    %122 = arith.select %116, %114, %121 : vector<16x128xi1>, vector<16x128xf32>
    %c0_60 = arith.constant 0 : index
    %c0_61 = arith.constant 0 : index
    %c0_62 = arith.constant 0 : index
    %123 = vector.load %arg16[%c0_60, %c0_61, %c0_62] : memref<2x128x384xbf16, #tpu.memory_space<vmem>>, vector<1x128x384xbf16>
    %124 = vector.shape_cast %123 : vector<1x128x384xbf16> to vector<128x384xbf16>
    %125 = arith.truncf %122 : vector<16x128xf32> to vector<16x128xbf16>
    %cst_63 = arith.constant dense<0.000000e+00> : vector<16x384xf32>
    %126 = tpu.matmul %125, %124, %cst_63 {dimension_numbers = #tpu.dot_dimension_numbers<[1], [0], [0], [1], [0, 0, 1, 1], [], []>} : vector<16x128xbf16>, vector<128x384xbf16>, vector<16x384xf32> -> vector<16x384xf32>
    %c0_64 = arith.constant 0 : index
    %c0_65 = arith.constant 0 : index
    %c0_66 = arith.constant 0 : index
    %127 = vector.load %arg18[%c0_64, %c0_65, %c0_66] : memref<2x1x384xf32, #tpu.memory_space<vmem>>, vector<1x1x384xf32>
    %128 = vector.shape_cast %127 : vector<1x1x384xf32> to vector<1x384xf32>
    %129 = vector.broadcast %128 : vector<1x384xf32> to vector<16x384xf32>
    %130 = arith.addf %126, %129 : vector<16x384xf32>
    %c0_67 = arith.constant 0 : index
    %c0_68 = arith.constant 0 : index
    %c0_69 = arith.constant 0 : index
    %131 = vector.load %arg17[%c0_67, %c0_68, %c0_69] : memref<2x128x384xbf16, #tpu.memory_space<vmem>>, vector<1x128x384xbf16>
    %132 = vector.shape_cast %131 : vector<1x128x384xbf16> to vector<128x384xbf16>
    %133 = arith.truncf %49 : vector<16x128xf32> to vector<16x128xbf16>
    %cst_70 = arith.constant dense<0.000000e+00> : vector<16x384xf32>
    %134 = tpu.matmul %133, %132, %cst_70 {dimension_numbers = #tpu.dot_dimension_numbers<[1], [0], [0], [1], [0, 0, 1, 1], [], []>} : vector<16x128xbf16>, vector<128x384xbf16>, vector<16x384xf32> -> vector<16x384xf32>
    %c0_71 = arith.constant 0 : index
    %c0_72 = arith.constant 0 : index
    %c0_73 = arith.constant 0 : index
    %135 = vector.load %arg19[%c0_71, %c0_72, %c0_73] : memref<2x1x384xf32, #tpu.memory_space<vmem>>, vector<1x1x384xf32>
    %136 = vector.shape_cast %135 : vector<1x1x384xf32> to vector<1x384xf32>
    %137 = vector.broadcast %136 : vector<1x384xf32> to vector<16x384xf32>
    %138 = arith.addf %134, %137 : vector<16x384xf32>
    %139 = vector.extract_strided_slice %130 {offsets = [0, 0], sizes = [16, 128], strides = [1, 1]} : vector<16x384xf32> to vector<16x128xf32>
    %140 = vector.extract_strided_slice %138 {offsets = [0, 0], sizes = [16, 128], strides = [1, 1]} : vector<16x384xf32> to vector<16x128xf32>
    %141 = arith.addf %139, %140 : vector<16x128xf32>
    %142 = arith.negf %141 : vector<16x128xf32>
    %143 = math.exp %142 : vector<16x128xf32>
    %cst_74 = arith.constant 1.000000e+00 : f32
    %144 = vector.broadcast %cst_74 : f32 to vector<16x128xf32>
    %145 = arith.addf %144, %143 : vector<16x128xf32>
    %146 = arith.divf %144, %145 : vector<16x128xf32>
    %147 = vector.extract_strided_slice %130 {offsets = [0, 128], sizes = [16, 128], strides = [1, 1]} : vector<16x384xf32> to vector<16x128xf32>
    %148 = vector.extract_strided_slice %138 {offsets = [0, 128], sizes = [16, 128], strides = [1, 1]} : vector<16x384xf32> to vector<16x128xf32>
    %149 = arith.addf %147, %148 : vector<16x128xf32>
    %150 = arith.negf %149 : vector<16x128xf32>
    %151 = math.exp %150 : vector<16x128xf32>
    %cst_75 = arith.constant 1.000000e+00 : f32
    %152 = vector.broadcast %cst_75 : f32 to vector<16x128xf32>
    %153 = arith.addf %152, %151 : vector<16x128xf32>
    %154 = arith.divf %152, %153 : vector<16x128xf32>
    %155 = vector.extract_strided_slice %130 {offsets = [0, 256], sizes = [16, 128], strides = [1, 1]} : vector<16x384xf32> to vector<16x128xf32>
    %156 = vector.extract_strided_slice %138 {offsets = [0, 256], sizes = [16, 128], strides = [1, 1]} : vector<16x384xf32> to vector<16x128xf32>
    %157 = arith.mulf %146, %156 : vector<16x128xf32>
    %158 = arith.addf %155, %157 : vector<16x128xf32>
    %159 = math.tanh %158 : vector<16x128xf32>
    %cst_76 = arith.constant 1.000000e+00 : f32
    %160 = vector.broadcast %cst_76 : f32 to vector<16x128xf32>
    %161 = arith.subf %160, %154 : vector<16x128xf32>
    %162 = arith.mulf %161, %159 : vector<16x128xf32>
    %163 = arith.mulf %154, %49 : vector<16x128xf32>
    %164 = arith.addf %162, %163 : vector<16x128xf32>
    %cst_77 = arith.constant 0.000000e+00 : f32
    %165 = vector.broadcast %cst_77 : f32 to vector<16x128xf32>
    %166 = arith.maximumf %164, %165 : vector<16x128xf32>
    %167 = arith.truncf %166 : vector<16x128xf32> to vector<16x128xbf16>
    %cst_78 = arith.constant dense<0.000000e+00> : vector<64x128xf32>
    %168 = tpu.matmul %21, %167, %cst_78 {dimension_numbers = #tpu.dot_dimension_numbers<[1], [0], [0], [1], [0, 0, 1, 1], [], []>} : vector<64x16xbf16>, vector<16x128xbf16>, vector<64x128xf32> -> vector<64x128xf32>
    %c1 = arith.constant 1 : index
    %c0_79 = arith.constant 0 : index
    %169 = vector.load %arg11[%c1, %c0_79] : memref<2x128xf32, #tpu.memory_space<vmem>>, vector<1x128xf32>
    %c1_80 = arith.constant 1 : index
    %c0_81 = arith.constant 0 : index
    %170 = vector.load %arg12[%c1_80, %c0_81] : memref<2x128xf32, #tpu.memory_space<vmem>>, vector<1x128xf32>
    %171 = vector.shape_cast %170 : vector<1x128xf32> to vector<1x1x128xf32>
    %c1_82 = arith.constant 1 : index
    %c0_83 = arith.constant 0 : index
    %172 = vector.load %arg13[%c1_82, %c0_83] : memref<2x1xf32, #tpu.memory_space<vmem>>, vector<1x1xf32>
    %173 = vector.shape_cast %168 : vector<64x128xf32> to vector<16x4x128xf32>
    %174 = vector.broadcast %169 : vector<1x128xf32> to vector<16x128xf32>
    %175 = arith.mulf %166, %174 : vector<16x128xf32>
    %cst_84 = arith.constant dense<0.000000e+00> : vector<16xf32>
    %176 = vector.multi_reduction <add>, %175, %cst_84 [1] : vector<16x128xf32> to vector<16xf32>
    %177 = vector.shape_cast %176 : vector<16xf32> to vector<16x1xf32>
    %178 = vector.broadcast %171 : vector<1x1x128xf32> to vector<16x4x128xf32>
    %179 = arith.mulf %173, %178 : vector<16x4x128xf32>
    %cst_85 = arith.constant dense<0.000000e+00> : vector<16x4xf32>
    %180 = vector.multi_reduction <add>, %179, %cst_85 [2] : vector<16x4x128xf32> to vector<16x4xf32>
    %181 = vector.broadcast %177 : vector<16x1xf32> to vector<16x4xf32>
    %182 = arith.addf %181, %180 : vector<16x4xf32>
    %183 = vector.broadcast %172 : vector<1x1xf32> to vector<16x4xf32>
    %184 = arith.addf %182, %183 : vector<16x4xf32>
    %cst_86 = arith.constant 0.000000e+00 : f32
    %185 = vector.broadcast %cst_86 : f32 to vector<16x4xf32>
    %186 = arith.cmpf ogt, %184, %185 : vector<16x4xf32>
    %cst_87 = arith.constant 0.00999999977 : f32
    %187 = vector.broadcast %cst_87 : f32 to vector<16x4xf32>
    %188 = arith.mulf %187, %184 : vector<16x4xf32>
    %189 = arith.select %186, %184, %188 : vector<16x4xi1>, vector<16x4xf32>
    %190 = arith.addf %189, %38 : vector<16x4xf32>
    %cst_88 = arith.constant dense<0xFF800000> : vector<16xf32>
    %191 = vector.multi_reduction <maximumf>, %190, %cst_88 [1] : vector<16x4xf32> to vector<16xf32>
    %192 = vector.shape_cast %191 : vector<16xf32> to vector<16x1xf32>
    %193 = vector.broadcast %192 : vector<16x1xf32> to vector<16x4xf32>
    %194 = arith.subf %190, %193 : vector<16x4xf32>
    %195 = math.exp %194 : vector<16x4xf32>
    %cst_89 = arith.constant dense<0.000000e+00> : vector<16xf32>
    %196 = vector.multi_reduction <add>, %195, %cst_89 [1] : vector<16x4xf32> to vector<16xf32>
    %197 = vector.shape_cast %196 : vector<16xf32> to vector<16x1xf32>
    %198 = tpu.reciprocal %197 {approx = true} : vector<16x1xf32> -> vector<16x1xf32>
    %199 = vector.broadcast %198 : vector<16x1xf32> to vector<16x4xf32>
    %200 = arith.mulf %195, %199 : vector<16x4xf32>
    %201 = arith.mulf %200, %35 : vector<16x4xf32>
    %c1_90 = arith.constant 1 : index
    %c0_91 = arith.constant 0 : index
    %c0_92 = arith.constant 0 : index
    %202 = vector.load %arg14[%c1_90, %c0_91, %c0_92] : memref<2x128x128xbf16, #tpu.memory_space<vmem>>, vector<1x128x128xbf16>
    %203 = vector.shape_cast %202 : vector<1x128x128xbf16> to vector<128x128xbf16>
    %204 = arith.truncf %168 : vector<64x128xf32> to vector<64x128xbf16>
    %cst_93 = arith.constant dense<0.000000e+00> : vector<64x128xf32>
    %205 = tpu.matmul %204, %203, %cst_93 {dimension_numbers = #tpu.dot_dimension_numbers<[1], [0], [0], [1], [0, 0, 1, 1], [], []>} : vector<64x128xbf16>, vector<128x128xbf16>, vector<64x128xf32> -> vector<64x128xf32>
    %c1_94 = arith.constant 1 : index
    %c0_95 = arith.constant 0 : index
    %c0_96 = arith.constant 0 : index
    %206 = vector.load %arg15[%c1_94, %c0_95, %c0_96] : memref<2x1x128xf32, #tpu.memory_space<vmem>>, vector<1x1x128xf32>
    %207 = vector.shape_cast %206 : vector<1x1x128xf32> to vector<1x128xf32>
    %208 = vector.broadcast %207 : vector<1x128xf32> to vector<64x128xf32>
    %209 = arith.addf %205, %208 : vector<64x128xf32>
    %210 = vector.shape_cast %209 : vector<64x128xf32> to vector<16x4x128xf32>
    %211 = vector.shape_cast %201 : vector<16x4xf32> to vector<16x4x1xf32>
    %212 = vector.broadcast %211 : vector<16x4x1xf32> to vector<16x4x128xf32>
    %213 = arith.mulf %212, %210 : vector<16x4x128xf32>
    %cst_97 = arith.constant dense<0.000000e+00> : vector<16x128xf32>
    %214 = vector.multi_reduction <add>, %213, %cst_97 [1] : vector<16x4x128xf32> to vector<16x128xf32>
    %cst_98 = arith.constant 0.000000e+00 : f32
    %215 = vector.broadcast %cst_98 : f32 to vector<16x128xf32>
    %216 = arith.cmpf ogt, %214, %215 : vector<16x128xf32>
    %cst_99 = arith.constant 0.000000e+00 : f32
    %217 = vector.broadcast %cst_99 : f32 to vector<16x128xf32>
    %218 = arith.minimumf %214, %217 : vector<16x128xf32>
    %219 = math.exp %218 : vector<16x128xf32>
    %cst_100 = arith.constant 1.000000e+00 : f32
    %220 = vector.broadcast %cst_100 : f32 to vector<16x128xf32>
    %221 = arith.subf %219, %220 : vector<16x128xf32>
    %222 = arith.select %216, %214, %221 : vector<16x128xi1>, vector<16x128xf32>
    %c1_101 = arith.constant 1 : index
    %c0_102 = arith.constant 0 : index
    %c0_103 = arith.constant 0 : index
    %223 = vector.load %arg16[%c1_101, %c0_102, %c0_103] : memref<2x128x384xbf16, #tpu.memory_space<vmem>>, vector<1x128x384xbf16>
    %224 = vector.shape_cast %223 : vector<1x128x384xbf16> to vector<128x384xbf16>
    %225 = arith.truncf %222 : vector<16x128xf32> to vector<16x128xbf16>
    %cst_104 = arith.constant dense<0.000000e+00> : vector<16x384xf32>
    %226 = tpu.matmul %225, %224, %cst_104 {dimension_numbers = #tpu.dot_dimension_numbers<[1], [0], [0], [1], [0, 0, 1, 1], [], []>} : vector<16x128xbf16>, vector<128x384xbf16>, vector<16x384xf32> -> vector<16x384xf32>
    %c1_105 = arith.constant 1 : index
    %c0_106 = arith.constant 0 : index
    %c0_107 = arith.constant 0 : index
    %227 = vector.load %arg18[%c1_105, %c0_106, %c0_107] : memref<2x1x384xf32, #tpu.memory_space<vmem>>, vector<1x1x384xf32>
    %228 = vector.shape_cast %227 : vector<1x1x384xf32> to vector<1x384xf32>
    %229 = vector.broadcast %228 : vector<1x384xf32> to vector<16x384xf32>
    %230 = arith.addf %226, %229 : vector<16x384xf32>
    %c1_108 = arith.constant 1 : index
    %c0_109 = arith.constant 0 : index
    %c0_110 = arith.constant 0 : index
    %231 = vector.load %arg17[%c1_108, %c0_109, %c0_110] : memref<2x128x384xbf16, #tpu.memory_space<vmem>>, vector<1x128x384xbf16>
    %232 = vector.shape_cast %231 : vector<1x128x384xbf16> to vector<128x384xbf16>
    %233 = arith.truncf %164 : vector<16x128xf32> to vector<16x128xbf16>
    %cst_111 = arith.constant dense<0.000000e+00> : vector<16x384xf32>
    %234 = tpu.matmul %233, %232, %cst_111 {dimension_numbers = #tpu.dot_dimension_numbers<[1], [0], [0], [1], [0, 0, 1, 1], [], []>} : vector<16x128xbf16>, vector<128x384xbf16>, vector<16x384xf32> -> vector<16x384xf32>
    %c1_112 = arith.constant 1 : index
    %c0_113 = arith.constant 0 : index
    %c0_114 = arith.constant 0 : index
    %235 = vector.load %arg19[%c1_112, %c0_113, %c0_114] : memref<2x1x384xf32, #tpu.memory_space<vmem>>, vector<1x1x384xf32>
    %236 = vector.shape_cast %235 : vector<1x1x384xf32> to vector<1x384xf32>
    %237 = vector.broadcast %236 : vector<1x384xf32> to vector<16x384xf32>
    %238 = arith.addf %234, %237 : vector<16x384xf32>
    %239 = vector.extract_strided_slice %230 {offsets = [0, 0], sizes = [16, 128], strides = [1, 1]} : vector<16x384xf32> to vector<16x128xf32>
    %240 = vector.extract_strided_slice %238 {offsets = [0, 0], sizes = [16, 128], strides = [1, 1]} : vector<16x384xf32> to vector<16x128xf32>
    %241 = arith.addf %239, %240 : vector<16x128xf32>
    %242 = arith.negf %241 : vector<16x128xf32>
    %243 = math.exp %242 : vector<16x128xf32>
    %cst_115 = arith.constant 1.000000e+00 : f32
    %244 = vector.broadcast %cst_115 : f32 to vector<16x128xf32>
    %245 = arith.addf %244, %243 : vector<16x128xf32>
    %246 = arith.divf %244, %245 : vector<16x128xf32>
    %247 = vector.extract_strided_slice %230 {offsets = [0, 128], sizes = [16, 128], strides = [1, 1]} : vector<16x384xf32> to vector<16x128xf32>
    %248 = vector.extract_strided_slice %238 {offsets = [0, 128], sizes = [16, 128], strides = [1, 1]} : vector<16x384xf32> to vector<16x128xf32>
    %249 = arith.addf %247, %248 : vector<16x128xf32>
    %250 = arith.negf %249 : vector<16x128xf32>
    %251 = math.exp %250 : vector<16x128xf32>
    %cst_116 = arith.constant 1.000000e+00 : f32
    %252 = vector.broadcast %cst_116 : f32 to vector<16x128xf32>
    %253 = arith.addf %252, %251 : vector<16x128xf32>
    %254 = arith.divf %252, %253 : vector<16x128xf32>
    %255 = vector.extract_strided_slice %230 {offsets = [0, 256], sizes = [16, 128], strides = [1, 1]} : vector<16x384xf32> to vector<16x128xf32>
    %256 = vector.extract_strided_slice %238 {offsets = [0, 256], sizes = [16, 128], strides = [1, 1]} : vector<16x384xf32> to vector<16x128xf32>
    %257 = arith.mulf %246, %256 : vector<16x128xf32>
    %258 = arith.addf %255, %257 : vector<16x128xf32>
    %259 = math.tanh %258 : vector<16x128xf32>
    %cst_117 = arith.constant 1.000000e+00 : f32
    %260 = vector.broadcast %cst_117 : f32 to vector<16x128xf32>
    %261 = arith.subf %260, %254 : vector<16x128xf32>
    %262 = arith.mulf %261, %259 : vector<16x128xf32>
    %263 = arith.mulf %254, %164 : vector<16x128xf32>
    %264 = arith.addf %262, %263 : vector<16x128xf32>
    %cst_118 = arith.constant 0.000000e+00 : f32
    %265 = vector.broadcast %cst_118 : f32 to vector<16x128xf32>
    %266 = arith.maximumf %264, %265 : vector<16x128xf32>
    %c0_119 = arith.constant 0 : index
    %c0_120 = arith.constant 0 : index
    %267 = vector.load %arg5[%c0_119, %c0_120] : memref<2x8xf32, #tpu.memory_space<vmem>>, vector<2x8xf32>
    %268 = vector.shape_cast %266 : vector<16x128xf32> to vector<2x8x128xf32>
    %269 = vector.shape_cast %267 : vector<2x8xf32> to vector<2x8x1xf32>
    %270 = vector.broadcast %269 : vector<2x8x1xf32> to vector<2x8x128xf32>
    %271 = arith.mulf %268, %270 : vector<2x8x128xf32>
    %cst_121 = arith.constant dense<0.000000e+00> : vector<2x128xf32>
    %272 = vector.multi_reduction <add>, %271, %cst_121 [1] : vector<2x8x128xf32> to vector<2x128xf32>
    %cst_122 = arith.constant 0.000000e+00 : f32
    %273 = vector.broadcast %cst_122 : f32 to vector<2x128xf32>
    %274 = arith.maximumf %272, %273 : vector<2x128xf32>
    %cst_123 = arith.constant 0.000000e+00 : f32
    %275 = vector.broadcast %cst_123 : f32 to vector<2x8xf32>
    %276 = arith.cmpf oeq, %267, %275 : vector<2x8xf32>
    %cst_124 = arith.constant -9.000000e+08 : f32
    %cst_125 = arith.constant 0.000000e+00 : f32
    %277 = vector.broadcast %cst_124 : f32 to vector<2x8xf32>
    %278 = vector.broadcast %cst_125 : f32 to vector<2x8xf32>
    %279 = arith.select %276, %277, %278 : vector<2x8xi1>, vector<2x8xf32>
    %c0_126 = arith.constant 0 : index
    %c0_127 = arith.constant 0 : index
    %280 = vector.load %arg23[%c0_126, %c0_127] : memref<128x128xbf16, #tpu.memory_space<vmem>>, vector<128x128xbf16>
    %281 = arith.truncf %266 : vector<16x128xf32> to vector<16x128xbf16>
    %cst_128 = arith.constant dense<0.000000e+00> : vector<16x128xf32>
    %282 = tpu.matmul %281, %280, %cst_128 {dimension_numbers = #tpu.dot_dimension_numbers<[1], [0], [0], [1], [0, 0, 1, 1], [], []>} : vector<16x128xbf16>, vector<128x128xbf16>, vector<16x128xf32> -> vector<16x128xf32>
    %c0_129 = arith.constant 0 : index
    %c0_130 = arith.constant 0 : index
    %283 = vector.load %arg24[%c0_129, %c0_130] : memref<1x128xf32, #tpu.memory_space<vmem>>, vector<1x128xf32>
    %284 = vector.broadcast %283 : vector<1x128xf32> to vector<16x128xf32>
    %285 = arith.addf %282, %284 : vector<16x128xf32>
    %286 = vector.shape_cast %285 : vector<16x128xf32> to vector<2x8x128xf32>
    %c0_131 = arith.constant 0 : index
    %c0_132 = arith.constant 0 : index
    %287 = vector.load %arg21[%c0_131, %c0_132] : memref<1x128xf32, #tpu.memory_space<vmem>>, vector<1x128xf32>
    %288 = vector.shape_cast %287 : vector<1x128xf32> to vector<1x1x128xf32>
    %289 = vector.broadcast %288 : vector<1x1x128xf32> to vector<2x8x128xf32>
    %290 = arith.mulf %268, %289 : vector<2x8x128xf32>
    %cst_133 = arith.constant dense<0.000000e+00> : vector<2x8xf32>
    %291 = vector.multi_reduction <add>, %290, %cst_133 [2] : vector<2x8x128xf32> to vector<2x8xf32>
    %c0_134 = arith.constant 0 : index
    %c0_135 = arith.constant 0 : index
    %292 = vector.load %arg22[%c0_134, %c0_135] : memref<1x1xf32, #tpu.memory_space<vmem>>, vector<1x1xf32>
    %c0_136 = arith.constant 0 : index
    %c0_137 = arith.constant 0 : index
    %293 = vector.load %arg20[%c0_136, %c0_137] : memref<1x128xf32, #tpu.memory_space<vmem>>, vector<1x128xf32>
    %294 = vector.broadcast %293 : vector<1x128xf32> to vector<2x128xf32>
    %295 = arith.mulf %274, %294 : vector<2x128xf32>
    %cst_138 = arith.constant dense<0.000000e+00> : vector<2xf32>
    %296 = vector.multi_reduction <add>, %295, %cst_138 [1] : vector<2x128xf32> to vector<2xf32>
    %297 = vector.shape_cast %296 : vector<2xf32> to vector<2x1xf32>
    %298 = vector.broadcast %297 : vector<2x1xf32> to vector<2x8xf32>
    %299 = arith.addf %298, %291 : vector<2x8xf32>
    %300 = vector.broadcast %292 : vector<1x1xf32> to vector<2x8xf32>
    %301 = arith.addf %299, %300 : vector<2x8xf32>
    %cst_139 = arith.constant 0.000000e+00 : f32
    %302 = vector.broadcast %cst_139 : f32 to vector<2x8xf32>
    %303 = arith.cmpf ogt, %301, %302 : vector<2x8xf32>
    %cst_140 = arith.constant 0.00999999977 : f32
    %304 = vector.broadcast %cst_140 : f32 to vector<2x8xf32>
    %305 = arith.mulf %304, %301 : vector<2x8xf32>
    %306 = arith.select %303, %301, %305 : vector<2x8xi1>, vector<2x8xf32>
    %307 = arith.addf %306, %279 : vector<2x8xf32>
    %cst_141 = arith.constant dense<0xFF800000> : vector<2xf32>
    %308 = vector.multi_reduction <maximumf>, %307, %cst_141 [1] : vector<2x8xf32> to vector<2xf32>
    %309 = vector.shape_cast %308 : vector<2xf32> to vector<2x1xf32>
    %310 = vector.broadcast %309 : vector<2x1xf32> to vector<2x8xf32>
    %311 = arith.subf %307, %310 : vector<2x8xf32>
    %312 = math.exp %311 : vector<2x8xf32>
    %cst_142 = arith.constant dense<0.000000e+00> : vector<2xf32>
    %313 = vector.multi_reduction <add>, %312, %cst_142 [1] : vector<2x8xf32> to vector<2xf32>
    %314 = vector.shape_cast %313 : vector<2xf32> to vector<2x1xf32>
    %315 = tpu.reciprocal %314 {approx = true} : vector<2x1xf32> -> vector<2x1xf32>
    %316 = vector.broadcast %315 : vector<2x1xf32> to vector<2x8xf32>
    %317 = arith.mulf %312, %316 : vector<2x8xf32>
    %318 = arith.mulf %317, %267 : vector<2x8xf32>
    %319 = vector.shape_cast %318 : vector<2x8xf32> to vector<2x8x1xf32>
    %320 = vector.broadcast %319 : vector<2x8x1xf32> to vector<2x8x128xf32>
    %321 = arith.mulf %320, %286 : vector<2x8x128xf32>
    %cst_143 = arith.constant dense<0.000000e+00> : vector<2x128xf32>
    %322 = vector.multi_reduction <add>, %321, %cst_143 [1] : vector<2x8x128xf32> to vector<2x128xf32>
    %cst_144 = arith.constant 0.000000e+00 : f32
    %323 = vector.broadcast %cst_144 : f32 to vector<2x128xf32>
    %324 = arith.cmpf ogt, %322, %323 : vector<2x128xf32>
    %cst_145 = arith.constant 0.000000e+00 : f32
    %325 = vector.broadcast %cst_145 : f32 to vector<2x128xf32>
    %326 = arith.minimumf %322, %325 : vector<2x128xf32>
    %327 = math.exp %326 : vector<2x128xf32>
    %cst_146 = arith.constant 1.000000e+00 : f32
    %328 = vector.broadcast %cst_146 : f32 to vector<2x128xf32>
    %329 = arith.subf %327, %328 : vector<2x128xf32>
    %330 = arith.select %324, %322, %329 : vector<2x128xi1>, vector<2x128xf32>
    %c0_147 = arith.constant 0 : index
    %c0_148 = arith.constant 0 : index
    %331 = vector.load %arg25[%c0_147, %c0_148] : memref<128x384xbf16, #tpu.memory_space<vmem>>, vector<128x384xbf16>
    %332 = arith.truncf %330 : vector<2x128xf32> to vector<2x128xbf16>
    %cst_149 = arith.constant dense<0.000000e+00> : vector<2x384xf32>
    %333 = tpu.matmul %332, %331, %cst_149 {dimension_numbers = #tpu.dot_dimension_numbers<[1], [0], [0], [1], [0, 0, 1, 1], [], []>} : vector<2x128xbf16>, vector<128x384xbf16>, vector<2x384xf32> -> vector<2x384xf32>
    %c0_150 = arith.constant 0 : index
    %c0_151 = arith.constant 0 : index
    %334 = vector.load %arg27[%c0_150, %c0_151] : memref<1x384xf32, #tpu.memory_space<vmem>>, vector<1x384xf32>
    %335 = vector.broadcast %334 : vector<1x384xf32> to vector<2x384xf32>
    %336 = arith.addf %333, %335 : vector<2x384xf32>
    %c0_152 = arith.constant 0 : index
    %c0_153 = arith.constant 0 : index
    %337 = vector.load %arg26[%c0_152, %c0_153] : memref<128x384xbf16, #tpu.memory_space<vmem>>, vector<128x384xbf16>
    %338 = arith.truncf %272 : vector<2x128xf32> to vector<2x128xbf16>
    %cst_154 = arith.constant dense<0.000000e+00> : vector<2x384xf32>
    %339 = tpu.matmul %338, %337, %cst_154 {dimension_numbers = #tpu.dot_dimension_numbers<[1], [0], [0], [1], [0, 0, 1, 1], [], []>} : vector<2x128xbf16>, vector<128x384xbf16>, vector<2x384xf32> -> vector<2x384xf32>
    %c0_155 = arith.constant 0 : index
    %c0_156 = arith.constant 0 : index
    %340 = vector.load %arg28[%c0_155, %c0_156] : memref<1x384xf32, #tpu.memory_space<vmem>>, vector<1x384xf32>
    %341 = vector.broadcast %340 : vector<1x384xf32> to vector<2x384xf32>
    %342 = arith.addf %339, %341 : vector<2x384xf32>
    %343 = vector.extract_strided_slice %336 {offsets = [0, 0], sizes = [2, 128], strides = [1, 1]} : vector<2x384xf32> to vector<2x128xf32>
    %344 = vector.extract_strided_slice %342 {offsets = [0, 0], sizes = [2, 128], strides = [1, 1]} : vector<2x384xf32> to vector<2x128xf32>
    %345 = arith.addf %343, %344 : vector<2x128xf32>
    %346 = arith.negf %345 : vector<2x128xf32>
    %347 = math.exp %346 : vector<2x128xf32>
    %cst_157 = arith.constant 1.000000e+00 : f32
    %348 = vector.broadcast %cst_157 : f32 to vector<2x128xf32>
    %349 = arith.addf %348, %347 : vector<2x128xf32>
    %350 = arith.divf %348, %349 : vector<2x128xf32>
    %351 = vector.extract_strided_slice %336 {offsets = [0, 128], sizes = [2, 128], strides = [1, 1]} : vector<2x384xf32> to vector<2x128xf32>
    %352 = vector.extract_strided_slice %342 {offsets = [0, 128], sizes = [2, 128], strides = [1, 1]} : vector<2x384xf32> to vector<2x128xf32>
    %353 = arith.addf %351, %352 : vector<2x128xf32>
    %354 = arith.negf %353 : vector<2x128xf32>
    %355 = math.exp %354 : vector<2x128xf32>
    %cst_158 = arith.constant 1.000000e+00 : f32
    %356 = vector.broadcast %cst_158 : f32 to vector<2x128xf32>
    %357 = arith.addf %356, %355 : vector<2x128xf32>
    %358 = arith.divf %356, %357 : vector<2x128xf32>
    %359 = vector.extract_strided_slice %336 {offsets = [0, 256], sizes = [2, 128], strides = [1, 1]} : vector<2x384xf32> to vector<2x128xf32>
    %360 = vector.extract_strided_slice %342 {offsets = [0, 256], sizes = [2, 128], strides = [1, 1]} : vector<2x384xf32> to vector<2x128xf32>
    %361 = arith.mulf %350, %360 : vector<2x128xf32>
    %362 = arith.addf %359, %361 : vector<2x128xf32>
    %363 = math.tanh %362 : vector<2x128xf32>
    %cst_159 = arith.constant 1.000000e+00 : f32
    %364 = vector.broadcast %cst_159 : f32 to vector<2x128xf32>
    %365 = arith.subf %364, %358 : vector<2x128xf32>
    %366 = arith.mulf %365, %363 : vector<2x128xf32>
    %367 = arith.mulf %358, %272 : vector<2x128xf32>
    %368 = arith.addf %366, %367 : vector<2x128xf32>
    %cst_160 = arith.constant 0.000000e+00 : f32
    %369 = vector.broadcast %cst_160 : f32 to vector<2x128xf32>
    %370 = arith.maximumf %368, %369 : vector<2x128xf32>
    %c0_161 = arith.constant 0 : index
    %c0_162 = arith.constant 0 : index
    %371 = vector.load %arg20[%c0_161, %c0_162] : memref<1x128xf32, #tpu.memory_space<vmem>>, vector<1x128xf32>
    %372 = vector.broadcast %371 : vector<1x128xf32> to vector<2x128xf32>
    %373 = arith.mulf %370, %372 : vector<2x128xf32>
    %cst_163 = arith.constant dense<0.000000e+00> : vector<2xf32>
    %374 = vector.multi_reduction <add>, %373, %cst_163 [1] : vector<2x128xf32> to vector<2xf32>
    %375 = vector.shape_cast %374 : vector<2xf32> to vector<2x1xf32>
    %376 = vector.broadcast %375 : vector<2x1xf32> to vector<2x8xf32>
    %377 = arith.addf %376, %291 : vector<2x8xf32>
    %378 = vector.broadcast %292 : vector<1x1xf32> to vector<2x8xf32>
    %379 = arith.addf %377, %378 : vector<2x8xf32>
    %cst_164 = arith.constant 0.000000e+00 : f32
    %380 = vector.broadcast %cst_164 : f32 to vector<2x8xf32>
    %381 = arith.cmpf ogt, %379, %380 : vector<2x8xf32>
    %cst_165 = arith.constant 0.00999999977 : f32
    %382 = vector.broadcast %cst_165 : f32 to vector<2x8xf32>
    %383 = arith.mulf %382, %379 : vector<2x8xf32>
    %384 = arith.select %381, %379, %383 : vector<2x8xi1>, vector<2x8xf32>
    %385 = arith.addf %384, %279 : vector<2x8xf32>
    %cst_166 = arith.constant dense<0xFF800000> : vector<2xf32>
    %386 = vector.multi_reduction <maximumf>, %385, %cst_166 [1] : vector<2x8xf32> to vector<2xf32>
    %387 = vector.shape_cast %386 : vector<2xf32> to vector<2x1xf32>
    %388 = vector.broadcast %387 : vector<2x1xf32> to vector<2x8xf32>
    %389 = arith.subf %385, %388 : vector<2x8xf32>
    %390 = math.exp %389 : vector<2x8xf32>
    %cst_167 = arith.constant dense<0.000000e+00> : vector<2xf32>
    %391 = vector.multi_reduction <add>, %390, %cst_167 [1] : vector<2x8xf32> to vector<2xf32>
    %392 = vector.shape_cast %391 : vector<2xf32> to vector<2x1xf32>
    %393 = tpu.reciprocal %392 {approx = true} : vector<2x1xf32> -> vector<2x1xf32>
    %394 = vector.broadcast %393 : vector<2x1xf32> to vector<2x8xf32>
    %395 = arith.mulf %390, %394 : vector<2x8xf32>
    %396 = arith.mulf %395, %267 : vector<2x8xf32>
    %397 = vector.shape_cast %396 : vector<2x8xf32> to vector<2x8x1xf32>
    %398 = vector.broadcast %397 : vector<2x8x1xf32> to vector<2x8x128xf32>
    %399 = arith.mulf %398, %286 : vector<2x8x128xf32>
    %cst_168 = arith.constant dense<0.000000e+00> : vector<2x128xf32>
    %400 = vector.multi_reduction <add>, %399, %cst_168 [1] : vector<2x8x128xf32> to vector<2x128xf32>
    %cst_169 = arith.constant 0.000000e+00 : f32
    %401 = vector.broadcast %cst_169 : f32 to vector<2x128xf32>
    %402 = arith.cmpf ogt, %400, %401 : vector<2x128xf32>
    %cst_170 = arith.constant 0.000000e+00 : f32
    %403 = vector.broadcast %cst_170 : f32 to vector<2x128xf32>
    %404 = arith.minimumf %400, %403 : vector<2x128xf32>
    %405 = math.exp %404 : vector<2x128xf32>
    %cst_171 = arith.constant 1.000000e+00 : f32
    %406 = vector.broadcast %cst_171 : f32 to vector<2x128xf32>
    %407 = arith.subf %405, %406 : vector<2x128xf32>
    %408 = arith.select %402, %400, %407 : vector<2x128xi1>, vector<2x128xf32>
    %c0_172 = arith.constant 0 : index
    %c0_173 = arith.constant 0 : index
    %409 = vector.load %arg25[%c0_172, %c0_173] : memref<128x384xbf16, #tpu.memory_space<vmem>>, vector<128x384xbf16>
    %410 = arith.truncf %408 : vector<2x128xf32> to vector<2x128xbf16>
    %cst_174 = arith.constant dense<0.000000e+00> : vector<2x384xf32>
    %411 = tpu.matmul %410, %409, %cst_174 {dimension_numbers = #tpu.dot_dimension_numbers<[1], [0], [0], [1], [0, 0, 1, 1], [], []>} : vector<2x128xbf16>, vector<128x384xbf16>, vector<2x384xf32> -> vector<2x384xf32>
    %c0_175 = arith.constant 0 : index
    %c0_176 = arith.constant 0 : index
    %412 = vector.load %arg27[%c0_175, %c0_176] : memref<1x384xf32, #tpu.memory_space<vmem>>, vector<1x384xf32>
    %413 = vector.broadcast %412 : vector<1x384xf32> to vector<2x384xf32>
    %414 = arith.addf %411, %413 : vector<2x384xf32>
    %c0_177 = arith.constant 0 : index
    %c0_178 = arith.constant 0 : index
    %415 = vector.load %arg26[%c0_177, %c0_178] : memref<128x384xbf16, #tpu.memory_space<vmem>>, vector<128x384xbf16>
    %416 = arith.truncf %368 : vector<2x128xf32> to vector<2x128xbf16>
    %cst_179 = arith.constant dense<0.000000e+00> : vector<2x384xf32>
    %417 = tpu.matmul %416, %415, %cst_179 {dimension_numbers = #tpu.dot_dimension_numbers<[1], [0], [0], [1], [0, 0, 1, 1], [], []>} : vector<2x128xbf16>, vector<128x384xbf16>, vector<2x384xf32> -> vector<2x384xf32>
    %c0_180 = arith.constant 0 : index
    %c0_181 = arith.constant 0 : index
    %418 = vector.load %arg28[%c0_180, %c0_181] : memref<1x384xf32, #tpu.memory_space<vmem>>, vector<1x384xf32>
    %419 = vector.broadcast %418 : vector<1x384xf32> to vector<2x384xf32>
    %420 = arith.addf %417, %419 : vector<2x384xf32>
    %421 = vector.extract_strided_slice %414 {offsets = [0, 0], sizes = [2, 128], strides = [1, 1]} : vector<2x384xf32> to vector<2x128xf32>
    %422 = vector.extract_strided_slice %420 {offsets = [0, 0], sizes = [2, 128], strides = [1, 1]} : vector<2x384xf32> to vector<2x128xf32>
    %423 = arith.addf %421, %422 : vector<2x128xf32>
    %424 = arith.negf %423 : vector<2x128xf32>
    %425 = math.exp %424 : vector<2x128xf32>
    %cst_182 = arith.constant 1.000000e+00 : f32
    %426 = vector.broadcast %cst_182 : f32 to vector<2x128xf32>
    %427 = arith.addf %426, %425 : vector<2x128xf32>
    %428 = arith.divf %426, %427 : vector<2x128xf32>
    %429 = vector.extract_strided_slice %414 {offsets = [0, 128], sizes = [2, 128], strides = [1, 1]} : vector<2x384xf32> to vector<2x128xf32>
    %430 = vector.extract_strided_slice %420 {offsets = [0, 128], sizes = [2, 128], strides = [1, 1]} : vector<2x384xf32> to vector<2x128xf32>
    %431 = arith.addf %429, %430 : vector<2x128xf32>
    %432 = arith.negf %431 : vector<2x128xf32>
    %433 = math.exp %432 : vector<2x128xf32>
    %cst_183 = arith.constant 1.000000e+00 : f32
    %434 = vector.broadcast %cst_183 : f32 to vector<2x128xf32>
    %435 = arith.addf %434, %433 : vector<2x128xf32>
    %436 = arith.divf %434, %435 : vector<2x128xf32>
    %437 = vector.extract_strided_slice %414 {offsets = [0, 256], sizes = [2, 128], strides = [1, 1]} : vector<2x384xf32> to vector<2x128xf32>
    %438 = vector.extract_strided_slice %420 {offsets = [0, 256], sizes = [2, 128], strides = [1, 1]} : vector<2x384xf32> to vector<2x128xf32>
    %439 = arith.mulf %428, %438 : vector<2x128xf32>
    %440 = arith.addf %437, %439 : vector<2x128xf32>
    %441 = math.tanh %440 : vector<2x128xf32>
    %cst_184 = arith.constant 1.000000e+00 : f32
    %442 = vector.broadcast %cst_184 : f32 to vector<2x128xf32>
    %443 = arith.subf %442, %436 : vector<2x128xf32>
    %444 = arith.mulf %443, %441 : vector<2x128xf32>
    %445 = arith.mulf %436, %368 : vector<2x128xf32>
    %446 = arith.addf %444, %445 : vector<2x128xf32>
    %c0_185 = arith.constant 0 : index
    %c0_186 = arith.constant 0 : index
    %447 = vector.load %arg29[%c0_185, %c0_186] : memref<128x128xbf16, #tpu.memory_space<vmem>>, vector<128x128xbf16>
    %448 = arith.truncf %446 : vector<2x128xf32> to vector<2x128xbf16>
    %cst_187 = arith.constant dense<0.000000e+00> : vector<2x128xf32>
    %449 = tpu.matmul %448, %447, %cst_187 {dimension_numbers = #tpu.dot_dimension_numbers<[1], [0], [0], [1], [0, 0, 1, 1], [], []>} : vector<2x128xbf16>, vector<128x128xbf16>, vector<2x128xf32> -> vector<2x128xf32>
    %c0_188 = arith.constant 0 : index
    %c0_189 = arith.constant 0 : index
    %450 = vector.load %arg30[%c0_188, %c0_189] : memref<1x128xf32, #tpu.memory_space<vmem>>, vector<1x128xf32>
    %451 = vector.broadcast %450 : vector<1x128xf32> to vector<2x128xf32>
    %452 = arith.addf %449, %451 : vector<2x128xf32>
    %c0_190 = arith.constant 0 : index
    %c0_191 = arith.constant 0 : index
    %453 = vector.load %arg31[%c0_190, %c0_191] : memref<2x128xf32, #tpu.memory_space<vmem>>, vector<2x128xf32>
    tpu.vector_store %arg31[%c0_190, %c0_191], %452 {strides = array<i32>} : memref<2x128xf32, #tpu.memory_space<vmem>>, vector<2x128xf32>,
    return
  }
  func.func @transform_0(%arg0: i32) -> (i32, i32, i32) {
    %c0_i32 = arith.constant 0 : i32
    %c0_i32_0 = arith.constant 0 : i32
    %c0_i32_1 = arith.constant 0 : i32
    return %arg0, %c0_i32, %c0_i32_0 : i32, i32, i32
  }
  func.func @transform_1(%arg0: i32) -> (i32, i32, i32) {
    %c0_i32 = arith.constant 0 : i32
    %c0_i32_0 = arith.constant 0 : i32
    %c0_i32_1 = arith.constant 0 : i32
    return %arg0, %c0_i32, %c0_i32_0 : i32, i32, i32
  }
  func.func @transform_2(%arg0: i32) -> (i32, i32, i32) {
    %c0_i32 = arith.constant 0 : i32
    %c0_i32_0 = arith.constant 0 : i32
    %c0_i32_1 = arith.constant 0 : i32
    return %arg0, %c0_i32, %c0_i32_0 : i32, i32, i32
  }
  func.func @transform_3(%arg0: i32) -> (i32, i32, i32) {
    %c0_i32 = arith.constant 0 : i32
    %c0_i32_0 = arith.constant 0 : i32
    %c0_i32_1 = arith.constant 0 : i32
    return %arg0, %c0_i32, %c0_i32_0 : i32, i32, i32
  }
  func.func @transform_4(%arg0: i32) -> (i32, i32) {
    %c0_i32 = arith.constant 0 : i32
    %c0_i32_0 = arith.constant 0 : i32
    return %arg0, %c0_i32 : i32, i32
  }
  func.func @transform_5(%arg0: i32) -> (i32, i32) {
    %c0_i32 = arith.constant 0 : i32
    %c0_i32_0 = arith.constant 0 : i32
    %c0_i32_1 = arith.constant 0 : i32
    return %c0_i32, %c0_i32_0 : i32, i32
  }
  func.func @transform_6(%arg0: i32) -> (i32, i32) {
    %c0_i32 = arith.constant 0 : i32
    %c0_i32_0 = arith.constant 0 : i32
    %c0_i32_1 = arith.constant 0 : i32
    return %c0_i32, %c0_i32_0 : i32, i32
  }
  func.func @transform_7(%arg0: i32) -> (i32, i32) {
    %c0_i32 = arith.constant 0 : i32
    %c0_i32_0 = arith.constant 0 : i32
    %c0_i32_1 = arith.constant 0 : i32
    return %c0_i32, %c0_i32_0 : i32, i32
  }
  func.func @transform_8(%arg0: i32) -> (i32, i32) {
    %c0_i32 = arith.constant 0 : i32
    %c0_i32_0 = arith.constant 0 : i32
    %c0_i32_1 = arith.constant 0 : i32
    return %c0_i32, %c0_i32_0 : i32, i32
  }
  func.func @transform_9(%arg0: i32) -> (i32, i32) {
    %c0_i32 = arith.constant 0 : i32
    %c0_i32_0 = arith.constant 0 : i32
    %c0_i32_1 = arith.constant 0 : i32
    return %c0_i32, %c0_i32_0 : i32, i32
  }
  func.func @transform_10(%arg0: i32) -> (i32, i32) {
    %c0_i32 = arith.constant 0 : i32
    %c0_i32_0 = arith.constant 0 : i32
    %c0_i32_1 = arith.constant 0 : i32
    return %c0_i32, %c0_i32_0 : i32, i32
  }
  func.func @transform_11(%arg0: i32) -> (i32, i32) {
    %c0_i32 = arith.constant 0 : i32
    %c0_i32_0 = arith.constant 0 : i32
    %c0_i32_1 = arith.constant 0 : i32
    return %c0_i32, %c0_i32_0 : i32, i32
  }
  func.func @transform_12(%arg0: i32) -> (i32, i32) {
    %c0_i32 = arith.constant 0 : i32
    %c0_i32_0 = arith.constant 0 : i32
    %c0_i32_1 = arith.constant 0 : i32
    return %c0_i32, %c0_i32_0 : i32, i32
  }
  func.func @transform_13(%arg0: i32) -> (i32, i32, i32) {
    %c0_i32 = arith.constant 0 : i32
    %c0_i32_0 = arith.constant 0 : i32
    %c0_i32_1 = arith.constant 0 : i32
    %c0_i32_2 = arith.constant 0 : i32
    return %c0_i32, %c0_i32_0, %c0_i32_1 : i32, i32, i32
  }
  func.func @transform_14(%arg0: i32) -> (i32, i32, i32) {
    %c0_i32 = arith.constant 0 : i32
    %c0_i32_0 = arith.constant 0 : i32
    %c0_i32_1 = arith.constant 0 : i32
    %c0_i32_2 = arith.constant 0 : i32
    return %c0_i32, %c0_i32_0, %c0_i32_1 : i32, i32, i32
  }
  func.func @transform_15(%arg0: i32) -> (i32, i32, i32) {
    %c0_i32 = arith.constant 0 : i32
    %c0_i32_0 = arith.constant 0 : i32
    %c0_i32_1 = arith.constant 0 : i32
    %c0_i32_2 = arith.constant 0 : i32
    return %c0_i32, %c0_i32_0, %c0_i32_1 : i32, i32, i32
  }
  func.func @transform_16(%arg0: i32) -> (i32, i32, i32) {
    %c0_i32 = arith.constant 0 : i32
    %c0_i32_0 = arith.constant 0 : i32
    %c0_i32_1 = arith.constant 0 : i32
    %c0_i32_2 = arith.constant 0 : i32
    return %c0_i32, %c0_i32_0, %c0_i32_1 : i32, i32, i32
  }
  func.func @transform_17(%arg0: i32) -> (i32, i32, i32) {
    %c0_i32 = arith.constant 0 : i32
    %c0_i32_0 = arith.constant 0 : i32
    %c0_i32_1 = arith.constant 0 : i32
    %c0_i32_2 = arith.constant 0 : i32
    return %c0_i32, %c0_i32_0, %c0_i32_1 : i32, i32, i32
  }
  func.func @transform_18(%arg0: i32) -> (i32, i32, i32) {
    %c0_i32 = arith.constant 0 : i32
    %c0_i32_0 = arith.constant 0 : i32
    %c0_i32_1 = arith.constant 0 : i32
    %c0_i32_2 = arith.constant 0 : i32
    return %c0_i32, %c0_i32_0, %c0_i32_1 : i32, i32, i32
  }
  func.func @transform_19(%arg0: i32) -> (i32, i32) {
    %c0_i32 = arith.constant 0 : i32
    %c0_i32_0 = arith.constant 0 : i32
    %c0_i32_1 = arith.constant 0 : i32
    return %c0_i32, %c0_i32_0 : i32, i32
  }
  func.func @transform_20(%arg0: i32) -> (i32, i32) {
    %c0_i32 = arith.constant 0 : i32
    %c0_i32_0 = arith.constant 0 : i32
    %c0_i32_1 = arith.constant 0 : i32
    return %c0_i32, %c0_i32_0 : i32, i32
  }
  func.func @transform_21(%arg0: i32) -> (i32, i32) {
    %c0_i32 = arith.constant 0 : i32
    %c0_i32_0 = arith.constant 0 : i32
    %c0_i32_1 = arith.constant 0 : i32
    return %c0_i32, %c0_i32_0 : i32, i32
  }
  func.func @transform_22(%arg0: i32) -> (i32, i32) {
    %c0_i32 = arith.constant 0 : i32
    %c0_i32_0 = arith.constant 0 : i32
    %c0_i32_1 = arith.constant 0 : i32
    return %c0_i32, %c0_i32_0 : i32, i32
  }
  func.func @transform_23(%arg0: i32) -> (i32, i32) {
    %c0_i32 = arith.constant 0 : i32
    %c0_i32_0 = arith.constant 0 : i32
    %c0_i32_1 = arith.constant 0 : i32
    return %c0_i32, %c0_i32_0 : i32, i32
  }
  func.func @transform_24(%arg0: i32) -> (i32, i32) {
    %c0_i32 = arith.constant 0 : i32
    %c0_i32_0 = arith.constant 0 : i32
    %c0_i32_1 = arith.constant 0 : i32
    return %c0_i32, %c0_i32_0 : i32, i32
  }
  func.func @transform_25(%arg0: i32) -> (i32, i32) {
    %c0_i32 = arith.constant 0 : i32
    %c0_i32_0 = arith.constant 0 : i32
    %c0_i32_1 = arith.constant 0 : i32
    return %c0_i32, %c0_i32_0 : i32, i32
  }
  func.func @transform_26(%arg0: i32) -> (i32, i32) {
    %c0_i32 = arith.constant 0 : i32
    %c0_i32_0 = arith.constant 0 : i32
    %c0_i32_1 = arith.constant 0 : i32
    return %c0_i32, %c0_i32_0 : i32, i32
  }
  func.func @transform_27(%arg0: i32) -> (i32, i32) {
    %c0_i32 = arith.constant 0 : i32
    %c0_i32_0 = arith.constant 0 : i32
    %c0_i32_1 = arith.constant 0 : i32
    return %c0_i32, %c0_i32_0 : i32, i32
  }
  func.func @transform_28(%arg0: i32) -> (i32, i32) {
    %c0_i32 = arith.constant 0 : i32
    %c0_i32_0 = arith.constant 0 : i32
    %c0_i32_1 = arith.constant 0 : i32
    return %c0_i32, %c0_i32_0 : i32, i32
  }
  func.func @transform_29(%arg0: i32) -> (i32, i32) {
    %c0_i32 = arith.constant 0 : i32
    %c0_i32_0 = arith.constant 0 : i32
    %c0_i32_1 = arith.constant 0 : i32
    return %c0_i32, %c0_i32_0 : i32, i32
  }
  func.func @transform_30(%arg0: i32) -> (i32, i32) {
    %c0_i32 = arith.constant 0 : i32
    %c0_i32_0 = arith.constant 0 : i32
    return %arg0, %c0_i32 : i32, i32
  }
}

</mosaic_0001>

<llo_original>
// kernel: fingerprint_forward.1
$region0: #{fingerprint_forward.1}
  #allocation0 [shape = 'u32[]', space=smem, size = 0x4, offset = 0x4, fixed_abs, tag = 'smem constant byte address 0x4 - core index']
  #allocation1 [shape = 'u32[72,128]{1,0:T(1,128)}', space=vmem, size = 0x9000, scoped, tag = 'internal scratch']
  #allocation2 [shape = 'f32[1,1]{1,0:T(1,128)S(1)}', space=vmem, size = 0x200, scoped, tag = 'scoped memory for fingerprint_forward.1']
  %s0 = inlined_call_operand.smem [shape: u32[31], index: -1, kind: input, shape index: {}]
  %s1 = sld [smem:[%s0]]
  %s2 = scalar_lea.smem %s0, 1
  %s3 = sld [smem:[%s2]]
  %s4 = scalar_lea.smem %s0, 2
  %s5 = sld [smem:[%s4]]
  %s6 = scalar_lea.smem %s0, 3
  %s7 = sld [smem:[%s6]]
  %s8 = scalar_lea.smem %s0, 4
  %s9 = sld [smem:[%s8]]
  %s10 = scalar_lea.smem %s0, 5
  %s11 = sld [smem:[%s10]]
  %s12 = scalar_lea.smem %s0, 6
  %s13 = sld [smem:[%s12]]
  %s14 = scalar_lea.smem %s0, 7
  %s15 = sld [smem:[%s14]]
  %s16 = scalar_lea.smem %s0, 8
  %s17 = sld [smem:[%s16]]
  %s18 = scalar_lea.smem %s0, 9
  %s19 = sld [smem:[%s18]]
  %s20 = scalar_lea.smem %s0, 10
  %s21 = sld [smem:[%s20]]
  %s22 = scalar_lea.smem %s0, 11
  %s23 = sld [smem:[%s22]]
  %s24 = scalar_lea.smem %s0, 12
  %s25 = sld [smem:[%s24]]
  %s26 = scalar_lea.smem %s0, 13
  %s27 = sld [smem:[%s26]]
  %s28 = scalar_lea.smem %s0, 14
  %s29 = sld [smem:[%s28]]
  %s30 = scalar_lea.smem %s0, 15
  %s31 = sld [smem:[%s30]]
  %s32 = scalar_lea.smem %s0, 16
  %s33 = sld [smem:[%s32]]
  %s34 = scalar_lea.smem %s0, 17
  %s35 = sld [smem:[%s34]]
  %s36 = scalar_lea.smem %s0, 18
  %s37 = sld [smem:[%s36]]
  %s38 = scalar_lea.smem %s0, 19
  %s39 = sld [smem:[%s38]]
  %s40 = scalar_lea.smem %s0, 20
  %s41 = sld [smem:[%s40]]
  %s42 = scalar_lea.smem %s0, 21
  %s43 = sld [smem:[%s42]]
  %s44 = scalar_lea.smem %s0, 22
  %s45 = sld [smem:[%s44]]
  %s46 = scalar_lea.smem %s0, 23
  %s47 = sld [smem:[%s46]]
  %s48 = scalar_lea.smem %s0, 24
  %s49 = sld [smem:[%s48]]
  %s50 = scalar_lea.smem %s0, 25
  %s51 = sld [smem:[%s50]]
  %s52 = scalar_lea.smem %s0, 26
  %s53 = sld [smem:[%s52]]
  %s54 = scalar_lea.smem %s0, 27
  %s55 = sld [smem:[%s54]]
  %s56 = scalar_lea.smem %s0, 28
  %s57 = sld [smem:[%s56]]
  %s58 = scalar_lea.smem %s0, 29
  %s59 = sld [smem:[%s58]]
  %s60 = scalar_lea.smem %s0, 30
  %s61 = sld [smem:[%s60]]
  %s62 = sld [smem:[#allocation0]]
  $region130: #{fingerprint_forward.1} parent=0
    _
  %s64 = ssub.s32 1, %s62
  %s65 = scalar_select 0, %s64, %s62
  %v66 = vstv %s43
  %67 = vst [vmem:[#allocation2] sm:$0x1] %v66
  $region1: #{fingerprint_forward.1} parent=0
    #allocation3 [shape = 'u8[1024]{0}', space=vmem, size = 0x400, scoped, tag = 'output window, operand 0, single buffered']
    #allocation4 [shape = 's32[1]{0}', space=sflag, size = 0x4, scoped, tag = 'scoped memory for fingerprint_forward.1']
    %68 = vsyncpa [#allocation4], 0
    // Predicated region
    $region2: #{fingerprint_forward.1} parent=1 // pred_check
      _
    $region3: #{fingerprint_forward.1} parent=1 // pred_check_branch
      %70 = sbr.rel (0) target = $region5
    $region4: #{fingerprint_forward.1} parent=1 // pred_region
      _
    $region5: #{fingerprint_forward.1} parent=1 // pred_fallthru
      _
    // Predicated region
    $region6: #{fingerprint_forward.1} parent=1 // pred_check
      _
    $region7: #{fingerprint_forward.1} parent=1 // pred_check_branch
      %72 = sbr.rel (0) target = $region9
    $region8: #{fingerprint_forward.1} parent=1 // pred_region
      _
    $region9: #{fingerprint_forward.1} parent=1 // pred_fallthru
      _
    // Predicated region
    $region10: #{fingerprint_forward.1} parent=1 // pred_check
      _
    $region11: #{fingerprint_forward.1} parent=1 // pred_check_branch
      %74 = sbr.rel (0) target = $region13
    $region12: #{fingerprint_forward.1} parent=1 // pred_region
      _
    $region13: #{fingerprint_forward.1} parent=1 // pred_fallthru
      _
    // Predicated region
    $region14: #{fingerprint_forward.1} parent=1 // pred_check
      _
    $region15: #{fingerprint_forward.1} parent=1 // pred_check_branch
      %76 = sbr.rel (0) target = $region17
    $region16: #{fingerprint_forward.1} parent=1 // pred_region
      _
    $region17: #{fingerprint_forward.1} parent=1 // pred_fallthru
      _
    // Predicated region
    $region18: #{fingerprint_forward.1} parent=1 // pred_check
      _
    $region19: #{fingerprint_forward.1} parent=1 // pred_check_branch
      %78 = sbr.rel (0) target = $region21
    $region20: #{fingerprint_forward.1} parent=1 // pred_region
      _
    $region21: #{fingerprint_forward.1} parent=1 // pred_fallthru
      _
    // Predicated region
    $region22: #{fingerprint_forward.1} parent=1 // pred_check
      _
    $region23: #{fingerprint_forward.1} parent=1 // pred_check_branch
      %80 = sbr.rel (0) target = $region25
    $region24: #{fingerprint_forward.1} parent=1 // pred_region
      _
    $region25: #{fingerprint_forward.1} parent=1 // pred_fallthru
      _
    // Predicated region
    $region26: #{fingerprint_forward.1} parent=1 // pred_check
      _
    $region27: #{fingerprint_forward.1} parent=1 // pred_check_branch
      %82 = sbr.rel (0) target = $region29
    $region28: #{fingerprint_forward.1} parent=1 // pred_region
      _
    $region29: #{fingerprint_forward.1} parent=1 // pred_fallthru
      _
    // Predicated region
    $region30: #{fingerprint_forward.1} parent=1 // pred_check
      _
    $region31: #{fingerprint_forward.1} parent=1 // pred_check_branch
      %84 = sbr.rel (0) target = $region33
    $region32: #{fingerprint_forward.1} parent=1 // pred_region
      _
    $region33: #{fingerprint_forward.1} parent=1 // pred_fallthru
      _
    // Predicated region
    $region34: #{fingerprint_forward.1} parent=1 // pred_check
      _
    $region35: #{fingerprint_forward.1} parent=1 // pred_check_branch
      %86 = sbr.rel (0) target = $region37
    $region36: #{fingerprint_forward.1} parent=1 // pred_region
      _
    $region37: #{fingerprint_forward.1} parent=1 // pred_fallthru
      _
    // Predicated region
    $region38: #{fingerprint_forward.1} parent=1 // pred_check
      _
    $region39: #{fingerprint_forward.1} parent=1 // pred_check_branch
      %88 = sbr.rel (0) target = $region41
    $region40: #{fingerprint_forward.1} parent=1 // pred_region
      _
    $region41: #{fingerprint_forward.1} parent=1 // pred_fallthru
      _
    // Predicated region
    $region42: #{fingerprint_forward.1} parent=1 // pred_check
      _
    $region43: #{fingerprint_forward.1} parent=1 // pred_check_branch
      %90 = sbr.rel (0) target = $region45
    $region44: #{fingerprint_forward.1} parent=1 // pred_region
      _
    $region45: #{fingerprint_forward.1} parent=1 // pred_fallthru
      _
    // Predicated region
    $region46: #{fingerprint_forward.1} parent=1 // pred_check
      _
    $region47: #{fingerprint_forward.1} parent=1 // pred_check_branch
      %92 = sbr.rel (0) target = $region49
    $region48: #{fingerprint_forward.1} parent=1 // pred_region
      _
    $region49: #{fingerprint_forward.1} parent=1 // pred_fallthru
      _
    // Predicated region
    $region50: #{fingerprint_forward.1} parent=1 // pred_check
      _
    $region51: #{fingerprint_forward.1} parent=1 // pred_check_branch
      %94 = sbr.rel (0) target = $region53
    $region52: #{fingerprint_forward.1} parent=1 // pred_region
      _
    $region53: #{fingerprint_forward.1} parent=1 // pred_fallthru
      _
    // Predicated region
    $region54: #{fingerprint_forward.1} parent=1 // pred_check
      _
    $region55: #{fingerprint_forward.1} parent=1 // pred_check_branch
      %96 = sbr.rel (0) target = $region57
    $region56: #{fingerprint_forward.1} parent=1 // pred_region
      _
    $region57: #{fingerprint_forward.1} parent=1 // pred_fallthru
      _
    // Predicated region
    $region58: #{fingerprint_forward.1} parent=1 // pred_check
      _
    $region59: #{fingerprint_forward.1} parent=1 // pred_check_branch
      %98 = sbr.rel (0) target = $region61
    $region60: #{fingerprint_forward.1} parent=1 // pred_region
      _
    $region61: #{fingerprint_forward.1} parent=1 // pred_fallthru
      _
    // Predicated region
    $region62: #{fingerprint_forward.1} parent=1 // pred_check
      _
    $region63: #{fingerprint_forward.1} parent=1 // pred_check_branch
      %100 = sbr.rel (0) target = $region65
    $region64: #{fingerprint_forward.1} parent=1 // pred_region
      _
    $region65: #{fingerprint_forward.1} parent=1 // pred_fallthru
      _
    // Predicated region
    $region66: #{fingerprint_forward.1} parent=1 // pred_check
      _
    $region67: #{fingerprint_forward.1} parent=1 // pred_check_branch
      %102 = sbr.rel (0) target = $region69
    $region68: #{fingerprint_forward.1} parent=1 // pred_region
      _
    $region69: #{fingerprint_forward.1} parent=1 // pred_fallthru
      _
    // Predicated region
    $region70: #{fingerprint_forward.1} parent=1 // pred_check
      _
    $region71: #{fingerprint_forward.1} parent=1 // pred_check_branch
      %104 = sbr.rel (0) target = $region73
    $region72: #{fingerprint_forward.1} parent=1 // pred_region
      _
    $region73: #{fingerprint_forward.1} parent=1 // pred_fallthru
      _
    // Predicated region
    $region74: #{fingerprint_forward.1} parent=1 // pred_check
      _
    $region75: #{fingerprint_forward.1} parent=1 // pred_check_branch
      %106 = sbr.rel (0) target = $region77
    $region76: #{fingerprint_forward.1} parent=1 // pred_region
      _
    $region77: #{fingerprint_forward.1} parent=1 // pred_fallthru
      _
    // Predicated region
    $region78: #{fingerprint_forward.1} parent=1 // pred_check
      _
    $region79: #{fingerprint_forward.1} parent=1 // pred_check_branch
      %108 = sbr.rel (0) target = $region81
    $region80: #{fingerprint_forward.1} parent=1 // pred_region
      _
    $region81: #{fingerprint_forward.1} parent=1 // pred_fallthru
      _
    // Predicated region
    $region82: #{fingerprint_forward.1} parent=1 // pred_check
      _
    $region83: #{fingerprint_forward.1} parent=1 // pred_check_branch
      %110 = sbr.rel (0) target = $region85
    $region84: #{fingerprint_forward.1} parent=1 // pred_region
      _
    $region85: #{fingerprint_forward.1} parent=1 // pred_fallthru
      _
    // Predicated region
    $region86: #{fingerprint_forward.1} parent=1 // pred_check
      _
    $region87: #{fingerprint_forward.1} parent=1 // pred_check_branch
      %112 = sbr.rel (0) target = $region89
    $region88: #{fingerprint_forward.1} parent=1 // pred_region
      _
    $region89: #{fingerprint_forward.1} parent=1 // pred_fallthru
      _
    // Predicated region
    $region90: #{fingerprint_forward.1} parent=1 // pred_check
      _
    $region91: #{fingerprint_forward.1} parent=1 // pred_check_branch
      %114 = sbr.rel (0) target = $region93
    $region92: #{fingerprint_forward.1} parent=1 // pred_region
      _
    $region93: #{fingerprint_forward.1} parent=1 // pred_fallthru
      _
    // Predicated region
    $region94: #{fingerprint_forward.1} parent=1 // pred_check
      _
    $region95: #{fingerprint_forward.1} parent=1 // pred_check_branch
      %116 = sbr.rel (0) target = $region97
    $region96: #{fingerprint_forward.1} parent=1 // pred_region
      _
    $region97: #{fingerprint_forward.1} parent=1 // pred_fallthru
      _
    // Predicated region
    $region98: #{fingerprint_forward.1} parent=1 // pred_check
      _
    $region99: #{fingerprint_forward.1} parent=1 // pred_check_branch
      %118 = sbr.rel (0) target = $region101
    $region100: #{fingerprint_forward.1} parent=1 // pred_region
      _
    $region101: #{fingerprint_forward.1} parent=1 // pred_fallthru
      _
    // Predicated region
    $region102: #{fingerprint_forward.1} parent=1 // pred_check
      _
    $region103: #{fingerprint_forward.1} parent=1 // pred_check_branch
      %120 = sbr.rel (0) target = $region105
    $region104: #{fingerprint_forward.1} parent=1 // pred_region
      _
    $region105: #{fingerprint_forward.1} parent=1 // pred_fallthru
      _
    // Predicated region
    $region106: #{fingerprint_forward.1} parent=1 // pred_check
      _
    $region107: #{fingerprint_forward.1} parent=1 // pred_check_branch
      %122 = sbr.rel (0) target = $region109
    $region108: #{fingerprint_forward.1} parent=1 // pred_region
      _
    $region109: #{fingerprint_forward.1} parent=1 // pred_fallthru
      _
    // Predicated region
    $region110: #{fingerprint_forward.1} parent=1 // pred_check
      _
    $region111: #{fingerprint_forward.1} parent=1 // pred_check_branch
      %124 = sbr.rel (0) target = $region113
    $region112: #{fingerprint_forward.1} parent=1 // pred_region
      _
    $region113: #{fingerprint_forward.1} parent=1 // pred_fallthru
      _
    // Predicated region
    $region114: #{fingerprint_forward.1} parent=1 // pred_check
      _
    $region115: #{fingerprint_forward.1} parent=1 // pred_check_branch
      %126 = sbr.rel (0) target = $region117
    $region116: #{fingerprint_forward.1} parent=1 // pred_region
      _
    $region117: #{fingerprint_forward.1} parent=1 // pred_fallthru
      _
    // Predicated region
    $region118: #{fingerprint_forward.1} parent=1 // pred_check
      _
    $region119: #{fingerprint_forward.1} parent=1 // pred_check_branch
      %128 = sbr.rel (0) target = $region121
    $region120: #{fingerprint_forward.1} parent=1 // pred_region
      _
    $region121: #{fingerprint_forward.1} parent=1 // pred_fallthru
      _
    %v130 = vld [vmem:[%s1] sm:$0xff]
    %v131 = vld [vmem:[%s1 + $0x8] sm:$0xff]
    %v132 = vld [vmem:[%s3] sm:$0xff]
    %v133 = vld [vmem:[%s3 + $0x8] sm:$0xff]
    %v134 = vld [vmem:[%s5] sm:$0xff]
    %v135 = vld [vmem:[%s5 + $0x8] sm:$0xff]
    %v136 = vld [vmem:[%s7] sm:$0xff]
    %v137 = vld [vmem:[%s7 + $0x8] sm:$0xff]
    %v138 = vadd.s32 %v135, 8
    %v139 = vadd.s32 %v137, 8
    %v140 = vlaneseq
    %v141 = vand.u32 %v140, 127
    %v142 = vperm.slane %v134, 0
    %v143 = vlaneseq
    %v144 = vshrl.u32 %v143, 7
    %146 = vset.pattern.permute.xlu0 %v144
    %147 = vperm.xlu0 %146, %v142
    %v148 = vpop.permute.xlu0 %147
    %v149 = vperm.slane %v134, 1
    %v150 = vlaneseq
    %v151 = vshrl.u32 %v150, 7
    %153 = vset.pattern.permute.xlu0 %v151
    %154 = vperm.xlu0 %153, %v149
    %v155 = vpop.permute.xlu0 %154
    %v156 = vperm.slane %v134, 2
    %v157 = vlaneseq
    %v158 = vshrl.u32 %v157, 7
    %160 = vset.pattern.permute.xlu0 %v158
    %161 = vperm.xlu0 %160, %v156
    %v162 = vpop.permute.xlu0 %161
    %v163 = vperm.slane %v134, 3
    %v164 = vlaneseq
    %v165 = vshrl.u32 %v164, 7
    %167 = vset.pattern.permute.xlu0 %v165
    %168 = vperm.xlu0 %167, %v163
    %v169 = vpop.permute.xlu0 %168
    %v170 = vperm.slane %v134, 4
    %v171 = vlaneseq
    %v172 = vshrl.u32 %v171, 7
    %174 = vset.pattern.permute.xlu0 %v172
    %175 = vperm.xlu0 %174, %v170
    %v176 = vpop.permute.xlu0 %175
    %v177 = vperm.slane %v134, 5
    %v178 = vlaneseq
    %v179 = vshrl.u32 %v178, 7
    %181 = vset.pattern.permute.xlu0 %v179
    %182 = vperm.xlu0 %181, %v177
    %v183 = vpop.permute.xlu0 %182
    %v184 = vperm.slane %v134, 6
    %v185 = vlaneseq
    %v186 = vshrl.u32 %v185, 7
    %188 = vset.pattern.permute.xlu0 %v186
    %189 = vperm.xlu0 %188, %v184
    %v190 = vpop.permute.xlu0 %189
    %v191 = vperm.slane %v134, 7
    %v192 = vlaneseq
    %v193 = vshrl.u32 %v192, 7
    %195 = vset.pattern.permute.xlu0 %v193
    %196 = vperm.xlu0 %195, %v191
    %v197 = vpop.permute.xlu0 %196
    %v198 = vperm.slane %v138, 0
    %v199 = vlaneseq
    %v200 = vshrl.u32 %v199, 7
    %202 = vset.pattern.permute.xlu0 %v200
    %203 = vperm.xlu0 %202, %v198
    %v204 = vpop.permute.xlu0 %203
    %v205 = vperm.slane %v138, 1
    %v206 = vlaneseq
    %v207 = vshrl.u32 %v206, 7
    %209 = vset.pattern.permute.xlu0 %v207
    %210 = vperm.xlu0 %209, %v205
    %v211 = vpop.permute.xlu0 %210
    %v212 = vperm.slane %v138, 2
    %v213 = vlaneseq
    %v214 = vshrl.u32 %v213, 7
    %216 = vset.pattern.permute.xlu0 %v214
    %217 = vperm.xlu0 %216, %v212
    %v218 = vpop.permute.xlu0 %217
    %v219 = vperm.slane %v138, 3
    %v220 = vlaneseq
    %v221 = vshrl.u32 %v220, 7
    %223 = vset.pattern.permute.xlu0 %v221
    %224 = vperm.xlu0 %223, %v219
    %v225 = vpop.permute.xlu0 %224
    %v226 = vperm.slane %v138, 4
    %v227 = vlaneseq
    %v228 = vshrl.u32 %v227, 7
    %230 = vset.pattern.permute.xlu0 %v228
    %231 = vperm.xlu0 %230, %v226
    %v232 = vpop.permute.xlu0 %231
    %v233 = vperm.slane %v138, 5
    %v234 = vlaneseq
    %v235 = vshrl.u32 %v234, 7
    %237 = vset.pattern.permute.xlu0 %v235
    %238 = vperm.xlu0 %237, %v233
    %v239 = vpop.permute.xlu0 %238
    %v240 = vperm.slane %v138, 6
    %v241 = vlaneseq
    %v242 = vshrl.u32 %v241, 7
    %244 = vset.pattern.permute.xlu0 %v242
    %245 = vperm.xlu0 %244, %v240
    %v246 = vpop.permute.xlu0 %245
    %v247 = vperm.slane %v138, 7
    %v248 = vlaneseq
    %v249 = vshrl.u32 %v248, 7
    %251 = vset.pattern.permute.xlu0 %v249
    %252 = vperm.xlu0 %251, %v247
    %v253 = vpop.permute.xlu0 %252
    %vm254 = vcmp.eq.s32.totalorder %v148, %v141
    %vm255 = vcmp.eq.s32.totalorder %v155, %v141
    %vm256 = vcmp.eq.s32.totalorder %v162, %v141
    %vm257 = vcmp.eq.s32.totalorder %v169, %v141
    %vm258 = vcmp.eq.s32.totalorder %v176, %v141
    %vm259 = vcmp.eq.s32.totalorder %v183, %v141
    %vm260 = vcmp.eq.s32.totalorder %v190, %v141
    %vm261 = vcmp.eq.s32.totalorder %v197, %v141
    %vm262 = vcmp.eq.s32.totalorder %v204, %v141
    %vm263 = vcmp.eq.s32.totalorder %v211, %v141
    %vm264 = vcmp.eq.s32.totalorder %v218, %v141
    %vm265 = vcmp.eq.s32.totalorder %v225, %v141
    %vm266 = vcmp.eq.s32.totalorder %v232, %v141
    %vm267 = vcmp.eq.s32.totalorder %v239, %v141
    %vm268 = vcmp.eq.s32.totalorder %v246, %v141
    %vm269 = vcmp.eq.s32.totalorder %v253, %v141
    %v270 = vsel %vm254, 1.0, 0.0
    %v271 = vsel %vm255, 1.0, 0.0
    %v272 = vsel %vm256, 1.0, 0.0
    %v273 = vsel %vm257, 1.0, 0.0
    %v274 = vsel %vm258, 1.0, 0.0
    %v275 = vsel %vm259, 1.0, 0.0
    %v276 = vsel %vm260, 1.0, 0.0
    %v277 = vsel %vm261, 1.0, 0.0
    %v278 = vsel %vm262, 1.0, 0.0
    %v279 = vsel %vm263, 1.0, 0.0
    %v280 = vsel %vm264, 1.0, 0.0
    %v281 = vsel %vm265, 1.0, 0.0
    %v282 = vsel %vm266, 1.0, 0.0
    %v283 = vsel %vm267, 1.0, 0.0
    %v284 = vsel %vm268, 1.0, 0.0
    %v285 = vsel %vm269, 1.0, 0.0
    %302 = vst [vmem:[#allocation1] ss:$2 sm:$0xff] %v270
    %s303 = scalar_lea.vmem [#allocation1], 1
    %304 = vst [vmem:[%s303] ss:$2 sm:$0xff] %v271
    %s305 = scalar_lea.vmem [#allocation1], 16
    %306 = vst [vmem:[%s305] ss:$2 sm:$0xff] %v272
    %s307 = scalar_lea.vmem [#allocation1], 17
    %308 = vst [vmem:[%s307] ss:$2 sm:$0xff] %v273
    %s309 = scalar_lea.vmem [#allocation1], 32
    %310 = vst [vmem:[%s309] ss:$2 sm:$0xff] %v274
    %s311 = scalar_lea.vmem [#allocation1], 33
    %312 = vst [vmem:[%s311] ss:$2 sm:$0xff] %v275
    %s313 = scalar_lea.vmem [#allocation1], 48
    %314 = vst [vmem:[%s313] ss:$2 sm:$0xff] %v276
    %s315 = scalar_lea.vmem [#allocation1], 49
    %316 = vst [vmem:[%s315] ss:$2 sm:$0xff] %v277
    %v317 = vld.sshfl [vmem:[#allocation1] sm:$0xff pattern:$0x75316420]
    %v318 = vld.sshfl [vmem:[#allocation1 + $0x10] sm:$0xff pattern:$0x75316420]
    %v319 = vld.sshfl [vmem:[#allocation1 + $0x20] sm:$0xff pattern:$0x75316420]
    %v320 = vld.sshfl [vmem:[#allocation1 + $0x30] sm:$0xff pattern:$0x75316420]
    %321 = vst [vmem:[#allocation1] ss:$2 sm:$0xff] %v278
    %322 = vst [vmem:[%s303] ss:$2 sm:$0xff] %v279
    %323 = vst [vmem:[%s305] ss:$2 sm:$0xff] %v280
    %324 = vst [vmem:[%s307] ss:$2 sm:$0xff] %v281
    %325 = vst [vmem:[%s309] ss:$2 sm:$0xff] %v282
    %326 = vst [vmem:[%s311] ss:$2 sm:$0xff] %v283
    %327 = vst [vmem:[%s313] ss:$2 sm:$0xff] %v284
    %328 = vst [vmem:[%s315] ss:$2 sm:$0xff] %v285
    %v329 = vld.sshfl [vmem:[#allocation1] sm:$0xff pattern:$0x75316420]
    %v330 = vld.sshfl [vmem:[#allocation1 + $0x10] sm:$0xff pattern:$0x75316420]
    %v331 = vld.sshfl [vmem:[#allocation1 + $0x20] sm:$0xff pattern:$0x75316420]
    %v332 = vld.sshfl [vmem:[#allocation1 + $0x30] sm:$0xff pattern:$0x75316420]
    %v341 = vpack.c.bf16 %v318, %v317
    %v342 = vpack.c.bf16 %v320, %v319
    %v343 = vpack.c.bf16 %v330, %v329
    %v344 = vpack.c.bf16 %v332, %v331
    %v345 = vperm.slane %v136, 0
    %v346 = vlaneseq
    %v347 = vshrl.u32 %v346, 7
    %349 = vset.pattern.permute.xlu0 %v347
    %350 = vperm.xlu0 %349, %v345
    %v351 = vpop.permute.xlu0 %350
    %v352 = vperm.slane %v136, 1
    %v353 = vlaneseq
    %v354 = vshrl.u32 %v353, 7
    %356 = vset.pattern.permute.xlu0 %v354
    %357 = vperm.xlu0 %356, %v352
    %v358 = vpop.permute.xlu0 %357
    %v359 = vperm.slane %v136, 2
    %v360 = vlaneseq
    %v361 = vshrl.u32 %v360, 7
    %363 = vset.pattern.permute.xlu0 %v361
    %364 = vperm.xlu0 %363, %v359
    %v365 = vpop.permute.xlu0 %364
    %v366 = vperm.slane %v136, 3
    %v367 = vlaneseq
    %v368 = vshrl.u32 %v367, 7
    %370 = vset.pattern.permute.xlu0 %v368
    %371 = vperm.xlu0 %370, %v366
    %v372 = vpop.permute.xlu0 %371
    %v373 = vperm.slane %v136, 4
    %v374 = vlaneseq
    %v375 = vshrl.u32 %v374, 7
    %377 = vset.pattern.permute.xlu0 %v375
    %378 = vperm.xlu0 %377, %v373
    %v379 = vpop.permute.xlu0 %378
    %v380 = vperm.slane %v136, 5
    %v381 = vlaneseq
    %v382 = vshrl.u32 %v381, 7
    %384 = vset.pattern.permute.xlu0 %v382
    %385 = vperm.xlu0 %384, %v380
    %v386 = vpop.permute.xlu0 %385
    %v387 = vperm.slane %v136, 6
    %v388 = vlaneseq
    %v389 = vshrl.u32 %v388, 7
    %391 = vset.pattern.permute.xlu0 %v389
    %392 = vperm.xlu0 %391, %v387
    %v393 = vpop.permute.xlu0 %392
    %v394 = vperm.slane %v136, 7
    %v395 = vlaneseq
    %v396 = vshrl.u32 %v395, 7
    %398 = vset.pattern.permute.xlu0 %v396
    %399 = vperm.xlu0 %398, %v394
    %v400 = vpop.permute.xlu0 %399
    %v401 = vperm.slane %v139, 0
    %v402 = vlaneseq
    %v403 = vshrl.u32 %v402, 7
    %405 = vset.pattern.permute.xlu0 %v403
    %406 = vperm.xlu0 %405, %v401
    %v407 = vpop.permute.xlu0 %406
    %v408 = vperm.slane %v139, 1
    %v409 = vlaneseq
    %v410 = vshrl.u32 %v409, 7
    %412 = vset.pattern.permute.xlu0 %v410
    %413 = vperm.xlu0 %412, %v408
    %v414 = vpop.permute.xlu0 %413
    %v415 = vperm.slane %v139, 2
    %v416 = vlaneseq
    %v417 = vshrl.u32 %v416, 7
    %419 = vset.pattern.permute.xlu0 %v417
    %420 = vperm.xlu0 %419, %v415
    %v421 = vpop.permute.xlu0 %420
    %v422 = vperm.slane %v139, 3
    %v423 = vlaneseq
    %v424 = vshrl.u32 %v423, 7
    %426 = vset.pattern.permute.xlu0 %v424
    %427 = vperm.xlu0 %426, %v422
    %v428 = vpop.permute.xlu0 %427
    %v429 = vperm.slane %v139, 4
    %v430 = vlaneseq
    %v431 = vshrl.u32 %v430, 7
    %433 = vset.pattern.permute.xlu0 %v431
    %434 = vperm.xlu0 %433, %v429
    %v435 = vpop.permute.xlu0 %434
    %v436 = vperm.slane %v139, 5
    %v437 = vlaneseq
    %v438 = vshrl.u32 %v437, 7
    %440 = vset.pattern.permute.xlu0 %v438
    %441 = vperm.xlu0 %440, %v436
    %v442 = vpop.permute.xlu0 %441
    %v443 = vperm.slane %v139, 6
    %v444 = vlaneseq
    %v445 = vshrl.u32 %v444, 7
    %447 = vset.pattern.permute.xlu0 %v445
    %448 = vperm.xlu0 %447, %v443
    %v449 = vpop.permute.xlu0 %448
    %v450 = vperm.slane %v139, 7
    %v451 = vlaneseq
    %v452 = vshrl.u32 %v451, 7
    %454 = vset.pattern.permute.xlu0 %v452
    %455 = vperm.xlu0 %454, %v450
    %v456 = vpop.permute.xlu0 %455
    %vm457 = vcmp.eq.s32.totalorder %v351, %v141
    %vm458 = vcmp.eq.s32.totalorder %v358, %v141
    %vm459 = vcmp.eq.s32.totalorder %v365, %v141
    %vm460 = vcmp.eq.s32.totalorder %v372, %v141
    %vm461 = vcmp.eq.s32.totalorder %v379, %v141
    %vm462 = vcmp.eq.s32.totalorder %v386, %v141
    %vm463 = vcmp.eq.s32.totalorder %v393, %v141
    %vm464 = vcmp.eq.s32.totalorder %v400, %v141
    %vm465 = vcmp.eq.s32.totalorder %v407, %v141
    %vm466 = vcmp.eq.s32.totalorder %v414, %v141
    %vm467 = vcmp.eq.s32.totalorder %v421, %v141
    %vm468 = vcmp.eq.s32.totalorder %v428, %v141
    %vm469 = vcmp.eq.s32.totalorder %v435, %v141
    %vm470 = vcmp.eq.s32.totalorder %v442, %v141
    %vm471 = vcmp.eq.s32.totalorder %v449, %v141
    %vm472 = vcmp.eq.s32.totalorder %v456, %v141
    %v473 = vsel %vm457, 1.0, 0.0
    %v474 = vsel %vm458, 1.0, 0.0
    %v475 = vsel %vm459, 1.0, 0.0
    %v476 = vsel %vm460, 1.0, 0.0
    %v477 = vsel %vm461, 1.0, 0.0
    %v478 = vsel %vm462, 1.0, 0.0
    %v479 = vsel %vm463, 1.0, 0.0
    %v480 = vsel %vm464, 1.0, 0.0
    %v481 = vsel %vm465, 1.0, 0.0
    %v482 = vsel %vm466, 1.0, 0.0
    %v483 = vsel %vm467, 1.0, 0.0
    %v484 = vsel %vm468, 1.0, 0.0
    %v485 = vsel %vm469, 1.0, 0.0
    %v486 = vsel %vm470, 1.0, 0.0
    %v487 = vsel %vm471, 1.0, 0.0
    %v488 = vsel %vm472, 1.0, 0.0
    %505 = vst [vmem:[#allocation1] ss:$2 sm:$0xff] %v473
    %s506 = scalar_lea.vmem [#allocation1], 1
    %507 = vst [vmem:[%s506] ss:$2 sm:$0xff] %v474
    %s508 = scalar_lea.vmem [#allocation1], 16
    %509 = vst [vmem:[%s508] ss:$2 sm:$0xff] %v475
    %s510 = scalar_lea.vmem [#allocation1], 17
    %511 = vst [vmem:[%s510] ss:$2 sm:$0xff] %v476
    %s512 = scalar_lea.vmem [#allocation1], 32
    %513 = vst [vmem:[%s512] ss:$2 sm:$0xff] %v477
    %s514 = scalar_lea.vmem [#allocation1], 33
    %515 = vst [vmem:[%s514] ss:$2 sm:$0xff] %v478
    %s516 = scalar_lea.vmem [#allocation1], 48
    %517 = vst [vmem:[%s516] ss:$2 sm:$0xff] %v479
    %s518 = scalar_lea.vmem [#allocation1], 49
    %519 = vst [vmem:[%s518] ss:$2 sm:$0xff] %v480
    %v520 = vld.sshfl [vmem:[#allocation1] sm:$0xff pattern:$0x75316420]
    %v521 = vld.sshfl [vmem:[#allocation1 + $0x10] sm:$0xff pattern:$0x75316420]
    %v522 = vld.sshfl [vmem:[#allocation1 + $0x20] sm:$0xff pattern:$0x75316420]
    %v523 = vld.sshfl [vmem:[#allocation1 + $0x30] sm:$0xff pattern:$0x75316420]
    %524 = vst [vmem:[#allocation1] ss:$2 sm:$0xff] %v481
    %525 = vst [vmem:[%s506] ss:$2 sm:$0xff] %v482
    %526 = vst [vmem:[%s508] ss:$2 sm:$0xff] %v483
    %527 = vst [vmem:[%s510] ss:$2 sm:$0xff] %v484
    %528 = vst [vmem:[%s512] ss:$2 sm:$0xff] %v485
    %529 = vst [vmem:[%s514] ss:$2 sm:$0xff] %v486
    %530 = vst [vmem:[%s516] ss:$2 sm:$0xff] %v487
    %531 = vst [vmem:[%s518] ss:$2 sm:$0xff] %v488
    %v532 = vld.sshfl [vmem:[#allocation1] sm:$0xff pattern:$0x75316420]
    %v533 = vld.sshfl [vmem:[#allocation1 + $0x10] sm:$0xff pattern:$0x75316420]
    %v534 = vld.sshfl [vmem:[#allocation1 + $0x20] sm:$0xff pattern:$0x75316420]
    %v535 = vld.sshfl [vmem:[#allocation1 + $0x30] sm:$0xff pattern:$0x75316420]
    %v544 = vpack.c.bf16 %v521, %v520
    %v545 = vpack.c.bf16 %v523, %v522
    %v546 = vpack.c.bf16 %v533, %v532
    %v547 = vpack.c.bf16 %v535, %v534
    %vm548 = vcmp.eq.s32.totalorder %v134, 7
    %vm549 = vcmp.eq.s32.totalorder %v135, 7
    %v550 = vsel %vm548, 0.0, 1.0
    %v551 = vsel %vm549, 0.0, 1.0
    %v552 = vsel %vm548, -9e+08, 0.0
    %v553 = vsel %vm549, -9e+08, 0.0
    %v554 = vld [vmem:[%s11] sm:$0xf]
    %v555 = vld [vmem:[%s11 + $0x4] sm:$0xf]
    %v556 = vpack.c.bf16 %v131, %v130
    %v557 = vld [vmem:[%s13] sm:$0x1]
    %v559 = vperm.slane %v557, 0
    %v563 = vunpack.c.l.b16 %v554
    %v564 = vunpack.c.l.b16 %v555
    %v565 = vpack.c.b16 %v564, %v563
    %vm567 = vcmask 130048
    %v569 = vsel %vm567, %v556, 0
    %571 = vmatpush.bf16.msra.mxu0 0
    %572 = vmatpush.bf16.msra.mxu0 0
    %573 = vmatpush.bf16.msra.mxu0 0
    %574 = vmatpush.bf16.msra.mxu0 0
    %575 = vmatpush.bf16.msra.mxu0 0
    %576 = vmatpush.bf16.msra.mxu0 0
    %577 = vmatpush.bf16.msra.mxu0 0
    %578 = vmatpush.bf16.msra.mxu0 %v565
    %579 = vmatmul.bf16.gmra.mxu0 %v569
    %v580 = vpop.f32.mrf.mxu0
    %v581 = vadd.f32 %v559, %v580
    %v582 = vpop.f32.mrf.mxu0
    %v583 = vadd.f32 %v559, %v582
    %584 = vdwg.mxu0
    %vm585 = vcmp.gt.f32.partialorder %v581, 0.0
    %vm586 = vcmp.gt.f32.partialorder %v583, 0.0
    %v587 = vmul.f32 %v581, 0.01
    %v588 = vmul.f32 %v583, 0.01
    %v589 = vsel %vm585, %v581, %v587
    %v590 = vsel %vm586, %v583, %v588
    %v592 = vsel %vm567, %v341, 0
    %v595 = vsel %vm567, %v342, 0
    %v598 = vsel %vm567, %v343, 0
    %v601 = vsel %vm567, %v344, 0
    %603 = vmatpush.bf16.msra.mxu0 0
    %604 = vmatpush.bf16.msra.mxu0 0
    %605 = vmatpush.bf16.msra.mxu0 0
    %606 = vmatpush.bf16.msra.mxu0 0
    %607 = vmatpush.bf16.msra.mxu0 0
    %608 = vmatpush.bf16.msra.mxu0 0
    %609 = vmatpush.bf16.msra.mxu0 0
    %610 = vmatpush.bf16.msra.mxu0 %v556
    %611 = vmatmul.bf16.gmra.mxu0 %v592
    %v612 = vpop.f32.mrf.mxu0
    %v613 = vadd.f32 0.0, %v612
    %v614 = vpop.f32.mrf.mxu0
    %v615 = vadd.f32 0.0, %v614
    %616 = vmatmul.bf16.gmra.mxu0 %v595
    %v617 = vpop.f32.mrf.mxu0
    %v618 = vadd.f32 0.0, %v617
    %v619 = vpop.f32.mrf.mxu0
    %v620 = vadd.f32 0.0, %v619
    %621 = vmatmul.bf16.gmra.mxu0 %v598
    %v622 = vpop.f32.mrf.mxu0
    %v623 = vadd.f32 0.0, %v622
    %v624 = vpop.f32.mrf.mxu0
    %v625 = vadd.f32 0.0, %v624
    %626 = vmatmul.bf16.gmra.mxu0 %v601
    %v627 = vpop.f32.mrf.mxu0
    %v628 = vadd.f32 0.0, %v627
    %v629 = vpop.f32.mrf.mxu0
    %v630 = vadd.f32 0.0, %v629
    %631 = vdwg.mxu0
    %v632 = vpack.c.bf16 %v133, %v132
    %v634 = vsel %vm567, %v544, 0
    %v637 = vsel %vm567, %v545, 0
    %v640 = vsel %vm567, %v546, 0
    %v643 = vsel %vm567, %v547, 0
    %645 = vmatpush.bf16.msra.mxu0 0
    %646 = vmatpush.bf16.msra.mxu0 0
    %647 = vmatpush.bf16.msra.mxu0 0
    %648 = vmatpush.bf16.msra.mxu0 0
    %649 = vmatpush.bf16.msra.mxu0 0
    %650 = vmatpush.bf16.msra.mxu0 0
    %651 = vmatpush.bf16.msra.mxu0 0
    %652 = vmatpush.bf16.msra.mxu0 %v632
    %653 = vmatmul.bf16.gmra.mxu0 %v634
    %v654 = vpop.f32.mrf.mxu0
    %v655 = vadd.f32 0.0, %v654
    %v656 = vpop.f32.mrf.mxu0
    %v657 = vadd.f32 0.0, %v656
    %658 = vmatmul.bf16.gmra.mxu0 %v637
    %v659 = vpop.f32.mrf.mxu0
    %v660 = vadd.f32 0.0, %v659
    %v661 = vpop.f32.mrf.mxu0
    %v662 = vadd.f32 0.0, %v661
    %663 = vmatmul.bf16.gmra.mxu0 %v640
    %v664 = vpop.f32.mrf.mxu0
    %v665 = vadd.f32 0.0, %v664
    %v666 = vpop.f32.mrf.mxu0
    %v667 = vadd.f32 0.0, %v666
    %668 = vmatmul.bf16.gmra.mxu0 %v643
    %v669 = vpop.f32.mrf.mxu0
    %v670 = vadd.f32 0.0, %v669
    %v671 = vpop.f32.mrf.mxu0
    %v672 = vadd.f32 0.0, %v671
    %673 = vdwg.mxu0
    %v674 = vld [vmem:[%s15] sm:$0xf]
    %v675 = vld [vmem:[%s15 + $0x4] sm:$0xf]
    %v676 = vpack.c.bf16 %v615, %v613
    %v677 = vpack.c.bf16 %v620, %v618
    %v678 = vpack.c.bf16 %v625, %v623
    %v679 = vpack.c.bf16 %v630, %v628
    %v680 = vld [vmem:[%s17] sm:$0xf]
    %v681 = vpack.c.bf16 %v657, %v655
    %v682 = vpack.c.bf16 %v662, %v660
    %v683 = vpack.c.bf16 %v667, %v665
    %v684 = vpack.c.bf16 %v672, %v670
    %vm685 = vcmask 64512
    %v687 = vsel %vm685, %v681, 0
    %v690 = vsel %vm685, %v682, 0
    %v693 = vsel %vm685, %v683, 0
    %v696 = vsel %vm685, %v684, 0
    %vm698 = vcmask 1043456
    %v700 = vsel %vm698, %v680, 0
    %702 = vmatpush.bf16.msra.mxu0 0
    %703 = vmatpush.bf16.msra.mxu0 0
    %704 = vmatpush.bf16.msra.mxu0 0
    %705 = vmatpush.bf16.msra.mxu0 0
    %706 = vmatpush.bf16.msra.mxu0 0
    %707 = vmatpush.bf16.msra.mxu0 0
    %708 = vmatpush.bf16.msra.mxu0 0
    %709 = vmatpush.bf16.msra.mxu0 %v700
    %710 = vmatmul.bf16.gmra.mxu0 %v687
    %v711 = vpop.f32.mrf.mxu0
    %v712 = vadd.f32 0.0, %v711
    %v713 = vpop.f32.mrf.mxu0
    %v714 = vadd.f32 0.0, %v713
    %715 = vmatmul.bf16.gmra.mxu0 %v690
    %v716 = vpop.f32.mrf.mxu0
    %v717 = vadd.f32 0.0, %v716
    %v718 = vpop.f32.mrf.mxu0
    %v719 = vadd.f32 0.0, %v718
    %720 = vmatmul.bf16.gmra.mxu0 %v693
    %v721 = vpop.f32.mrf.mxu0
    %v722 = vadd.f32 0.0, %v721
    %v723 = vpop.f32.mrf.mxu0
    %v724 = vadd.f32 0.0, %v723
    %725 = vmatmul.bf16.gmra.mxu0 %v696
    %v726 = vpop.f32.mrf.mxu0
    %v727 = vadd.f32 0.0, %v726
    %v728 = vpop.f32.mrf.mxu0
    %v729 = vadd.f32 0.0, %v728
    %730 = vdwg.mxu0
    %v733 = vunpack.c.l.b16 %v674
    %v734 = vunpack.c.l.b16 %v675
    %v735 = vpack.c.b16 %v734, %v733
    %v738 = vsel %vm567, %v676, 0
    %v741 = vsel %vm567, %v677, 0
    %v744 = vsel %vm567, %v678, 0
    %v747 = vsel %vm567, %v679, 0
    %749 = vmatpush.bf16.msra.mxu0 0
    %750 = vmatpush.bf16.msra.mxu0 0
    %751 = vmatpush.bf16.msra.mxu0 0
    %752 = vmatpush.bf16.msra.mxu0 0
    %753 = vmatpush.bf16.msra.mxu0 0
    %754 = vmatpush.bf16.msra.mxu0 0
    %755 = vmatpush.bf16.msra.mxu0 0
    %756 = vmatpush.bf16.msra.mxu0 %v735
    %757 = vmatmul.bf16.gmra.mxu0 %v738
    %v758 = vpop.f32.mrf.mxu0
    %v759 = vadd.f32 %v712, %v758
    %v760 = vpop.f32.mrf.mxu0
    %v761 = vadd.f32 %v714, %v760
    %762 = vmatmul.bf16.gmra.mxu0 %v741
    %v763 = vpop.f32.mrf.mxu0
    %v764 = vadd.f32 %v717, %v763
    %v765 = vpop.f32.mrf.mxu0
    %v766 = vadd.f32 %v719, %v765
    %767 = vmatmul.bf16.gmra.mxu0 %v744
    %v768 = vpop.f32.mrf.mxu0
    %v769 = vadd.f32 %v722, %v768
    %v770 = vpop.f32.mrf.mxu0
    %v771 = vadd.f32 %v724, %v770
    %772 = vmatmul.bf16.gmra.mxu0 %v747
    %v773 = vpop.f32.mrf.mxu0
    %v774 = vadd.f32 %v727, %v773
    %v775 = vpop.f32.mrf.mxu0
    %v776 = vadd.f32 %v729, %v775
    %777 = vdwg.mxu0
    %v778 = vld [vmem:[%s19] sm:$0x1]
    %v780 = vperm.slane %v778, 0
    %v782 = vadd.f32 %v759, %v780
    %v783 = vadd.f32 %v761, %v780
    %v784 = vadd.f32 %v764, %v780
    %v785 = vadd.f32 %v766, %v780
    %v786 = vadd.f32 %v769, %v780
    %v787 = vadd.f32 %v771, %v780
    %v788 = vadd.f32 %v774, %v780
    %v789 = vadd.f32 %v776, %v780
    %vm790 = vcmp.gt.f32.partialorder %v782, 0.0
    %vm791 = vcmp.gt.f32.partialorder %v783, 0.0
    %vm792 = vcmp.gt.f32.partialorder %v784, 0.0
    %vm793 = vcmp.gt.f32.partialorder %v785, 0.0
    %vm794 = vcmp.gt.f32.partialorder %v786, 0.0
    %vm795 = vcmp.gt.f32.partialorder %v787, 0.0
    %vm796 = vcmp.gt.f32.partialorder %v788, 0.0
    %vm797 = vcmp.gt.f32.partialorder %v789, 0.0
    %v798 = vmul.f32 %v782, 0.01
    %v799 = vmul.f32 %v783, 0.01
    %v800 = vmul.f32 %v784, 0.01
    %v801 = vmul.f32 %v785, 0.01
    %v802 = vmul.f32 %v786, 0.01
    %v803 = vmul.f32 %v787, 0.01
    %v804 = vmul.f32 %v788, 0.01
    %v805 = vmul.f32 %v789, 0.01
    %v806 = vsel %vm790, %v782, %v798
    %v807 = vsel %vm791, %v783, %v799
    %v808 = vsel %vm792, %v784, %v800
    %v809 = vsel %vm793, %v785, %v801
    %v810 = vsel %vm794, %v786, %v802
    %v811 = vsel %vm795, %v787, %v803
    %v812 = vsel %vm796, %v788, %v804
    %v813 = vsel %vm797, %v789, %v805
    %v814 = vld [vmem:[%s21] sm:$0x1]
    %v815 = vld [vmem:[%s23] sm:$0x1]
    %v816 = vld [vmem:[%s25] sm:$0x1]
    %v825 = vrot.slane %v806, 4
    %v826 = vrot.slane %v807, 4
    %v827 = vrot.slane %v808, 4
    %v828 = vrot.slane %v809, 4
    %v829 = vrot.slane %v810, 4
    %v830 = vrot.slane %v811, 4
    %v831 = vrot.slane %v812, 4
    %v832 = vrot.slane %v813, 4
    %v841 = vperm.slane %v814, 0
    %v842 = vmul.f32 %v589, %v841
    %v843 = vmul.f32 %v590, %v841
    %844 = vadd.xlane.f32.xlu0 %v842
    %v845 = vpop.xlane.xlu0 %844
    %846 = vadd.xlane.f32.xlu0 %v843
    %v847 = vpop.xlane.xlu0 %846
    %v848 = vperm.slane %v815, 0
    %v849 = vmul.f32 %v806, %v848
    %v850 = vmul.f32 %v825, %v848
    %v851 = vmul.f32 %v807, %v848
    %v852 = vmul.f32 %v826, %v848
    %v853 = vmul.f32 %v808, %v848
    %v854 = vmul.f32 %v827, %v848
    %v855 = vmul.f32 %v809, %v848
    %v856 = vmul.f32 %v828, %v848
    %v857 = vmul.f32 %v810, %v848
    %v858 = vmul.f32 %v829, %v848
    %v859 = vmul.f32 %v811, %v848
    %v860 = vmul.f32 %v830, %v848
    %v861 = vmul.f32 %v812, %v848
    %v862 = vmul.f32 %v831, %v848
    %v863 = vmul.f32 %v813, %v848
    %v864 = vmul.f32 %v832, %v848
    %v865 = vsel %vm698, %v849, 0.0
    %866 = vadd.xlane.f32.xlu0 %v865
    %v867 = vpop.xlane.xlu0 %866
    %v868 = vsel %vm698, %v850, 0.0
    %869 = vadd.xlane.f32.xlu0 %v868
    %v870 = vpop.xlane.xlu0 %869
    %v871 = vsel %vm698, %v851, 0.0
    %872 = vadd.xlane.f32.xlu0 %v871
    %v873 = vpop.xlane.xlu0 %872
    %v874 = vsel %vm698, %v852, 0.0
    %875 = vadd.xlane.f32.xlu0 %v874
    %v876 = vpop.xlane.xlu0 %875
    %v877 = vsel %vm698, %v853, 0.0
    %878 = vadd.xlane.f32.xlu0 %v877
    %v879 = vpop.xlane.xlu0 %878
    %v880 = vsel %vm698, %v854, 0.0
    %881 = vadd.xlane.f32.xlu0 %v880
    %v882 = vpop.xlane.xlu0 %881
    %v883 = vsel %vm698, %v855, 0.0
    %884 = vadd.xlane.f32.xlu0 %v883
    %v885 = vpop.xlane.xlu0 %884
    %v886 = vsel %vm698, %v856, 0.0
    %887 = vadd.xlane.f32.xlu0 %v886
    %v888 = vpop.xlane.xlu0 %887
    %v889 = vsel %vm698, %v857, 0.0
    %890 = vadd.xlane.f32.xlu0 %v889
    %v891 = vpop.xlane.xlu0 %890
    %v892 = vsel %vm698, %v858, 0.0
    %893 = vadd.xlane.f32.xlu0 %v892
    %v894 = vpop.xlane.xlu0 %893
    %v895 = vsel %vm698, %v859, 0.0
    %896 = vadd.xlane.f32.xlu0 %v895
    %v897 = vpop.xlane.xlu0 %896
    %v898 = vsel %vm698, %v860, 0.0
    %899 = vadd.xlane.f32.xlu0 %v898
    %v900 = vpop.xlane.xlu0 %899
    %v901 = vsel %vm698, %v861, 0.0
    %902 = vadd.xlane.f32.xlu0 %v901
    %v903 = vpop.xlane.xlu0 %902
    %v904 = vsel %vm698, %v862, 0.0
    %905 = vadd.xlane.f32.xlu0 %v904
    %v906 = vpop.xlane.xlu0 %905
    %v907 = vsel %vm698, %v863, 0.0
    %908 = vadd.xlane.f32.xlu0 %v907
    %v909 = vpop.xlane.xlu0 %908
    %v910 = vsel %vm698, %v864, 0.0
    %911 = vadd.xlane.f32.xlu0 %v910
    %v912 = vpop.xlane.xlu0 %911
    %v929 = vperm.slane %v867, %v141
    %v930 = vperm.slane %v870, %v141
    %v931 = vperm.slane %v873, %v141
    %v932 = vperm.slane %v876, %v141
    %v933 = vperm.slane %v879, %v141
    %v934 = vperm.slane %v882, %v141
    %v935 = vperm.slane %v885, %v141
    %v936 = vperm.slane %v888, %v141
    %v937 = vperm.slane %v891, %v141
    %v938 = vperm.slane %v894, %v141
    %v939 = vperm.slane %v897, %v141
    %v940 = vperm.slane %v900, %v141
    %v941 = vperm.slane %v903, %v141
    %v942 = vperm.slane %v906, %v141
    %v943 = vperm.slane %v909, %v141
    %v944 = vperm.slane %v912, %v141
    %vm945 = vcmask 1041409
    %v946 = vsel %vm945, %v930, %v929
    %vm947 = vcmask 1042434
    %v948 = vsel %vm947, %v931, %v946
    %vm949 = vcmask 1043459
    %v950 = vsel %vm949, %v932, %v948
    %vm951 = vcmask 1044484
    %v952 = vsel %vm951, %v933, %v950
    %vm953 = vcmask 1045509
    %v954 = vsel %vm953, %v934, %v952
    %vm955 = vcmask 1046534
    %v956 = vsel %vm955, %v935, %v954
    %vm957 = vcmask 1047559
    %v958 = vsel %vm957, %v936, %v956
    %v959 = vsel %vm945, %v938, %v937
    %v960 = vsel %vm947, %v939, %v959
    %v961 = vsel %vm949, %v940, %v960
    %v962 = vsel %vm951, %v941, %v961
    %v963 = vsel %vm953, %v942, %v962
    %v964 = vsel %vm955, %v943, %v963
    %v965 = vsel %vm957, %v944, %v964
    %v968 = vadd.f32 %v845, %v958
    %v969 = vadd.f32 %v847, %v965
    %s971 = vtos %v816
    %v972 = vstv %s971
    %v974 = vadd.f32 %v968, %v972
    %v975 = vadd.f32 %v969, %v972
    %vm976 = vcmp.gt.f32.partialorder %v974, 0.0
    %vm977 = vcmp.gt.f32.partialorder %v975, 0.0
    %v978 = vmul.f32 %v974, 0.01
    %v979 = vmul.f32 %v975, 0.01
    %v980 = vsel %vm976, %v974, %v978
    %v981 = vsel %vm977, %v975, %v979
    %v982 = vadd.f32 %v980, %v552
    %v983 = vadd.f32 %v981, %v553
    %vm984 = vcmask 31744
    %v985 = vsel %vm984, %v982, -inf
    %986 = vmax.xlane.f32.xlu0 %v985
    %v987 = vpop.xlane.xlu0 %986
    %v988 = vsel %vm984, %v983, -inf
    %989 = vmax.xlane.f32.xlu0 %v988
    %v990 = vpop.xlane.xlu0 %989
    %v991 = vsub.f32 %v982, %v987
    %v992 = vsub.f32 %v983, %v990
    %v993 = vmul.f32 %v991, 1.442695
    %v994 = vpow.pop %v993
    %v995 = vmul.f32 %v992, 1.442695
    %v996 = vpow.pop %v995
    %v997 = vsel %vm984, %v994, 0.0
    %998 = vadd.xlane.f32.xlu0 %v997
    %v999 = vpop.xlane.xlu0 %998
    %v1000 = vsel %vm984, %v996, 0.0
    %1001 = vadd.xlane.f32.xlu0 %v1000
    %v1002 = vpop.xlane.xlu0 %1001
    %v1003 = vrcp.pop %v999
    %v1004 = vrcp.pop %v1002
    %v1005 = vmul.f32 %v994, %v1003
    %v1006 = vmul.f32 %v996, %v1004
    %v1007 = vmul.f32 %v1005, %v550
    %v1008 = vmul.f32 %v1006, %v551
    %v1009 = vld [vmem:[%s27] sm:$0xf]
    %v1010 = vld [vmem:[%s27 + $0x4] sm:$0xf]
    %v1011 = vld [vmem:[%s27 + $0x8] sm:$0xf]
    %v1012 = vld [vmem:[%s27 + $0xc] sm:$0xf]
    %v1013 = vld [vmem:[%s27 + $0x10] sm:$0xf]
    %v1014 = vld [vmem:[%s27 + $0x14] sm:$0xf]
    %v1015 = vld [vmem:[%s27 + $0x18] sm:$0xf]
    %v1016 = vld [vmem:[%s27 + $0x1c] sm:$0xf]
    %v1017 = vld [vmem:[%s27 + $0x20] sm:$0xf]
    %v1018 = vld [vmem:[%s27 + $0x24] sm:$0xf]
    %v1019 = vld [vmem:[%s27 + $0x28] sm:$0xf]
    %v1020 = vld [vmem:[%s27 + $0x2c] sm:$0xf]
    %v1021 = vld [vmem:[%s27 + $0x30] sm:$0xf]
    %v1022 = vld [vmem:[%s27 + $0x34] sm:$0xf]
    %v1023 = vld [vmem:[%s27 + $0x38] sm:$0xf]
    %v1024 = vld [vmem:[%s27 + $0x3c] sm:$0xf]
    %v1025 = vpack.c.bf16 %v807, %v806
    %v1026 = vpack.c.bf16 %v809, %v808
    %v1027 = vpack.c.bf16 %v811, %v810
    %v1028 = vpack.c.bf16 %v813, %v812
    %v1029 = vld [vmem:[%s29] sm:$0x1]
    %v1031 = vperm.slane %v1029, 0
    %v1049 = vunpack.c.l.b16 %v1009
    %v1050 = vunpack.c.l.b16 %v1010
    %v1051 = vunpack.c.l.b16 %v1011
    %v1052 = vunpack.c.l.b16 %v1012
    %v1053 = vunpack.c.l.b16 %v1013
    %v1054 = vunpack.c.l.b16 %v1014
    %v1055 = vunpack.c.l.b16 %v1015
    %v1056 = vunpack.c.l.b16 %v1016
    %v1057 = vunpack.c.l.b16 %v1017
    %v1058 = vunpack.c.l.b16 %v1018
    %v1059 = vunpack.c.l.b16 %v1019
    %v1060 = vunpack.c.l.b16 %v1020
    %v1061 = vunpack.c.l.b16 %v1021
    %v1062 = vunpack.c.l.b16 %v1022
    %v1063 = vunpack.c.l.b16 %v1023
    %v1064 = vunpack.c.l.b16 %v1024
    %v1065 = vpack.c.b16 %v1050, %v1049
    %v1066 = vpack.c.b16 %v1052, %v1051
    %v1067 = vpack.c.b16 %v1054, %v1053
    %v1068 = vpack.c.b16 %v1056, %v1055
    %v1069 = vpack.c.b16 %v1058, %v1057
    %v1070 = vpack.c.b16 %v1060, %v1059
    %v1071 = vpack.c.b16 %v1062, %v1061
    %v1072 = vpack.c.b16 %v1064, %v1063
    %1081 = vmatpush.bf16.msra.mxu0 %v1072
    %1082 = vmatpush.bf16.msra.mxu0 %v1071
    %1083 = vmatpush.bf16.msra.mxu0 %v1070
    %1084 = vmatpush.bf16.msra.mxu0 %v1069
    %1085 = vmatpush.bf16.msra.mxu0 %v1068
    %1086 = vmatpush.bf16.msra.mxu0 %v1067
    %1087 = vmatpush.bf16.msra.mxu0 %v1066
    %1088 = vmatpush.bf16.msra.mxu0 %v1065
    %1089 = vmatmul.bf16.gmra.mxu0 %v1025
    %v1090 = vpop.f32.mrf.mxu0
    %v1091 = vadd.f32 %v1031, %v1090
    %v1092 = vpop.f32.mrf.mxu0
    %v1093 = vadd.f32 %v1031, %v1092
    %1094 = vmatmul.bf16.gmra.mxu0 %v1026
    %v1095 = vpop.f32.mrf.mxu0
    %v1096 = vadd.f32 %v1031, %v1095
    %v1097 = vpop.f32.mrf.mxu0
    %v1098 = vadd.f32 %v1031, %v1097
    %1099 = vmatmul.bf16.gmra.mxu0 %v1027
    %v1100 = vpop.f32.mrf.mxu0
    %v1101 = vadd.f32 %v1031, %v1100
    %v1102 = vpop.f32.mrf.mxu0
    %v1103 = vadd.f32 %v1031, %v1102
    %1104 = vmatmul.bf16.gmra.mxu0 %v1028
    %v1105 = vpop.f32.mrf.mxu0
    %v1106 = vadd.f32 %v1031, %v1105
    %v1107 = vpop.f32.mrf.mxu0
    %v1108 = vadd.f32 %v1031, %v1107
    %1109 = vdwg.mxu0
    %v1118 = vrot.slane %v1091, 4
    %v1119 = vrot.slane %v1093, 4
    %v1120 = vrot.slane %v1096, 4
    %v1121 = vrot.slane %v1098, 4
    %v1122 = vrot.slane %v1101, 4
    %v1123 = vrot.slane %v1103, 4
    %v1124 = vrot.slane %v1106, 4
    %v1125 = vrot.slane %v1108, 4
    %v1134 = vperm.slane %v1007, 0
    %v1135 = vlaneseq
    %v1136 = vshrl.u32 %v1135, 7
    %1138 = vset.pattern.permute.xlu0 %v1136
    %1139 = vperm.xlu0 %1138, %v1134
    %v1140 = vpop.permute.xlu0 %1139
    %v1141 = vperm.slane %v1007, 1
    %v1142 = vlaneseq
    %v1143 = vshrl.u32 %v1142, 7
    %1145 = vset.pattern.permute.xlu0 %v1143
    %1146 = vperm.xlu0 %1145, %v1141
    %v1147 = vpop.permute.xlu0 %1146
    %v1148 = vperm.slane %v1007, 2
    %v1149 = vlaneseq
    %v1150 = vshrl.u32 %v1149, 7
    %1152 = vset.pattern.permute.xlu0 %v1150
    %1153 = vperm.xlu0 %1152, %v1148
    %v1154 = vpop.permute.xlu0 %1153
    %v1155 = vperm.slane %v1007, 3
    %v1156 = vlaneseq
    %v1157 = vshrl.u32 %v1156, 7
    %1159 = vset.pattern.permute.xlu0 %v1157
    %1160 = vperm.xlu0 %1159, %v1155
    %v1161 = vpop.permute.xlu0 %1160
    %v1162 = vperm.slane %v1007, 4
    %v1163 = vlaneseq
    %v1164 = vshrl.u32 %v1163, 7
    %1166 = vset.pattern.permute.xlu0 %v1164
    %1167 = vperm.xlu0 %1166, %v1162
    %v1168 = vpop.permute.xlu0 %1167
    %v1169 = vperm.slane %v1007, 5
    %v1170 = vlaneseq
    %v1171 = vshrl.u32 %v1170, 7
    %1173 = vset.pattern.permute.xlu0 %v1171
    %1174 = vperm.xlu0 %1173, %v1169
    %v1175 = vpop.permute.xlu0 %1174
    %v1176 = vperm.slane %v1007, 6
    %v1177 = vlaneseq
    %v1178 = vshrl.u32 %v1177, 7
    %1180 = vset.pattern.permute.xlu0 %v1178
    %1181 = vperm.xlu0 %1180, %v1176
    %v1182 = vpop.permute.xlu0 %1181
    %v1183 = vperm.slane %v1007, 7
    %v1184 = vlaneseq
    %v1185 = vshrl.u32 %v1184, 7
    %1187 = vset.pattern.permute.xlu0 %v1185
    %1188 = vperm.xlu0 %1187, %v1183
    %v1189 = vpop.permute.xlu0 %1188
    %v1190 = vperm.slane %v1008, 0
    %v1191 = vlaneseq
    %v1192 = vshrl.u32 %v1191, 7
    %1194 = vset.pattern.permute.xlu0 %v1192
    %1195 = vperm.xlu0 %1194, %v1190
    %v1196 = vpop.permute.xlu0 %1195
    %v1197 = vperm.slane %v1008, 1
    %v1198 = vlaneseq
    %v1199 = vshrl.u32 %v1198, 7
    %1201 = vset.pattern.permute.xlu0 %v1199
    %1202 = vperm.xlu0 %1201, %v1197
    %v1203 = vpop.permute.xlu0 %1202
    %v1204 = vperm.slane %v1008, 2
    %v1205 = vlaneseq
    %v1206 = vshrl.u32 %v1205, 7
    %1208 = vset.pattern.permute.xlu0 %v1206
    %1209 = vperm.xlu0 %1208, %v1204
    %v1210 = vpop.permute.xlu0 %1209
    %v1211 = vperm.slane %v1008, 3
    %v1212 = vlaneseq
    %v1213 = vshrl.u32 %v1212, 7
    %1215 = vset.pattern.permute.xlu0 %v1213
    %1216 = vperm.xlu0 %1215, %v1211
    %v1217 = vpop.permute.xlu0 %1216
    %v1218 = vperm.slane %v1008, 4
    %v1219 = vlaneseq
    %v1220 = vshrl.u32 %v1219, 7
    %1222 = vset.pattern.permute.xlu0 %v1220
    %1223 = vperm.xlu0 %1222, %v1218
    %v1224 = vpop.permute.xlu0 %1223
    %v1225 = vperm.slane %v1008, 5
    %v1226 = vlaneseq
    %v1227 = vshrl.u32 %v1226, 7
    %1229 = vset.pattern.permute.xlu0 %v1227
    %1230 = vperm.xlu0 %1229, %v1225
    %v1231 = vpop.permute.xlu0 %1230
    %v1232 = vperm.slane %v1008, 6
    %v1233 = vlaneseq
    %v1234 = vshrl.u32 %v1233, 7
    %1236 = vset.pattern.permute.xlu0 %v1234
    %1237 = vperm.xlu0 %1236, %v1232
    %v1238 = vpop.permute.xlu0 %1237
    %v1239 = vperm.slane %v1008, 7
    %v1240 = vlaneseq
    %v1241 = vshrl.u32 %v1240, 7
    %1243 = vset.pattern.permute.xlu0 %v1241
    %1244 = vperm.xlu0 %1243, %v1239
    %v1245 = vpop.permute.xlu0 %1244
    %v1246 = vmul.f32 %v1140, %v1091
    %v1247 = vmul.f32 %v1147, %v1118
    %v1248 = vmul.f32 %v1154, %v1093
    %v1249 = vmul.f32 %v1161, %v1119
    %v1250 = vmul.f32 %v1168, %v1096
    %v1251 = vmul.f32 %v1175, %v1120
    %v1252 = vmul.f32 %v1182, %v1098
    %v1253 = vmul.f32 %v1189, %v1121
    %v1254 = vmul.f32 %v1196, %v1101
    %v1255 = vmul.f32 %v1203, %v1122
    %v1256 = vmul.f32 %v1210, %v1103
    %v1257 = vmul.f32 %v1217, %v1123
    %v1258 = vmul.f32 %v1224, %v1106
    %v1259 = vmul.f32 %v1231, %v1124
    %v1260 = vmul.f32 %v1238, %v1108
    %v1261 = vmul.f32 %v1245, %v1125
    %v1262 = vsel %vm698, %v1246, 0.0
    %v1263 = vrot.slane %v1262, 4
    %v1264 = vadd.f32 %v1262, %v1263
    %v1265 = vrot.slane %v1264, 2
    %v1266 = vadd.f32 %v1264, %v1265
    %v1267 = vrot.slane %v1266, 1
    %v1268 = vadd.f32 %v1266, %v1267
    %v1269 = vsel %vm698, %v1247, 0.0
    %v1270 = vrot.slane %v1269, 4
    %v1271 = vadd.f32 %v1269, %v1270
    %v1272 = vrot.slane %v1271, 2
    %v1273 = vadd.f32 %v1271, %v1272
    %v1274 = vrot.slane %v1273, 1
    %v1275 = vadd.f32 %v1273, %v1274
    %v1276 = vsel %vm698, %v1248, 0.0
    %v1277 = vrot.slane %v1276, 4
    %v1278 = vadd.f32 %v1276, %v1277
    %v1279 = vrot.slane %v1278, 2
    %v1280 = vadd.f32 %v1278, %v1279
    %v1281 = vrot.slane %v1280, 1
    %v1282 = vadd.f32 %v1280, %v1281
    %v1283 = vsel %vm698, %v1249, 0.0
    %v1284 = vrot.slane %v1283, 4
    %v1285 = vadd.f32 %v1283, %v1284
    %v1286 = vrot.slane %v1285, 2
    %v1287 = vadd.f32 %v1285, %v1286
    %v1288 = vrot.slane %v1287, 1
    %v1289 = vadd.f32 %v1287, %v1288
    %v1290 = vsel %vm698, %v1250, 0.0
    %v1291 = vrot.slane %v1290, 4
    %v1292 = vadd.f32 %v1290, %v1291
    %v1293 = vrot.slane %v1292, 2
    %v1294 = vadd.f32 %v1292, %v1293
    %v1295 = vrot.slane %v1294, 1
    %v1296 = vadd.f32 %v1294, %v1295
    %v1297 = vsel %vm698, %v1251, 0.0
    %v1298 = vrot.slane %v1297, 4
    %v1299 = vadd.f32 %v1297, %v1298
    %v1300 = vrot.slane %v1299, 2
    %v1301 = vadd.f32 %v1299, %v1300
    %v1302 = vrot.slane %v1301, 1
    %v1303 = vadd.f32 %v1301, %v1302
    %v1304 = vsel %vm698, %v1252, 0.0
    %v1305 = vrot.slane %v1304, 4
    %v1306 = vadd.f32 %v1304, %v1305
    %v1307 = vrot.slane %v1306, 2
    %v1308 = vadd.f32 %v1306, %v1307
    %v1309 = vrot.slane %v1308, 1
    %v1310 = vadd.f32 %v1308, %v1309
    %v1311 = vsel %vm698, %v1253, 0.0
    %v1312 = vrot.slane %v1311, 4
    %v1313 = vadd.f32 %v1311, %v1312
    %v1314 = vrot.slane %v1313, 2
    %v1315 = vadd.f32 %v1313, %v1314
    %v1316 = vrot.slane %v1315, 1
    %v1317 = vadd.f32 %v1315, %v1316
    %v1318 = vsel %vm698, %v1254, 0.0
    %v1319 = vrot.slane %v1318, 4
    %v1320 = vadd.f32 %v1318, %v1319
    %v1321 = vrot.slane %v1320, 2
    %v1322 = vadd.f32 %v1320, %v1321
    %v1323 = vrot.slane %v1322, 1
    %v1324 = vadd.f32 %v1322, %v1323
    %v1325 = vsel %vm698, %v1255, 0.0
    %v1326 = vrot.slane %v1325, 4
    %v1327 = vadd.f32 %v1325, %v1326
    %v1328 = vrot.slane %v1327, 2
    %v1329 = vadd.f32 %v1327, %v1328
    %v1330 = vrot.slane %v1329, 1
    %v1331 = vadd.f32 %v1329, %v1330
    %v1332 = vsel %vm698, %v1256, 0.0
    %v1333 = vrot.slane %v1332, 4
    %v1334 = vadd.f32 %v1332, %v1333
    %v1335 = vrot.slane %v1334, 2
    %v1336 = vadd.f32 %v1334, %v1335
    %v1337 = vrot.slane %v1336, 1
    %v1338 = vadd.f32 %v1336, %v1337
    %v1339 = vsel %vm698, %v1257, 0.0
    %v1340 = vrot.slane %v1339, 4
    %v1341 = vadd.f32 %v1339, %v1340
    %v1342 = vrot.slane %v1341, 2
    %v1343 = vadd.f32 %v1341, %v1342
    %v1344 = vrot.slane %v1343, 1
    %v1345 = vadd.f32 %v1343, %v1344
    %v1346 = vsel %vm698, %v1258, 0.0
    %v1347 = vrot.slane %v1346, 4
    %v1348 = vadd.f32 %v1346, %v1347
    %v1349 = vrot.slane %v1348, 2
    %v1350 = vadd.f32 %v1348, %v1349
    %v1351 = vrot.slane %v1350, 1
    %v1352 = vadd.f32 %v1350, %v1351
    %v1353 = vsel %vm698, %v1259, 0.0
    %v1354 = vrot.slane %v1353, 4
    %v1355 = vadd.f32 %v1353, %v1354
    %v1356 = vrot.slane %v1355, 2
    %v1357 = vadd.f32 %v1355, %v1356
    %v1358 = vrot.slane %v1357, 1
    %v1359 = vadd.f32 %v1357, %v1358
    %v1360 = vsel %vm698, %v1260, 0.0
    %v1361 = vrot.slane %v1360, 4
    %v1362 = vadd.f32 %v1360, %v1361
    %v1363 = vrot.slane %v1362, 2
    %v1364 = vadd.f32 %v1362, %v1363
    %v1365 = vrot.slane %v1364, 1
    %v1366 = vadd.f32 %v1364, %v1365
    %v1367 = vsel %vm698, %v1261, 0.0
    %v1368 = vrot.slane %v1367, 4
    %v1369 = vadd.f32 %v1367, %v1368
    %v1370 = vrot.slane %v1369, 2
    %v1371 = vadd.f32 %v1369, %v1370
    %v1372 = vrot.slane %v1371, 1
    %v1373 = vadd.f32 %v1371, %v1372
    %vm1374 = vcmp.gt.f32.partialorder %v1268, 0.0
    %vm1375 = vcmp.gt.f32.partialorder %v1275, 0.0
    %vm1376 = vcmp.gt.f32.partialorder %v1282, 0.0
    %vm1377 = vcmp.gt.f32.partialorder %v1289, 0.0
    %vm1378 = vcmp.gt.f32.partialorder %v1296, 0.0
    %vm1379 = vcmp.gt.f32.partialorder %v1303, 0.0
    %vm1380 = vcmp.gt.f32.partialorder %v1310, 0.0
    %vm1381 = vcmp.gt.f32.partialorder %v1317, 0.0
    %vm1382 = vcmp.gt.f32.partialorder %v1324, 0.0
    %vm1383 = vcmp.gt.f32.partialorder %v1331, 0.0
    %vm1384 = vcmp.gt.f32.partialorder %v1338, 0.0
    %vm1385 = vcmp.gt.f32.partialorder %v1345, 0.0
    %vm1386 = vcmp.gt.f32.partialorder %v1352, 0.0
    %vm1387 = vcmp.gt.f32.partialorder %v1359, 0.0
    %vm1388 = vcmp.gt.f32.partialorder %v1366, 0.0
    %vm1389 = vcmp.gt.f32.partialorder %v1373, 0.0
    %v1390 = vmin.f32 %v1268, 0.0
    %v1391 = vmin.f32 %v1275, 0.0
    %v1392 = vmin.f32 %v1282, 0.0
    %v1393 = vmin.f32 %v1289, 0.0
    %v1394 = vmin.f32 %v1296, 0.0
    %v1395 = vmin.f32 %v1303, 0.0
    %v1396 = vmin.f32 %v1310, 0.0
    %v1397 = vmin.f32 %v1317, 0.0
    %v1398 = vmin.f32 %v1324, 0.0
    %v1399 = vmin.f32 %v1331, 0.0
    %v1400 = vmin.f32 %v1338, 0.0
    %v1401 = vmin.f32 %v1345, 0.0
    %v1402 = vmin.f32 %v1352, 0.0
    %v1403 = vmin.f32 %v1359, 0.0
    %v1404 = vmin.f32 %v1366, 0.0
    %v1405 = vmin.f32 %v1373, 0.0
    %v1406 = vmul.f32 %v1390, 1.442695
    %v1407 = vpow.pop %v1406
    %v1408 = vmul.f32 %v1391, 1.442695
    %v1409 = vpow.pop %v1408
    %v1410 = vmul.f32 %v1392, 1.442695
    %v1411 = vpow.pop %v1410
    %v1412 = vmul.f32 %v1393, 1.442695
    %v1413 = vpow.pop %v1412
    %v1414 = vmul.f32 %v1394, 1.442695
    %v1415 = vpow.pop %v1414
    %v1416 = vmul.f32 %v1395, 1.442695
    %v1417 = vpow.pop %v1416
    %v1418 = vmul.f32 %v1396, 1.442695
    %v1419 = vpow.pop %v1418
    %v1420 = vmul.f32 %v1397, 1.442695
    %v1421 = vpow.pop %v1420
    %v1422 = vmul.f32 %v1398, 1.442695
    %v1423 = vpow.pop %v1422
    %v1424 = vmul.f32 %v1399, 1.442695
    %v1425 = vpow.pop %v1424
    %v1426 = vmul.f32 %v1400, 1.442695
    %v1427 = vpow.pop %v1426
    %v1428 = vmul.f32 %v1401, 1.442695
    %v1429 = vpow.pop %v1428
    %v1430 = vmul.f32 %v1402, 1.442695
    %v1431 = vpow.pop %v1430
    %v1432 = vmul.f32 %v1403, 1.442695
    %v1433 = vpow.pop %v1432
    %v1434 = vmul.f32 %v1404, 1.442695
    %v1435 = vpow.pop %v1434
    %v1436 = vmul.f32 %v1405, 1.442695
    %v1437 = vpow.pop %v1436
    %v1438 = vsub.f32 %v1407, 1.0
    %v1439 = vsub.f32 %v1409, 1.0
    %v1440 = vsub.f32 %v1411, 1.0
    %v1441 = vsub.f32 %v1413, 1.0
    %v1442 = vsub.f32 %v1415, 1.0
    %v1443 = vsub.f32 %v1417, 1.0
    %v1444 = vsub.f32 %v1419, 1.0
    %v1445 = vsub.f32 %v1421, 1.0
    %v1446 = vsub.f32 %v1423, 1.0
    %v1447 = vsub.f32 %v1425, 1.0
    %v1448 = vsub.f32 %v1427, 1.0
    %v1449 = vsub.f32 %v1429, 1.0
    %v1450 = vsub.f32 %v1431, 1.0
    %v1451 = vsub.f32 %v1433, 1.0
    %v1452 = vsub.f32 %v1435, 1.0
    %v1453 = vsub.f32 %v1437, 1.0
    %v1454 = vsel %vm1374, %v1268, %v1438
    %v1455 = vsel %vm1375, %v1275, %v1439
    %v1456 = vsel %vm1376, %v1282, %v1440
    %v1457 = vsel %vm1377, %v1289, %v1441
    %v1458 = vsel %vm1378, %v1296, %v1442
    %v1459 = vsel %vm1379, %v1303, %v1443
    %v1460 = vsel %vm1380, %v1310, %v1444
    %v1461 = vsel %vm1381, %v1317, %v1445
    %v1462 = vsel %vm1382, %v1324, %v1446
    %v1463 = vsel %vm1383, %v1331, %v1447
    %v1464 = vsel %vm1384, %v1338, %v1448
    %v1465 = vsel %vm1385, %v1345, %v1449
    %v1466 = vsel %vm1386, %v1352, %v1450
    %v1467 = vsel %vm1387, %v1359, %v1451
    %v1468 = vsel %vm1388, %v1366, %v1452
    %v1469 = vsel %vm1389, %v1373, %v1453
    %v1470 = vld [vmem:[%s31] sm:$0xff]
    %v1471 = vld [vmem:[%s31 + $0x8] sm:$0xf]
    %v1472 = vld [vmem:[%s31 + $0xc] sm:$0xff]
    %v1473 = vld [vmem:[%s31 + $0x14] sm:$0xf]
    %v1474 = vld [vmem:[%s31 + $0x18] sm:$0xff]
    %v1475 = vld [vmem:[%s31 + $0x20] sm:$0xf]
    %v1476 = vld [vmem:[%s31 + $0x24] sm:$0xff]
    %v1477 = vld [vmem:[%s31 + $0x2c] sm:$0xf]
    %v1478 = vld [vmem:[%s31 + $0x30] sm:$0xff]
    %v1479 = vld [vmem:[%s31 + $0x38] sm:$0xf]
    %v1480 = vld [vmem:[%s31 + $0x3c] sm:$0xff]
    %v1481 = vld [vmem:[%s31 + $0x44] sm:$0xf]
    %v1482 = vld [vmem:[%s31 + $0x48] sm:$0xff]
    %v1483 = vld [vmem:[%s31 + $0x50] sm:$0xf]
    %v1484 = vld [vmem:[%s31 + $0x54] sm:$0xff]
    %v1485 = vld [vmem:[%s31 + $0x5c] sm:$0xf]
    %v1486 = vld [vmem:[%s31 + $0x60] sm:$0xff]
    %v1487 = vld [vmem:[%s31 + $0x68] sm:$0xf]
    %v1488 = vld [vmem:[%s31 + $0x6c] sm:$0xff]
    %v1489 = vld [vmem:[%s31 + $0x74] sm:$0xf]
    %v1490 = vld [vmem:[%s31 + $0x78] sm:$0xff]
    %v1491 = vld [vmem:[%s31 + $0x80] sm:$0xf]
    %v1492 = vld [vmem:[%s31 + $0x84] sm:$0xff]
    %v1493 = vld [vmem:[%s31 + $0x8c] sm:$0xf]
    %v1494 = vld [vmem:[%s31 + $0x90] sm:$0xff]
    %v1495 = vld [vmem:[%s31 + $0x98] sm:$0xf]
    %v1496 = vld [vmem:[%s31 + $0x9c] sm:$0xff]
    %v1497 = vld [vmem:[%s31 + $0xa4] sm:$0xf]
    %v1498 = vld [vmem:[%s31 + $0xa8] sm:$0xff]
    %v1499 = vld [vmem:[%s31 + $0xb0] sm:$0xf]
    %v1500 = vld [vmem:[%s31 + $0xb4] sm:$0xff]
    %v1501 = vld [vmem:[%s31 + $0xbc] sm:$0xf]
    %v1502 = vpack.c.bf16 %v1454, %v1454
    %v1503 = vpack.c.bf16 %v1455, %v1455
    %v1504 = vpack.c.bf16 %v1456, %v1456
    %v1505 = vpack.c.bf16 %v1457, %v1457
    %v1506 = vpack.c.bf16 %v1458, %v1458
    %v1507 = vpack.c.bf16 %v1459, %v1459
    %v1508 = vpack.c.bf16 %v1460, %v1460
    %v1509 = vpack.c.bf16 %v1461, %v1461
    %v1510 = vpack.c.bf16 %v1462, %v1462
    %v1511 = vpack.c.bf16 %v1463, %v1463
    %v1512 = vpack.c.bf16 %v1464, %v1464
    %v1513 = vpack.c.bf16 %v1465, %v1465
    %v1514 = vpack.c.bf16 %v1466, %v1466
    %v1515 = vpack.c.bf16 %v1467, %v1467
    %v1516 = vpack.c.bf16 %v1468, %v1468
    %v1517 = vpack.c.bf16 %v1469, %v1469
    %v1518 = vld [vmem:[%s35] sm:$0x7]
    %v1520 = vperm.slane %v1518, 0
    %v1521 = vperm.slane %v1518, 1
    %v1522 = vperm.slane %v1518, 2
    %v1542 = vunpack.c.l.b16 %v1502
    %v1543 = vunpack.c.l.b16 %v1503
    %v1544 = vunpack.c.l.b16 %v1504
    %v1545 = vunpack.c.l.b16 %v1505
    %v1546 = vunpack.c.l.b16 %v1506
    %v1547 = vunpack.c.l.b16 %v1507
    %v1548 = vunpack.c.l.b16 %v1508
    %v1549 = vunpack.c.l.b16 %v1509
    %v1550 = vunpack.c.l.b16 %v1510
    %v1551 = vunpack.c.l.b16 %v1511
    %v1552 = vunpack.c.l.b16 %v1512
    %v1553 = vunpack.c.l.b16 %v1513
    %v1554 = vunpack.c.l.b16 %v1514
    %v1555 = vunpack.c.l.b16 %v1515
    %v1556 = vunpack.c.l.b16 %v1516
    %v1557 = vunpack.c.l.b16 %v1517
    %v1558 = vsel %vm945, %v1543, %v1542
    %v1559 = vsel %vm947, %v1544, %v1558
    %v1560 = vsel %vm949, %v1545, %v1559
    %v1561 = vsel %vm951, %v1546, %v1560
    %v1562 = vsel %vm953, %v1547, %v1561
    %v1563 = vsel %vm955, %v1548, %v1562
    %v1564 = vsel %vm957, %v1549, %v1563
    %v1565 = vsel %vm945, %v1551, %v1550
    %v1566 = vsel %vm947, %v1552, %v1565
    %v1567 = vsel %vm949, %v1553, %v1566
    %v1568 = vsel %vm951, %v1554, %v1567
    %v1569 = vsel %vm953, %v1555, %v1568
    %v1570 = vsel %vm955, %v1556, %v1569
    %v1571 = vsel %vm957, %v1557, %v1570
    %v1572 = vpack.c.b16 %v1571, %v1564
    %v1606 = vunpack.c.l.b16 %v1470
    %v1607 = vunpack.c.h.b16 %v1470
    %v1608 = vunpack.c.l.b16 %v1471
    %v1609 = vunpack.c.l.b16 %v1472
    %v1610 = vunpack.c.h.b16 %v1472
    %v1611 = vunpack.c.l.b16 %v1473
    %v1612 = vunpack.c.l.b16 %v1474
    %v1613 = vunpack.c.h.b16 %v1474
    %v1614 = vunpack.c.l.b16 %v1475
    %v1615 = vunpack.c.l.b16 %v1476
    %v1616 = vunpack.c.h.b16 %v1476
    %v1617 = vunpack.c.l.b16 %v1477
    %v1618 = vunpack.c.l.b16 %v1478
    %v1619 = vunpack.c.h.b16 %v1478
    %v1620 = vunpack.c.l.b16 %v1479
    %v1621 = vunpack.c.l.b16 %v1480
    %v1622 = vunpack.c.h.b16 %v1480
    %v1623 = vunpack.c.l.b16 %v1481
    %v1624 = vunpack.c.l.b16 %v1482
    %v1625 = vunpack.c.h.b16 %v1482
    %v1626 = vunpack.c.l.b16 %v1483
    %v1627 = vunpack.c.l.b16 %v1484
    %v1628 = vunpack.c.h.b16 %v1484
    %v1629 = vunpack.c.l.b16 %v1485
    %v1630 = vunpack.c.l.b16 %v1486
    %v1631 = vunpack.c.h.b16 %v1486
    %v1632 = vunpack.c.l.b16 %v1487
    %v1633 = vunpack.c.l.b16 %v1488
    %v1634 = vunpack.c.h.b16 %v1488
    %v1635 = vunpack.c.l.b16 %v1489
    %v1636 = vunpack.c.l.b16 %v1490
    %v1637 = vunpack.c.h.b16 %v1490
    %v1638 = vunpack.c.l.b16 %v1491
    %v1639 = vunpack.c.l.b16 %v1492
    %v1640 = vunpack.c.h.b16 %v1492
    %v1641 = vunpack.c.l.b16 %v1493
    %v1642 = vunpack.c.l.b16 %v1494
    %v1643 = vunpack.c.h.b16 %v1494
    %v1644 = vunpack.c.l.b16 %v1495
    %v1645 = vunpack.c.l.b16 %v1496
    %v1646 = vunpack.c.h.b16 %v1496
    %v1647 = vunpack.c.l.b16 %v1497
    %v1648 = vunpack.c.l.b16 %v1498
    %v1649 = vunpack.c.h.b16 %v1498
    %v1650 = vunpack.c.l.b16 %v1499
    %v1651 = vunpack.c.l.b16 %v1500
    %v1652 = vunpack.c.h.b16 %v1500
    %v1653 = vunpack.c.l.b16 %v1501
    %v1654 = vpack.c.b16 %v1609, %v1606
    %v1655 = vpack.c.b16 %v1610, %v1607
    %v1656 = vpack.c.b16 %v1611, %v1608
    %v1657 = vpack.c.b16 %v1615, %v1612
    %v1658 = vpack.c.b16 %v1616, %v1613
    %v1659 = vpack.c.b16 %v1617, %v1614
    %v1660 = vpack.c.b16 %v1621, %v1618
    %v1661 = vpack.c.b16 %v1622, %v1619
    %v1662 = vpack.c.b16 %v1623, %v1620
    %v1663 = vpack.c.b16 %v1627, %v1624
    %v1664 = vpack.c.b16 %v1628, %v1625
    %v1665 = vpack.c.b16 %v1629, %v1626
    %v1666 = vpack.c.b16 %v1633, %v1630
    %v1667 = vpack.c.b16 %v1634, %v1631
    %v1668 = vpack.c.b16 %v1635, %v1632
    %v1669 = vpack.c.b16 %v1639, %v1636
    %v1670 = vpack.c.b16 %v1640, %v1637
    %v1671 = vpack.c.b16 %v1641, %v1638
    %v1672 = vpack.c.b16 %v1645, %v1642
    %v1673 = vpack.c.b16 %v1646, %v1643
    %v1674 = vpack.c.b16 %v1647, %v1644
    %v1675 = vpack.c.b16 %v1651, %v1648
    %v1676 = vpack.c.b16 %v1652, %v1649
    %v1677 = vpack.c.b16 %v1653, %v1650
    %1702 = vmatpush.bf16.msra.mxu0 %v1675
    %1703 = vmatpush.bf16.msra.mxu0 %v1672
    %1704 = vmatpush.bf16.msra.mxu0 %v1669
    %1705 = vmatpush.bf16.msra.mxu0 %v1666
    %1706 = vmatpush.bf16.msra.mxu0 %v1663
    %1707 = vmatpush.bf16.msra.mxu0 %v1660
    %1708 = vmatpush.bf16.msra.mxu0 %v1657
    %1709 = vmatpush.bf16.msra.mxu0 %v1654
    %1710 = vmatmul.bf16.gmra.mxu0 %v1572
    %v1711 = vpop.f32.mrf.mxu0
    %v1712 = vadd.f32 %v1520, %v1711
    %v1713 = vpop.f32.mrf.mxu0
    %v1714 = vadd.f32 %v1520, %v1713
    %1715 = vdwg.mxu0
    %1716 = vmatpush.bf16.msra.mxu0 %v1676
    %1717 = vmatpush.bf16.msra.mxu0 %v1673
    %1718 = vmatpush.bf16.msra.mxu0 %v1670
    %1719 = vmatpush.bf16.msra.mxu0 %v1667
    %1720 = vmatpush.bf16.msra.mxu0 %v1664
    %1721 = vmatpush.bf16.msra.mxu0 %v1661
    %1722 = vmatpush.bf16.msra.mxu0 %v1658
    %1723 = vmatpush.bf16.msra.mxu0 %v1655
    %1724 = vmatmul.bf16.gmra.mxu0 %v1572
    %v1725 = vpop.f32.mrf.mxu0
    %v1726 = vadd.f32 %v1521, %v1725
    %v1727 = vpop.f32.mrf.mxu0
    %v1728 = vadd.f32 %v1521, %v1727
    %1729 = vdwg.mxu0
    %1730 = vmatpush.bf16.msra.mxu0 %v1677
    %1731 = vmatpush.bf16.msra.mxu0 %v1674
    %1732 = vmatpush.bf16.msra.mxu0 %v1671
    %1733 = vmatpush.bf16.msra.mxu0 %v1668
    %1734 = vmatpush.bf16.msra.mxu0 %v1665
    %1735 = vmatpush.bf16.msra.mxu0 %v1662
    %1736 = vmatpush.bf16.msra.mxu0 %v1659
    %1737 = vmatpush.bf16.msra.mxu0 %v1656
    %1738 = vmatmul.bf16.gmra.mxu0 %v1572
    %v1739 = vpop.f32.mrf.mxu0
    %v1740 = vadd.f32 %v1522, %v1739
    %v1741 = vpop.f32.mrf.mxu0
    %v1742 = vadd.f32 %v1522, %v1741
    %1743 = vdwg.mxu0
    %v1744 = vld [vmem:[%s33] sm:$0xff]
    %v1745 = vld [vmem:[%s33 + $0x8] sm:$0xf]
    %v1746 = vld [vmem:[%s33 + $0xc] sm:$0xff]
    %v1747 = vld [vmem:[%s33 + $0x14] sm:$0xf]
    %v1748 = vld [vmem:[%s33 + $0x18] sm:$0xff]
    %v1749 = vld [vmem:[%s33 + $0x20] sm:$0xf]
    %v1750 = vld [vmem:[%s33 + $0x24] sm:$0xff]
    %v1751 = vld [vmem:[%s33 + $0x2c] sm:$0xf]
    %v1752 = vld [vmem:[%s33 + $0x30] sm:$0xff]
    %v1753 = vld [vmem:[%s33 + $0x38] sm:$0xf]
    %v1754 = vld [vmem:[%s33 + $0x3c] sm:$0xff]
    %v1755 = vld [vmem:[%s33 + $0x44] sm:$0xf]
    %v1756 = vld [vmem:[%s33 + $0x48] sm:$0xff]
    %v1757 = vld [vmem:[%s33 + $0x50] sm:$0xf]
    %v1758 = vld [vmem:[%s33 + $0x54] sm:$0xff]
    %v1759 = vld [vmem:[%s33 + $0x5c] sm:$0xf]
    %v1760 = vld [vmem:[%s33 + $0x60] sm:$0xff]
    %v1761 = vld [vmem:[%s33 + $0x68] sm:$0xf]
    %v1762 = vld [vmem:[%s33 + $0x6c] sm:$0xff]
    %v1763 = vld [vmem:[%s33 + $0x74] sm:$0xf]
    %v1764 = vld [vmem:[%s33 + $0x78] sm:$0xff]
    %v1765 = vld [vmem:[%s33 + $0x80] sm:$0xf]
    %v1766 = vld [vmem:[%s33 + $0x84] sm:$0xff]
    %v1767 = vld [vmem:[%s33 + $0x8c] sm:$0xf]
    %v1768 = vld [vmem:[%s33 + $0x90] sm:$0xff]
    %v1769 = vld [vmem:[%s33 + $0x98] sm:$0xf]
    %v1770 = vld [vmem:[%s33 + $0x9c] sm:$0xff]
    %v1771 = vld [vmem:[%s33 + $0xa4] sm:$0xf]
    %v1772 = vld [vmem:[%s33 + $0xa8] sm:$0xff]
    %v1773 = vld [vmem:[%s33 + $0xb0] sm:$0xf]
    %v1774 = vld [vmem:[%s33 + $0xb4] sm:$0xff]
    %v1775 = vld [vmem:[%s33 + $0xbc] sm:$0xf]
    %v1776 = vpack.c.bf16 %v590, %v589
    %v1777 = vld [vmem:[%s37] sm:$0x7]
    %v1779 = vperm.slane %v1777, 0
    %v1780 = vperm.slane %v1777, 1
    %v1781 = vperm.slane %v1777, 2
    %v1817 = vunpack.c.l.b16 %v1744
    %v1818 = vunpack.c.h.b16 %v1744
    %v1819 = vunpack.c.l.b16 %v1745
    %v1820 = vunpack.c.l.b16 %v1746
    %v1821 = vunpack.c.h.b16 %v1746
    %v1822 = vunpack.c.l.b16 %v1747
    %v1823 = vunpack.c.l.b16 %v1748
    %v1824 = vunpack.c.h.b16 %v1748
    %v1825 = vunpack.c.l.b16 %v1749
    %v1826 = vunpack.c.l.b16 %v1750
    %v1827 = vunpack.c.h.b16 %v1750
    %v1828 = vunpack.c.l.b16 %v1751
    %v1829 = vunpack.c.l.b16 %v1752
    %v1830 = vunpack.c.h.b16 %v1752
    %v1831 = vunpack.c.l.b16 %v1753
    %v1832 = vunpack.c.l.b16 %v1754
    %v1833 = vunpack.c.h.b16 %v1754
    %v1834 = vunpack.c.l.b16 %v1755
    %v1835 = vunpack.c.l.b16 %v1756
    %v1836 = vunpack.c.h.b16 %v1756
    %v1837 = vunpack.c.l.b16 %v1757
    %v1838 = vunpack.c.l.b16 %v1758
    %v1839 = vunpack.c.h.b16 %v1758
    %v1840 = vunpack.c.l.b16 %v1759
    %v1841 = vunpack.c.l.b16 %v1760
    %v1842 = vunpack.c.h.b16 %v1760
    %v1843 = vunpack.c.l.b16 %v1761
    %v1844 = vunpack.c.l.b16 %v1762
    %v1845 = vunpack.c.h.b16 %v1762
    %v1846 = vunpack.c.l.b16 %v1763
    %v1847 = vunpack.c.l.b16 %v1764
    %v1848 = vunpack.c.h.b16 %v1764
    %v1849 = vunpack.c.l.b16 %v1765
    %v1850 = vunpack.c.l.b16 %v1766
    %v1851 = vunpack.c.h.b16 %v1766
    %v1852 = vunpack.c.l.b16 %v1767
    %v1853 = vunpack.c.l.b16 %v1768
    %v1854 = vunpack.c.h.b16 %v1768
    %v1855 = vunpack.c.l.b16 %v1769
    %v1856 = vunpack.c.l.b16 %v1770
    %v1857 = vunpack.c.h.b16 %v1770
    %v1858 = vunpack.c.l.b16 %v1771
    %v1859 = vunpack.c.l.b16 %v1772
    %v1860 = vunpack.c.h.b16 %v1772
    %v1861 = vunpack.c.l.b16 %v1773
    %v1862 = vunpack.c.l.b16 %v1774
    %v1863 = vunpack.c.h.b16 %v1774
    %v1864 = vunpack.c.l.b16 %v1775
    %v1865 = vpack.c.b16 %v1820, %v1817
    %v1866 = vpack.c.b16 %v1821, %v1818
    %v1867 = vpack.c.b16 %v1822, %v1819
    %v1868 = vpack.c.b16 %v1826, %v1823
    %v1869 = vpack.c.b16 %v1827, %v1824
    %v1870 = vpack.c.b16 %v1828, %v1825
    %v1871 = vpack.c.b16 %v1832, %v1829
    %v1872 = vpack.c.b16 %v1833, %v1830
    %v1873 = vpack.c.b16 %v1834, %v1831
    %v1874 = vpack.c.b16 %v1838, %v1835
    %v1875 = vpack.c.b16 %v1839, %v1836
    %v1876 = vpack.c.b16 %v1840, %v1837
    %v1877 = vpack.c.b16 %v1844, %v1841
    %v1878 = vpack.c.b16 %v1845, %v1842
    %v1879 = vpack.c.b16 %v1846, %v1843
    %v1880 = vpack.c.b16 %v1850, %v1847
    %v1881 = vpack.c.b16 %v1851, %v1848
    %v1882 = vpack.c.b16 %v1852, %v1849
    %v1883 = vpack.c.b16 %v1856, %v1853
    %v1884 = vpack.c.b16 %v1857, %v1854
    %v1885 = vpack.c.b16 %v1858, %v1855
    %v1886 = vpack.c.b16 %v1862, %v1859
    %v1887 = vpack.c.b16 %v1863, %v1860
    %v1888 = vpack.c.b16 %v1864, %v1861
    %1913 = vmatpush.bf16.msra.mxu0 %v1886
    %1914 = vmatpush.bf16.msra.mxu0 %v1883
    %1915 = vmatpush.bf16.msra.mxu0 %v1880
    %1916 = vmatpush.bf16.msra.mxu0 %v1877
    %1917 = vmatpush.bf16.msra.mxu0 %v1874
    %1918 = vmatpush.bf16.msra.mxu0 %v1871
    %1919 = vmatpush.bf16.msra.mxu0 %v1868
    %1920 = vmatpush.bf16.msra.mxu0 %v1865
    %1921 = vmatmul.bf16.gmra.mxu0 %v1776
    %v1922 = vpop.f32.mrf.mxu0
    %v1923 = vadd.f32 %v1779, %v1922
    %v1924 = vpop.f32.mrf.mxu0
    %v1925 = vadd.f32 %v1779, %v1924
    %1926 = vdwg.mxu0
    %1927 = vmatpush.bf16.msra.mxu0 %v1887
    %1928 = vmatpush.bf16.msra.mxu0 %v1884
    %1929 = vmatpush.bf16.msra.mxu0 %v1881
    %1930 = vmatpush.bf16.msra.mxu0 %v1878
    %1931 = vmatpush.bf16.msra.mxu0 %v1875
    %1932 = vmatpush.bf16.msra.mxu0 %v1872
    %1933 = vmatpush.bf16.msra.mxu0 %v1869
    %1934 = vmatpush.bf16.msra.mxu0 %v1866
    %1935 = vmatmul.bf16.gmra.mxu0 %v1776
    %v1936 = vpop.f32.mrf.mxu0
    %v1937 = vadd.f32 %v1780, %v1936
    %v1938 = vpop.f32.mrf.mxu0
    %v1939 = vadd.f32 %v1780, %v1938
    %1940 = vdwg.mxu0
    %1941 = vmatpush.bf16.msra.mxu0 %v1888
    %1942 = vmatpush.bf16.msra.mxu0 %v1885
    %1943 = vmatpush.bf16.msra.mxu0 %v1882
    %1944 = vmatpush.bf16.msra.mxu0 %v1879
    %1945 = vmatpush.bf16.msra.mxu0 %v1876
    %1946 = vmatpush.bf16.msra.mxu0 %v1873
    %1947 = vmatpush.bf16.msra.mxu0 %v1870
    %1948 = vmatpush.bf16.msra.mxu0 %v1867
    %1949 = vmatmul.bf16.gmra.mxu0 %v1776
    %v1950 = vpop.f32.mrf.mxu0
    %v1951 = vadd.f32 %v1781, %v1950
    %v1952 = vpop.f32.mrf.mxu0
    %v1953 = vadd.f32 %v1781, %v1952
    %1954 = vdwg.mxu0
    %v1955 = vadd.f32 %v1712, %v1923
    %v1956 = vadd.f32 %v1714, %v1925
    %v1957 = vxor.u32 %v1955, 2147483648
    %v1958 = vxor.u32 %v1956, 2147483648
    %v1959 = vmul.f32 %v1957, 1.442695
    %v1960 = vpow.pop %v1959
    %v1961 = vmul.f32 %v1958, 1.442695
    %v1962 = vpow.pop %v1961
    %v1963 = vadd.f32 %v1960, 1.0
    %v1964 = vadd.f32 %v1962, 1.0
    %v1965 = vrcp.pop %v1963
    %v1966 = vmul.f32 %v1963, %v1965
    %v1967 = vsub.f32 1.0, %v1966
    %v1968 = vmul.f32 %v1965, %v1967
    %v1969 = vadd.f32 %v1965, %v1968
    %vm1970 = vweird.f32 %v1963
    %vm1971 = vweird.f32 %v1965
    %vm1972 = vmor %vm1970, %vm1971
    %v1973 = vsel %vm1972, %v1965, %v1969
    %v1974 = vand.u32 2147483647, %v1963
    %vm1975 = vcmp.eq.f32.partialorder %v1974, 8.507059e+37
    %v1976 = vand.u32 %v1963, 2147483648
    %v1977 = vor.u32 1.1754944e-38, %v1976
    %v1978 = vsel %vm1975, %v1977, %v1973
    %v1979 = vmul.f32 1.0, %v1978
    %v1980 = vrcp.pop %v1964
    %v1981 = vmul.f32 %v1964, %v1980
    %v1982 = vsub.f32 1.0, %v1981
    %v1983 = vmul.f32 %v1980, %v1982
    %v1984 = vadd.f32 %v1980, %v1983
    %vm1985 = vweird.f32 %v1964
    %vm1986 = vweird.f32 %v1980
    %vm1987 = vmor %vm1985, %vm1986
    %v1988 = vsel %vm1987, %v1980, %v1984
    %v1989 = vand.u32 2147483647, %v1964
    %vm1990 = vcmp.eq.f32.partialorder %v1989, 8.507059e+37
    %v1991 = vand.u32 %v1964, 2147483648
    %v1992 = vor.u32 1.1754944e-38, %v1991
    %v1993 = vsel %vm1990, %v1992, %v1988
    %v1994 = vmul.f32 1.0, %v1993
    %v1995 = vadd.f32 %v1726, %v1937
    %v1996 = vadd.f32 %v1728, %v1939
    %v1997 = vxor.u32 %v1995, 2147483648
    %v1998 = vxor.u32 %v1996, 2147483648
    %v1999 = vmul.f32 %v1997, 1.442695
    %v2000 = vpow.pop %v1999
    %v2001 = vmul.f32 %v1998, 1.442695
    %v2002 = vpow.pop %v2001
    %v2003 = vadd.f32 %v2000, 1.0
    %v2004 = vadd.f32 %v2002, 1.0
    %v2005 = vrcp.pop %v2003
    %v2006 = vmul.f32 %v2003, %v2005
    %v2007 = vsub.f32 1.0, %v2006
    %v2008 = vmul.f32 %v2005, %v2007
    %v2009 = vadd.f32 %v2005, %v2008
    %vm2010 = vweird.f32 %v2003
    %vm2011 = vweird.f32 %v2005
    %vm2012 = vmor %vm2010, %vm2011
    %v2013 = vsel %vm2012, %v2005, %v2009
    %v2014 = vand.u32 2147483647, %v2003
    %vm2015 = vcmp.eq.f32.partialorder %v2014, 8.507059e+37
    %v2016 = vand.u32 %v2003, 2147483648
    %v2017 = vor.u32 1.1754944e-38, %v2016
    %v2018 = vsel %vm2015, %v2017, %v2013
    %v2019 = vmul.f32 1.0, %v2018
    %v2020 = vrcp.pop %v2004
    %v2021 = vmul.f32 %v2004, %v2020
    %v2022 = vsub.f32 1.0, %v2021
    %v2023 = vmul.f32 %v2020, %v2022
    %v2024 = vadd.f32 %v2020, %v2023
    %vm2025 = vweird.f32 %v2004
    %vm2026 = vweird.f32 %v2020
    %vm2027 = vmor %vm2025, %vm2026
    %v2028 = vsel %vm2027, %v2020, %v2024
    %v2029 = vand.u32 2147483647, %v2004
    %vm2030 = vcmp.eq.f32.partialorder %v2029, 8.507059e+37
    %v2031 = vand.u32 %v2004, 2147483648
    %v2032 = vor.u32 1.1754944e-38, %v2031
    %v2033 = vsel %vm2030, %v2032, %v2028
    %v2034 = vmul.f32 1.0, %v2033
    %v2035 = vmul.f32 %v1979, %v1951
    %v2036 = vmul.f32 %v1994, %v1953
    %v2037 = vadd.f32 %v1740, %v2035
    %v2038 = vadd.f32 %v1742, %v2036
    %v2039 = vtanh.pop %v2037
    %v2040 = vtanh.pop %v2038
    %v2041 = vsub.f32 1.0, %v2019
    %v2042 = vsub.f32 1.0, %v2034
    %v2043 = vmul.f32 %v2041, %v2039
    %v2044 = vmul.f32 %v2042, %v2040
    %v2045 = vmul.f32 %v2019, %v589
    %v2046 = vmul.f32 %v2034, %v590
    %v2047 = vadd.f32 %v2043, %v2045
    %v2048 = vadd.f32 %v2044, %v2046
    %v2049 = vmax.f32 %v2047, 0.0
    %v2050 = vmax.f32 %v2048, 0.0
    %v2051 = vpack.c.bf16 %v2050, %v2049
    %2052 = vmatpush.bf16.msra.mxu0 0
    %2053 = vmatpush.bf16.msra.mxu0 0
    %2054 = vmatpush.bf16.msra.mxu0 0
    %2055 = vmatpush.bf16.msra.mxu0 0
    %2056 = vmatpush.bf16.msra.mxu0 0
    %2057 = vmatpush.bf16.msra.mxu0 0
    %2058 = vmatpush.bf16.msra.mxu0 0
    %2059 = vmatpush.bf16.msra.mxu0 %v2051
    %2060 = vmatmul.bf16.gmra.mxu0 %v592
    %v2061 = vpop.f32.mrf.mxu0
    %v2062 = vadd.f32 0.0, %v2061
    %v2063 = vpop.f32.mrf.mxu0
    %v2064 = vadd.f32 0.0, %v2063
    %2065 = vmatmul.bf16.gmra.mxu0 %v595
    %v2066 = vpop.f32.mrf.mxu0
    %v2067 = vadd.f32 0.0, %v2066
    %v2068 = vpop.f32.mrf.mxu0
    %v2069 = vadd.f32 0.0, %v2068
    %2070 = vmatmul.bf16.gmra.mxu0 %v598
    %v2071 = vpop.f32.mrf.mxu0
    %v2072 = vadd.f32 0.0, %v2071
    %v2073 = vpop.f32.mrf.mxu0
    %v2074 = vadd.f32 0.0, %v2073
    %2075 = vmatmul.bf16.gmra.mxu0 %v601
    %v2076 = vpop.f32.mrf.mxu0
    %v2077 = vadd.f32 0.0, %v2076
    %v2078 = vpop.f32.mrf.mxu0
    %v2079 = vadd.f32 0.0, %v2078
    %2080 = vdwg.mxu0
    %v2081 = vld [vmem:[%s21 + $0x1] sm:$0x1]
    %v2082 = vld [vmem:[%s23 + $0x1] sm:$0x1]
    %v2083 = vld [vmem:[%s25 + $0x1] sm:$0x1]
    %v2092 = vrot.slane %v2062, 4
    %v2093 = vrot.slane %v2064, 4
    %v2094 = vrot.slane %v2067, 4
    %v2095 = vrot.slane %v2069, 4
    %v2096 = vrot.slane %v2072, 4
    %v2097 = vrot.slane %v2074, 4
    %v2098 = vrot.slane %v2077, 4
    %v2099 = vrot.slane %v2079, 4
    %v2108 = vperm.slane %v2081, 0
    %v2109 = vmul.f32 %v2049, %v2108
    %v2110 = vmul.f32 %v2050, %v2108
    %2111 = vadd.xlane.f32.xlu0 %v2109
    %v2112 = vpop.xlane.xlu0 %2111
    %2113 = vadd.xlane.f32.xlu0 %v2110
    %v2114 = vpop.xlane.xlu0 %2113
    %v2115 = vperm.slane %v2082, 0
    %v2116 = vmul.f32 %v2062, %v2115
    %v2117 = vmul.f32 %v2092, %v2115
    %v2118 = vmul.f32 %v2064, %v2115
    %v2119 = vmul.f32 %v2093, %v2115
    %v2120 = vmul.f32 %v2067, %v2115
    %v2121 = vmul.f32 %v2094, %v2115
    %v2122 = vmul.f32 %v2069, %v2115
    %v2123 = vmul.f32 %v2095, %v2115
    %v2124 = vmul.f32 %v2072, %v2115
    %v2125 = vmul.f32 %v2096, %v2115
    %v2126 = vmul.f32 %v2074, %v2115
    %v2127 = vmul.f32 %v2097, %v2115
    %v2128 = vmul.f32 %v2077, %v2115
    %v2129 = vmul.f32 %v2098, %v2115
    %v2130 = vmul.f32 %v2079, %v2115
    %v2131 = vmul.f32 %v2099, %v2115
    %v2132 = vsel %vm698, %v2116, 0.0
    %2133 = vadd.xlane.f32.xlu0 %v2132
    %v2134 = vpop.xlane.xlu0 %2133
    %v2135 = vsel %vm698, %v2117, 0.0
    %2136 = vadd.xlane.f32.xlu0 %v2135
    %v2137 = vpop.xlane.xlu0 %2136
    %v2138 = vsel %vm698, %v2118, 0.0
    %2139 = vadd.xlane.f32.xlu0 %v2138
    %v2140 = vpop.xlane.xlu0 %2139
    %v2141 = vsel %vm698, %v2119, 0.0
    %2142 = vadd.xlane.f32.xlu0 %v2141
    %v2143 = vpop.xlane.xlu0 %2142
    %v2144 = vsel %vm698, %v2120, 0.0
    %2145 = vadd.xlane.f32.xlu0 %v2144
    %v2146 = vpop.xlane.xlu0 %2145
    %v2147 = vsel %vm698, %v2121, 0.0
    %2148 = vadd.xlane.f32.xlu0 %v2147
    %v2149 = vpop.xlane.xlu0 %2148
    %v2150 = vsel %vm698, %v2122, 0.0
    %2151 = vadd.xlane.f32.xlu0 %v2150
    %v2152 = vpop.xlane.xlu0 %2151
    %v2153 = vsel %vm698, %v2123, 0.0
    %2154 = vadd.xlane.f32.xlu0 %v2153
    %v2155 = vpop.xlane.xlu0 %2154
    %v2156 = vsel %vm698, %v2124, 0.0
    %2157 = vadd.xlane.f32.xlu0 %v2156
    %v2158 = vpop.xlane.xlu0 %2157
    %v2159 = vsel %vm698, %v2125, 0.0
    %2160 = vadd.xlane.f32.xlu0 %v2159
    %v2161 = vpop.xlane.xlu0 %2160
    %v2162 = vsel %vm698, %v2126, 0.0
    %2163 = vadd.xlane.f32.xlu0 %v2162
    %v2164 = vpop.xlane.xlu0 %2163
    %v2165 = vsel %vm698, %v2127, 0.0
    %2166 = vadd.xlane.f32.xlu0 %v2165
    %v2167 = vpop.xlane.xlu0 %2166
    %v2168 = vsel %vm698, %v2128, 0.0
    %2169 = vadd.xlane.f32.xlu0 %v2168
    %v2170 = vpop.xlane.xlu0 %2169
    %v2171 = vsel %vm698, %v2129, 0.0
    %2172 = vadd.xlane.f32.xlu0 %v2171
    %v2173 = vpop.xlane.xlu0 %2172
    %v2174 = vsel %vm698, %v2130, 0.0
    %2175 = vadd.xlane.f32.xlu0 %v2174
    %v2176 = vpop.xlane.xlu0 %2175
    %v2177 = vsel %vm698, %v2131, 0.0
    %2178 = vadd.xlane.f32.xlu0 %v2177
    %v2179 = vpop.xlane.xlu0 %2178
    %v2196 = vperm.slane %v2134, %v141
    %v2197 = vperm.slane %v2137, %v141
    %v2198 = vperm.slane %v2140, %v141
    %v2199 = vperm.slane %v2143, %v141
    %v2200 = vperm.slane %v2146, %v141
    %v2201 = vperm.slane %v2149, %v141
    %v2202 = vperm.slane %v2152, %v141
    %v2203 = vperm.slane %v2155, %v141
    %v2204 = vperm.slane %v2158, %v141
    %v2205 = vperm.slane %v2161, %v141
    %v2206 = vperm.slane %v2164, %v141
    %v2207 = vperm.slane %v2167, %v141
    %v2208 = vperm.slane %v2170, %v141
    %v2209 = vperm.slane %v2173, %v141
    %v2210 = vperm.slane %v2176, %v141
    %v2211 = vperm.slane %v2179, %v141
    %v2212 = vsel %vm945, %v2197, %v2196
    %v2213 = vsel %vm947, %v2198, %v2212
    %v2214 = vsel %vm949, %v2199, %v2213
    %v2215 = vsel %vm951, %v2200, %v2214
    %v2216 = vsel %vm953, %v2201, %v2215
    %v2217 = vsel %vm955, %v2202, %v2216
    %v2218 = vsel %vm957, %v2203, %v2217
    %v2219 = vsel %vm945, %v2205, %v2204
    %v2220 = vsel %vm947, %v2206, %v2219
    %v2221 = vsel %vm949, %v2207, %v2220
    %v2222 = vsel %vm951, %v2208, %v2221
    %v2223 = vsel %vm953, %v2209, %v2222
    %v2224 = vsel %vm955, %v2210, %v2223
    %v2225 = vsel %vm957, %v2211, %v2224
    %v2228 = vadd.f32 %v2112, %v2218
    %v2229 = vadd.f32 %v2114, %v2225
    %s2231 = vtos %v2083
    %v2232 = vstv %s2231
    %v2234 = vadd.f32 %v2228, %v2232
    %v2235 = vadd.f32 %v2229, %v2232
    %vm2236 = vcmp.gt.f32.partialorder %v2234, 0.0
    %vm2237 = vcmp.gt.f32.partialorder %v2235, 0.0
    %v2238 = vmul.f32 %v2234, 0.01
    %v2239 = vmul.f32 %v2235, 0.01
    %v2240 = vsel %vm2236, %v2234, %v2238
    %v2241 = vsel %vm2237, %v2235, %v2239
    %v2242 = vadd.f32 %v2240, %v552
    %v2243 = vadd.f32 %v2241, %v553
    %v2244 = vsel %vm984, %v2242, -inf
    %2245 = vmax.xlane.f32.xlu0 %v2244
    %v2246 = vpop.xlane.xlu0 %2245
    %v2247 = vsel %vm984, %v2243, -inf
    %2248 = vmax.xlane.f32.xlu0 %v2247
    %v2249 = vpop.xlane.xlu0 %2248
    %v2250 = vsub.f32 %v2242, %v2246
    %v2251 = vsub.f32 %v2243, %v2249
    %v2252 = vmul.f32 %v2250, 1.442695
    %v2253 = vpow.pop %v2252
    %v2254 = vmul.f32 %v2251, 1.442695
    %v2255 = vpow.pop %v2254
    %v2256 = vsel %vm984, %v2253, 0.0
    %2257 = vadd.xlane.f32.xlu0 %v2256
    %v2258 = vpop.xlane.xlu0 %2257
    %v2259 = vsel %vm984, %v2255, 0.0
    %2260 = vadd.xlane.f32.xlu0 %v2259
    %v2261 = vpop.xlane.xlu0 %2260
    %v2262 = vrcp.pop %v2258
    %v2263 = vrcp.pop %v2261
    %v2264 = vmul.f32 %v2253, %v2262
    %v2265 = vmul.f32 %v2255, %v2263
    %v2266 = vmul.f32 %v2264, %v550
    %v2267 = vmul.f32 %v2265, %v551
    %s2268 = scalar_lea.vmem %s27, 64
    %v2269 = vld [vmem:[%s2268] sm:$0xf]
    %v2270 = vld [vmem:[%s2268 + $0x4] sm:$0xf]
    %v2271 = vld [vmem:[%s2268 + $0x8] sm:$0xf]
    %v2272 = vld [vmem:[%s2268 + $0xc] sm:$0xf]
    %v2273 = vld [vmem:[%s2268 + $0x10] sm:$0xf]
    %v2274 = vld [vmem:[%s2268 + $0x14] sm:$0xf]
    %v2275 = vld [vmem:[%s2268 + $0x18] sm:$0xf]
    %v2276 = vld [vmem:[%s2268 + $0x1c] sm:$0xf]
    %v2277 = vld [vmem:[%s2268 + $0x20] sm:$0xf]
    %v2278 = vld [vmem:[%s2268 + $0x24] sm:$0xf]
    %v2279 = vld [vmem:[%s2268 + $0x28] sm:$0xf]
    %v2280 = vld [vmem:[%s2268 + $0x2c] sm:$0xf]
    %v2281 = vld [vmem:[%s2268 + $0x30] sm:$0xf]
    %v2282 = vld [vmem:[%s2268 + $0x34] sm:$0xf]
    %v2283 = vld [vmem:[%s2268 + $0x38] sm:$0xf]
    %v2284 = vld [vmem:[%s2268 + $0x3c] sm:$0xf]
    %v2285 = vpack.c.bf16 %v2064, %v2062
    %v2286 = vpack.c.bf16 %v2069, %v2067
    %v2287 = vpack.c.bf16 %v2074, %v2072
    %v2288 = vpack.c.bf16 %v2079, %v2077
    %s2289 = scalar_lea.vmem %s29, 1
    %v2290 = vld [vmem:[%s2289] sm:$0x1]
    %v2292 = vperm.slane %v2290, 0
    %v2310 = vunpack.c.l.b16 %v2269
    %v2311 = vunpack.c.l.b16 %v2270
    %v2312 = vunpack.c.l.b16 %v2271
    %v2313 = vunpack.c.l.b16 %v2272
    %v2314 = vunpack.c.l.b16 %v2273
    %v2315 = vunpack.c.l.b16 %v2274
    %v2316 = vunpack.c.l.b16 %v2275
    %v2317 = vunpack.c.l.b16 %v2276
    %v2318 = vunpack.c.l.b16 %v2277
    %v2319 = vunpack.c.l.b16 %v2278
    %v2320 = vunpack.c.l.b16 %v2279
    %v2321 = vunpack.c.l.b16 %v2280
    %v2322 = vunpack.c.l.b16 %v2281
    %v2323 = vunpack.c.l.b16 %v2282
    %v2324 = vunpack.c.l.b16 %v2283
    %v2325 = vunpack.c.l.b16 %v2284
    %v2326 = vpack.c.b16 %v2311, %v2310
    %v2327 = vpack.c.b16 %v2313, %v2312
    %v2328 = vpack.c.b16 %v2315, %v2314
    %v2329 = vpack.c.b16 %v2317, %v2316
    %v2330 = vpack.c.b16 %v2319, %v2318
    %v2331 = vpack.c.b16 %v2321, %v2320
    %v2332 = vpack.c.b16 %v2323, %v2322
    %v2333 = vpack.c.b16 %v2325, %v2324
    %2342 = vmatpush.bf16.msra.mxu0 %v2333
    %2343 = vmatpush.bf16.msra.mxu0 %v2332
    %2344 = vmatpush.bf16.msra.mxu0 %v2331
    %2345 = vmatpush.bf16.msra.mxu0 %v2330
    %2346 = vmatpush.bf16.msra.mxu0 %v2329
    %2347 = vmatpush.bf16.msra.mxu0 %v2328
    %2348 = vmatpush.bf16.msra.mxu0 %v2327
    %2349 = vmatpush.bf16.msra.mxu0 %v2326
    %2350 = vmatmul.bf16.gmra.mxu0 %v2285
    %v2351 = vpop.f32.mrf.mxu0
    %v2352 = vadd.f32 %v2292, %v2351
    %v2353 = vpop.f32.mrf.mxu0
    %v2354 = vadd.f32 %v2292, %v2353
    %2355 = vmatmul.bf16.gmra.mxu0 %v2286
    %v2356 = vpop.f32.mrf.mxu0
    %v2357 = vadd.f32 %v2292, %v2356
    %v2358 = vpop.f32.mrf.mxu0
    %v2359 = vadd.f32 %v2292, %v2358
    %2360 = vmatmul.bf16.gmra.mxu0 %v2287
    %v2361 = vpop.f32.mrf.mxu0
    %v2362 = vadd.f32 %v2292, %v2361
    %v2363 = vpop.f32.mrf.mxu0
    %v2364 = vadd.f32 %v2292, %v2363
    %2365 = vmatmul.bf16.gmra.mxu0 %v2288
    %v2366 = vpop.f32.mrf.mxu0
    %v2367 = vadd.f32 %v2292, %v2366
    %v2368 = vpop.f32.mrf.mxu0
    %v2369 = vadd.f32 %v2292, %v2368
    %2370 = vdwg.mxu0
    %v2379 = vrot.slane %v2352, 4
    %v2380 = vrot.slane %v2354, 4
    %v2381 = vrot.slane %v2357, 4
    %v2382 = vrot.slane %v2359, 4
    %v2383 = vrot.slane %v2362, 4
    %v2384 = vrot.slane %v2364, 4
    %v2385 = vrot.slane %v2367, 4
    %v2386 = vrot.slane %v2369, 4
    %v2395 = vperm.slane %v2266, 0
    %v2396 = vlaneseq
    %v2397 = vshrl.u32 %v2396, 7
    %2399 = vset.pattern.permute.xlu0 %v2397
    %2400 = vperm.xlu0 %2399, %v2395
    %v2401 = vpop.permute.xlu0 %2400
    %v2402 = vperm.slane %v2266, 1
    %v2403 = vlaneseq
    %v2404 = vshrl.u32 %v2403, 7
    %2406 = vset.pattern.permute.xlu0 %v2404
    %2407 = vperm.xlu0 %2406, %v2402
    %v2408 = vpop.permute.xlu0 %2407
    %v2409 = vperm.slane %v2266, 2
    %v2410 = vlaneseq
    %v2411 = vshrl.u32 %v2410, 7
    %2413 = vset.pattern.permute.xlu0 %v2411
    %2414 = vperm.xlu0 %2413, %v2409
    %v2415 = vpop.permute.xlu0 %2414
    %v2416 = vperm.slane %v2266, 3
    %v2417 = vlaneseq
    %v2418 = vshrl.u32 %v2417, 7
    %2420 = vset.pattern.permute.xlu0 %v2418
    %2421 = vperm.xlu0 %2420, %v2416
    %v2422 = vpop.permute.xlu0 %2421
    %v2423 = vperm.slane %v2266, 4
    %v2424 = vlaneseq
    %v2425 = vshrl.u32 %v2424, 7
    %2427 = vset.pattern.permute.xlu0 %v2425
    %2428 = vperm.xlu0 %2427, %v2423
    %v2429 = vpop.permute.xlu0 %2428
    %v2430 = vperm.slane %v2266, 5
    %v2431 = vlaneseq
    %v2432 = vshrl.u32 %v2431, 7
    %2434 = vset.pattern.permute.xlu0 %v2432
    %2435 = vperm.xlu0 %2434, %v2430
    %v2436 = vpop.permute.xlu0 %2435
    %v2437 = vperm.slane %v2266, 6
    %v2438 = vlaneseq
    %v2439 = vshrl.u32 %v2438, 7
    %2441 = vset.pattern.permute.xlu0 %v2439
    %2442 = vperm.xlu0 %2441, %v2437
    %v2443 = vpop.permute.xlu0 %2442
    %v2444 = vperm.slane %v2266, 7
    %v2445 = vlaneseq
    %v2446 = vshrl.u32 %v2445, 7
    %2448 = vset.pattern.permute.xlu0 %v2446
    %2449 = vperm.xlu0 %2448, %v2444
    %v2450 = vpop.permute.xlu0 %2449
    %v2451 = vperm.slane %v2267, 0
    %v2452 = vlaneseq
    %v2453 = vshrl.u32 %v2452, 7
    %2455 = vset.pattern.permute.xlu0 %v2453
    %2456 = vperm.xlu0 %2455, %v2451
    %v2457 = vpop.permute.xlu0 %2456
    %v2458 = vperm.slane %v2267, 1
    %v2459 = vlaneseq
    %v2460 = vshrl.u32 %v2459, 7
    %2462 = vset.pattern.permute.xlu0 %v2460
    %2463 = vperm.xlu0 %2462, %v2458
    %v2464 = vpop.permute.xlu0 %2463
    %v2465 = vperm.slane %v2267, 2
    %v2466 = vlaneseq
    %v2467 = vshrl.u32 %v2466, 7
    %2469 = vset.pattern.permute.xlu0 %v2467
    %2470 = vperm.xlu0 %2469, %v2465
    %v2471 = vpop.permute.xlu0 %2470
    %v2472 = vperm.slane %v2267, 3
    %v2473 = vlaneseq
    %v2474 = vshrl.u32 %v2473, 7
    %2476 = vset.pattern.permute.xlu0 %v2474
    %2477 = vperm.xlu0 %2476, %v2472
    %v2478 = vpop.permute.xlu0 %2477
    %v2479 = vperm.slane %v2267, 4
    %v2480 = vlaneseq
    %v2481 = vshrl.u32 %v2480, 7
    %2483 = vset.pattern.permute.xlu0 %v2481
    %2484 = vperm.xlu0 %2483, %v2479
    %v2485 = vpop.permute.xlu0 %2484
    %v2486 = vperm.slane %v2267, 5
    %v2487 = vlaneseq
    %v2488 = vshrl.u32 %v2487, 7
    %2490 = vset.pattern.permute.xlu0 %v2488
    %2491 = vperm.xlu0 %2490, %v2486
    %v2492 = vpop.permute.xlu0 %2491
    %v2493 = vperm.slane %v2267, 6
    %v2494 = vlaneseq
    %v2495 = vshrl.u32 %v2494, 7
    %2497 = vset.pattern.permute.xlu0 %v2495
    %2498 = vperm.xlu0 %2497, %v2493
    %v2499 = vpop.permute.xlu0 %2498
    %v2500 = vperm.slane %v2267, 7
    %v2501 = vlaneseq
    %v2502 = vshrl.u32 %v2501, 7
    %2504 = vset.pattern.permute.xlu0 %v2502
    %2505 = vperm.xlu0 %2504, %v2500
    %v2506 = vpop.permute.xlu0 %2505
    %v2507 = vmul.f32 %v2401, %v2352
    %v2508 = vmul.f32 %v2408, %v2379
    %v2509 = vmul.f32 %v2415, %v2354
    %v2510 = vmul.f32 %v2422, %v2380
    %v2511 = vmul.f32 %v2429, %v2357
    %v2512 = vmul.f32 %v2436, %v2381
    %v2513 = vmul.f32 %v2443, %v2359
    %v2514 = vmul.f32 %v2450, %v2382
    %v2515 = vmul.f32 %v2457, %v2362
    %v2516 = vmul.f32 %v2464, %v2383
    %v2517 = vmul.f32 %v2471, %v2364
    %v2518 = vmul.f32 %v2478, %v2384
    %v2519 = vmul.f32 %v2485, %v2367
    %v2520 = vmul.f32 %v2492, %v2385
    %v2521 = vmul.f32 %v2499, %v2369
    %v2522 = vmul.f32 %v2506, %v2386
    %v2523 = vsel %vm698, %v2507, 0.0
    %v2524 = vrot.slane %v2523, 4
    %v2525 = vadd.f32 %v2523, %v2524
    %v2526 = vrot.slane %v2525, 2
    %v2527 = vadd.f32 %v2525, %v2526
    %v2528 = vrot.slane %v2527, 1
    %v2529 = vadd.f32 %v2527, %v2528
    %v2530 = vsel %vm698, %v2508, 0.0
    %v2531 = vrot.slane %v2530, 4
    %v2532 = vadd.f32 %v2530, %v2531
    %v2533 = vrot.slane %v2532, 2
    %v2534 = vadd.f32 %v2532, %v2533
    %v2535 = vrot.slane %v2534, 1
    %v2536 = vadd.f32 %v2534, %v2535
    %v2537 = vsel %vm698, %v2509, 0.0
    %v2538 = vrot.slane %v2537, 4
    %v2539 = vadd.f32 %v2537, %v2538
    %v2540 = vrot.slane %v2539, 2
    %v2541 = vadd.f32 %v2539, %v2540
    %v2542 = vrot.slane %v2541, 1
    %v2543 = vadd.f32 %v2541, %v2542
    %v2544 = vsel %vm698, %v2510, 0.0
    %v2545 = vrot.slane %v2544, 4
    %v2546 = vadd.f32 %v2544, %v2545
    %v2547 = vrot.slane %v2546, 2
    %v2548 = vadd.f32 %v2546, %v2547
    %v2549 = vrot.slane %v2548, 1
    %v2550 = vadd.f32 %v2548, %v2549
    %v2551 = vsel %vm698, %v2511, 0.0
    %v2552 = vrot.slane %v2551, 4
    %v2553 = vadd.f32 %v2551, %v2552
    %v2554 = vrot.slane %v2553, 2
    %v2555 = vadd.f32 %v2553, %v2554
    %v2556 = vrot.slane %v2555, 1
    %v2557 = vadd.f32 %v2555, %v2556
    %v2558 = vsel %vm698, %v2512, 0.0
    %v2559 = vrot.slane %v2558, 4
    %v2560 = vadd.f32 %v2558, %v2559
    %v2561 = vrot.slane %v2560, 2
    %v2562 = vadd.f32 %v2560, %v2561
    %v2563 = vrot.slane %v2562, 1
    %v2564 = vadd.f32 %v2562, %v2563
    %v2565 = vsel %vm698, %v2513, 0.0
    %v2566 = vrot.slane %v2565, 4
    %v2567 = vadd.f32 %v2565, %v2566
    %v2568 = vrot.slane %v2567, 2
    %v2569 = vadd.f32 %v2567, %v2568
    %v2570 = vrot.slane %v2569, 1
    %v2571 = vadd.f32 %v2569, %v2570
    %v2572 = vsel %vm698, %v2514, 0.0
    %v2573 = vrot.slane %v2572, 4
    %v2574 = vadd.f32 %v2572, %v2573
    %v2575 = vrot.slane %v2574, 2
    %v2576 = vadd.f32 %v2574, %v2575
    %v2577 = vrot.slane %v2576, 1
    %v2578 = vadd.f32 %v2576, %v2577
    %v2579 = vsel %vm698, %v2515, 0.0
    %v2580 = vrot.slane %v2579, 4
    %v2581 = vadd.f32 %v2579, %v2580
    %v2582 = vrot.slane %v2581, 2
    %v2583 = vadd.f32 %v2581, %v2582
    %v2584 = vrot.slane %v2583, 1
    %v2585 = vadd.f32 %v2583, %v2584
    %v2586 = vsel %vm698, %v2516, 0.0
    %v2587 = vrot.slane %v2586, 4
    %v2588 = vadd.f32 %v2586, %v2587
    %v2589 = vrot.slane %v2588, 2
    %v2590 = vadd.f32 %v2588, %v2589
    %v2591 = vrot.slane %v2590, 1
    %v2592 = vadd.f32 %v2590, %v2591
    %v2593 = vsel %vm698, %v2517, 0.0
    %v2594 = vrot.slane %v2593, 4
    %v2595 = vadd.f32 %v2593, %v2594
    %v2596 = vrot.slane %v2595, 2
    %v2597 = vadd.f32 %v2595, %v2596
    %v2598 = vrot.slane %v2597, 1
    %v2599 = vadd.f32 %v2597, %v2598
    %v2600 = vsel %vm698, %v2518, 0.0
    %v2601 = vrot.slane %v2600, 4
    %v2602 = vadd.f32 %v2600, %v2601
    %v2603 = vrot.slane %v2602, 2
    %v2604 = vadd.f32 %v2602, %v2603
    %v2605 = vrot.slane %v2604, 1
    %v2606 = vadd.f32 %v2604, %v2605
    %v2607 = vsel %vm698, %v2519, 0.0
    %v2608 = vrot.slane %v2607, 4
    %v2609 = vadd.f32 %v2607, %v2608
    %v2610 = vrot.slane %v2609, 2
    %v2611 = vadd.f32 %v2609, %v2610
    %v2612 = vrot.slane %v2611, 1
    %v2613 = vadd.f32 %v2611, %v2612
    %v2614 = vsel %vm698, %v2520, 0.0
    %v2615 = vrot.slane %v2614, 4
    %v2616 = vadd.f32 %v2614, %v2615
    %v2617 = vrot.slane %v2616, 2
    %v2618 = vadd.f32 %v2616, %v2617
    %v2619 = vrot.slane %v2618, 1
    %v2620 = vadd.f32 %v2618, %v2619
    %v2621 = vsel %vm698, %v2521, 0.0
    %v2622 = vrot.slane %v2621, 4
    %v2623 = vadd.f32 %v2621, %v2622
    %v2624 = vrot.slane %v2623, 2
    %v2625 = vadd.f32 %v2623, %v2624
    %v2626 = vrot.slane %v2625, 1
    %v2627 = vadd.f32 %v2625, %v2626
    %v2628 = vsel %vm698, %v2522, 0.0
    %v2629 = vrot.slane %v2628, 4
    %v2630 = vadd.f32 %v2628, %v2629
    %v2631 = vrot.slane %v2630, 2
    %v2632 = vadd.f32 %v2630, %v2631
    %v2633 = vrot.slane %v2632, 1
    %v2634 = vadd.f32 %v2632, %v2633
    %vm2635 = vcmp.gt.f32.partialorder %v2529, 0.0
    %vm2636 = vcmp.gt.f32.partialorder %v2536, 0.0
    %vm2637 = vcmp.gt.f32.partialorder %v2543, 0.0
    %vm2638 = vcmp.gt.f32.partialorder %v2550, 0.0
    %vm2639 = vcmp.gt.f32.partialorder %v2557, 0.0
    %vm2640 = vcmp.gt.f32.partialorder %v2564, 0.0
    %vm2641 = vcmp.gt.f32.partialorder %v2571, 0.0
    %vm2642 = vcmp.gt.f32.partialorder %v2578, 0.0
    %vm2643 = vcmp.gt.f32.partialorder %v2585, 0.0
    %vm2644 = vcmp.gt.f32.partialorder %v2592, 0.0
    %vm2645 = vcmp.gt.f32.partialorder %v2599, 0.0
    %vm2646 = vcmp.gt.f32.partialorder %v2606, 0.0
    %vm2647 = vcmp.gt.f32.partialorder %v2613, 0.0
    %vm2648 = vcmp.gt.f32.partialorder %v2620, 0.0
    %vm2649 = vcmp.gt.f32.partialorder %v2627, 0.0
    %vm2650 = vcmp.gt.f32.partialorder %v2634, 0.0
    %v2651 = vmin.f32 %v2529, 0.0
    %v2652 = vmin.f32 %v2536, 0.0
    %v2653 = vmin.f32 %v2543, 0.0
    %v2654 = vmin.f32 %v2550, 0.0
    %v2655 = vmin.f32 %v2557, 0.0
    %v2656 = vmin.f32 %v2564, 0.0
    %v2657 = vmin.f32 %v2571, 0.0
    %v2658 = vmin.f32 %v2578, 0.0
    %v2659 = vmin.f32 %v2585, 0.0
    %v2660 = vmin.f32 %v2592, 0.0
    %v2661 = vmin.f32 %v2599, 0.0
    %v2662 = vmin.f32 %v2606, 0.0
    %v2663 = vmin.f32 %v2613, 0.0
    %v2664 = vmin.f32 %v2620, 0.0
    %v2665 = vmin.f32 %v2627, 0.0
    %v2666 = vmin.f32 %v2634, 0.0
    %v2667 = vmul.f32 %v2651, 1.442695
    %v2668 = vpow.pop %v2667
    %v2669 = vmul.f32 %v2652, 1.442695
    %v2670 = vpow.pop %v2669
    %v2671 = vmul.f32 %v2653, 1.442695
    %v2672 = vpow.pop %v2671
    %v2673 = vmul.f32 %v2654, 1.442695
    %v2674 = vpow.pop %v2673
    %v2675 = vmul.f32 %v2655, 1.442695
    %v2676 = vpow.pop %v2675
    %v2677 = vmul.f32 %v2656, 1.442695
    %v2678 = vpow.pop %v2677
    %v2679 = vmul.f32 %v2657, 1.442695
    %v2680 = vpow.pop %v2679
    %v2681 = vmul.f32 %v2658, 1.442695
    %v2682 = vpow.pop %v2681
    %v2683 = vmul.f32 %v2659, 1.442695
    %v2684 = vpow.pop %v2683
    %v2685 = vmul.f32 %v2660, 1.442695
    %v2686 = vpow.pop %v2685
    %v2687 = vmul.f32 %v2661, 1.442695
    %v2688 = vpow.pop %v2687
    %v2689 = vmul.f32 %v2662, 1.442695
    %v2690 = vpow.pop %v2689
    %v2691 = vmul.f32 %v2663, 1.442695
    %v2692 = vpow.pop %v2691
    %v2693 = vmul.f32 %v2664, 1.442695
    %v2694 = vpow.pop %v2693
    %v2695 = vmul.f32 %v2665, 1.442695
    %v2696 = vpow.pop %v2695
    %v2697 = vmul.f32 %v2666, 1.442695
    %v2698 = vpow.pop %v2697
    %v2699 = vsub.f32 %v2668, 1.0
    %v2700 = vsub.f32 %v2670, 1.0
    %v2701 = vsub.f32 %v2672, 1.0
    %v2702 = vsub.f32 %v2674, 1.0
    %v2703 = vsub.f32 %v2676, 1.0
    %v2704 = vsub.f32 %v2678, 1.0
    %v2705 = vsub.f32 %v2680, 1.0
    %v2706 = vsub.f32 %v2682, 1.0
    %v2707 = vsub.f32 %v2684, 1.0
    %v2708 = vsub.f32 %v2686, 1.0
    %v2709 = vsub.f32 %v2688, 1.0
    %v2710 = vsub.f32 %v2690, 1.0
    %v2711 = vsub.f32 %v2692, 1.0
    %v2712 = vsub.f32 %v2694, 1.0
    %v2713 = vsub.f32 %v2696, 1.0
    %v2714 = vsub.f32 %v2698, 1.0
    %v2715 = vsel %vm2635, %v2529, %v2699
    %v2716 = vsel %vm2636, %v2536, %v2700
    %v2717 = vsel %vm2637, %v2543, %v2701
    %v2718 = vsel %vm2638, %v2550, %v2702
    %v2719 = vsel %vm2639, %v2557, %v2703
    %v2720 = vsel %vm2640, %v2564, %v2704
    %v2721 = vsel %vm2641, %v2571, %v2705
    %v2722 = vsel %vm2642, %v2578, %v2706
    %v2723 = vsel %vm2643, %v2585, %v2707
    %v2724 = vsel %vm2644, %v2592, %v2708
    %v2725 = vsel %vm2645, %v2599, %v2709
    %v2726 = vsel %vm2646, %v2606, %v2710
    %v2727 = vsel %vm2647, %v2613, %v2711
    %v2728 = vsel %vm2648, %v2620, %v2712
    %v2729 = vsel %vm2649, %v2627, %v2713
    %v2730 = vsel %vm2650, %v2634, %v2714
    %s2731 = scalar_lea.vmem %s31, 192
    %v2732 = vld [vmem:[%s2731] sm:$0xff]
    %v2733 = vld [vmem:[%s2731 + $0x8] sm:$0xf]
    %v2734 = vld [vmem:[%s2731 + $0xc] sm:$0xff]
    %v2735 = vld [vmem:[%s2731 + $0x14] sm:$0xf]
    %v2736 = vld [vmem:[%s2731 + $0x18] sm:$0xff]
    %v2737 = vld [vmem:[%s2731 + $0x20] sm:$0xf]
    %v2738 = vld [vmem:[%s2731 + $0x24] sm:$0xff]
    %v2739 = vld [vmem:[%s2731 + $0x2c] sm:$0xf]
    %v2740 = vld [vmem:[%s2731 + $0x30] sm:$0xff]
    %v2741 = vld [vmem:[%s2731 + $0x38] sm:$0xf]
    %v2742 = vld [vmem:[%s2731 + $0x3c] sm:$0xff]
    %v2743 = vld [vmem:[%s2731 + $0x44] sm:$0xf]
    %v2744 = vld [vmem:[%s2731 + $0x48] sm:$0xff]
    %v2745 = vld [vmem:[%s2731 + $0x50] sm:$0xf]
    %v2746 = vld [vmem:[%s2731 + $0x54] sm:$0xff]
    %v2747 = vld [vmem:[%s2731 + $0x5c] sm:$0xf]
    %v2748 = vld [vmem:[%s2731 + $0x60] sm:$0xff]
    %v2749 = vld [vmem:[%s2731 + $0x68] sm:$0xf]
    %v2750 = vld [vmem:[%s2731 + $0x6c] sm:$0xff]
    %v2751 = vld [vmem:[%s2731 + $0x74] sm:$0xf]
    %v2752 = vld [vmem:[%s2731 + $0x78] sm:$0xff]
    %v2753 = vld [vmem:[%s2731 + $0x80] sm:$0xf]
    %v2754 = vld [vmem:[%s2731 + $0x84] sm:$0xff]
    %v2755 = vld [vmem:[%s2731 + $0x8c] sm:$0xf]
    %v2756 = vld [vmem:[%s2731 + $0x90] sm:$0xff]
    %v2757 = vld [vmem:[%s2731 + $0x98] sm:$0xf]
    %v2758 = vld [vmem:[%s2731 + $0x9c] sm:$0xff]
    %v2759 = vld [vmem:[%s2731 + $0xa4] sm:$0xf]
    %v2760 = vld [vmem:[%s2731 + $0xa8] sm:$0xff]
    %v2761 = vld [vmem:[%s2731 + $0xb0] sm:$0xf]
    %v2762 = vld [vmem:[%s2731 + $0xb4] sm:$0xff]
    %v2763 = vld [vmem:[%s2731 + $0xbc] sm:$0xf]
    %v2764 = vpack.c.bf16 %v2715, %v2715
    %v2765 = vpack.c.bf16 %v2716, %v2716
    %v2766 = vpack.c.bf16 %v2717, %v2717
    %v2767 = vpack.c.bf16 %v2718, %v2718
    %v2768 = vpack.c.bf16 %v2719, %v2719
    %v2769 = vpack.c.bf16 %v2720, %v2720
    %v2770 = vpack.c.bf16 %v2721, %v2721
    %v2771 = vpack.c.bf16 %v2722, %v2722
    %v2772 = vpack.c.bf16 %v2723, %v2723
    %v2773 = vpack.c.bf16 %v2724, %v2724
    %v2774 = vpack.c.bf16 %v2725, %v2725
    %v2775 = vpack.c.bf16 %v2726, %v2726
    %v2776 = vpack.c.bf16 %v2727, %v2727
    %v2777 = vpack.c.bf16 %v2728, %v2728
    %v2778 = vpack.c.bf16 %v2729, %v2729
    %v2779 = vpack.c.bf16 %v2730, %v2730
    %s2780 = scalar_lea.vmem %s35, 3
    %v2781 = vld [vmem:[%s2780] sm:$0x7]
    %v2783 = vperm.slane %v2781, 0
    %v2784 = vperm.slane %v2781, 1
    %v2785 = vperm.slane %v2781, 2
    %v2805 = vunpack.c.l.b16 %v2764
    %v2806 = vunpack.c.l.b16 %v2765
    %v2807 = vunpack.c.l.b16 %v2766
    %v2808 = vunpack.c.l.b16 %v2767
    %v2809 = vunpack.c.l.b16 %v2768
    %v2810 = vunpack.c.l.b16 %v2769
    %v2811 = vunpack.c.l.b16 %v2770
    %v2812 = vunpack.c.l.b16 %v2771
    %v2813 = vunpack.c.l.b16 %v2772
    %v2814 = vunpack.c.l.b16 %v2773
    %v2815 = vunpack.c.l.b16 %v2774
    %v2816 = vunpack.c.l.b16 %v2775
    %v2817 = vunpack.c.l.b16 %v2776
    %v2818 = vunpack.c.l.b16 %v2777
    %v2819 = vunpack.c.l.b16 %v2778
    %v2820 = vunpack.c.l.b16 %v2779
    %v2821 = vsel %vm945, %v2806, %v2805
    %v2822 = vsel %vm947, %v2807, %v2821
    %v2823 = vsel %vm949, %v2808, %v2822
    %v2824 = vsel %vm951, %v2809, %v2823
    %v2825 = vsel %vm953, %v2810, %v2824
    %v2826 = vsel %vm955, %v2811, %v2825
    %v2827 = vsel %vm957, %v2812, %v2826
    %v2828 = vsel %vm945, %v2814, %v2813
    %v2829 = vsel %vm947, %v2815, %v2828
    %v2830 = vsel %vm949, %v2816, %v2829
    %v2831 = vsel %vm951, %v2817, %v2830
    %v2832 = vsel %vm953, %v2818, %v2831
    %v2833 = vsel %vm955, %v2819, %v2832
    %v2834 = vsel %vm957, %v2820, %v2833
    %v2835 = vpack.c.b16 %v2834, %v2827
    %v2869 = vunpack.c.l.b16 %v2732
    %v2870 = vunpack.c.h.b16 %v2732
    %v2871 = vunpack.c.l.b16 %v2733
    %v2872 = vunpack.c.l.b16 %v2734
    %v2873 = vunpack.c.h.b16 %v2734
    %v2874 = vunpack.c.l.b16 %v2735
    %v2875 = vunpack.c.l.b16 %v2736
    %v2876 = vunpack.c.h.b16 %v2736
    %v2877 = vunpack.c.l.b16 %v2737
    %v2878 = vunpack.c.l.b16 %v2738
    %v2879 = vunpack.c.h.b16 %v2738
    %v2880 = vunpack.c.l.b16 %v2739
    %v2881 = vunpack.c.l.b16 %v2740
    %v2882 = vunpack.c.h.b16 %v2740
    %v2883 = vunpack.c.l.b16 %v2741
    %v2884 = vunpack.c.l.b16 %v2742
    %v2885 = vunpack.c.h.b16 %v2742
    %v2886 = vunpack.c.l.b16 %v2743
    %v2887 = vunpack.c.l.b16 %v2744
    %v2888 = vunpack.c.h.b16 %v2744
    %v2889 = vunpack.c.l.b16 %v2745
    %v2890 = vunpack.c.l.b16 %v2746
    %v2891 = vunpack.c.h.b16 %v2746
    %v2892 = vunpack.c.l.b16 %v2747
    %v2893 = vunpack.c.l.b16 %v2748
    %v2894 = vunpack.c.h.b16 %v2748
    %v2895 = vunpack.c.l.b16 %v2749
    %v2896 = vunpack.c.l.b16 %v2750
    %v2897 = vunpack.c.h.b16 %v2750
    %v2898 = vunpack.c.l.b16 %v2751
    %v2899 = vunpack.c.l.b16 %v2752
    %v2900 = vunpack.c.h.b16 %v2752
    %v2901 = vunpack.c.l.b16 %v2753
    %v2902 = vunpack.c.l.b16 %v2754
    %v2903 = vunpack.c.h.b16 %v2754
    %v2904 = vunpack.c.l.b16 %v2755
    %v2905 = vunpack.c.l.b16 %v2756
    %v2906 = vunpack.c.h.b16 %v2756
    %v2907 = vunpack.c.l.b16 %v2757
    %v2908 = vunpack.c.l.b16 %v2758
    %v2909 = vunpack.c.h.b16 %v2758
    %v2910 = vunpack.c.l.b16 %v2759
    %v2911 = vunpack.c.l.b16 %v2760
    %v2912 = vunpack.c.h.b16 %v2760
    %v2913 = vunpack.c.l.b16 %v2761
    %v2914 = vunpack.c.l.b16 %v2762
    %v2915 = vunpack.c.h.b16 %v2762
    %v2916 = vunpack.c.l.b16 %v2763
    %v2917 = vpack.c.b16 %v2872, %v2869
    %v2918 = vpack.c.b16 %v2873, %v2870
    %v2919 = vpack.c.b16 %v2874, %v2871
    %v2920 = vpack.c.b16 %v2878, %v2875
    %v2921 = vpack.c.b16 %v2879, %v2876
    %v2922 = vpack.c.b16 %v2880, %v2877
    %v2923 = vpack.c.b16 %v2884, %v2881
    %v2924 = vpack.c.b16 %v2885, %v2882
    %v2925 = vpack.c.b16 %v2886, %v2883
    %v2926 = vpack.c.b16 %v2890, %v2887
    %v2927 = vpack.c.b16 %v2891, %v2888
    %v2928 = vpack.c.b16 %v2892, %v2889
    %v2929 = vpack.c.b16 %v2896, %v2893
    %v2930 = vpack.c.b16 %v2897, %v2894
    %v2931 = vpack.c.b16 %v2898, %v2895
    %v2932 = vpack.c.b16 %v2902, %v2899
    %v2933 = vpack.c.b16 %v2903, %v2900
    %v2934 = vpack.c.b16 %v2904, %v2901
    %v2935 = vpack.c.b16 %v2908, %v2905
    %v2936 = vpack.c.b16 %v2909, %v2906
    %v2937 = vpack.c.b16 %v2910, %v2907
    %v2938 = vpack.c.b16 %v2914, %v2911
    %v2939 = vpack.c.b16 %v2915, %v2912
    %v2940 = vpack.c.b16 %v2916, %v2913
    %2965 = vmatpush.bf16.msra.mxu0 %v2938
    %2966 = vmatpush.bf16.msra.mxu0 %v2935
    %2967 = vmatpush.bf16.msra.mxu0 %v2932
    %2968 = vmatpush.bf16.msra.mxu0 %v2929
    %2969 = vmatpush.bf16.msra.mxu0 %v2926
    %2970 = vmatpush.bf16.msra.mxu0 %v2923
    %2971 = vmatpush.bf16.msra.mxu0 %v2920
    %2972 = vmatpush.bf16.msra.mxu0 %v2917
    %2973 = vmatmul.bf16.gmra.mxu0 %v2835
    %v2974 = vpop.f32.mrf.mxu0
    %v2975 = vadd.f32 %v2783, %v2974
    %v2976 = vpop.f32.mrf.mxu0
    %v2977 = vadd.f32 %v2783, %v2976
    %2978 = vdwg.mxu0
    %2979 = vmatpush.bf16.msra.mxu0 %v2939
    %2980 = vmatpush.bf16.msra.mxu0 %v2936
    %2981 = vmatpush.bf16.msra.mxu0 %v2933
    %2982 = vmatpush.bf16.msra.mxu0 %v2930
    %2983 = vmatpush.bf16.msra.mxu0 %v2927
    %2984 = vmatpush.bf16.msra.mxu0 %v2924
    %2985 = vmatpush.bf16.msra.mxu0 %v2921
    %2986 = vmatpush.bf16.msra.mxu0 %v2918
    %2987 = vmatmul.bf16.gmra.mxu0 %v2835
    %v2988 = vpop.f32.mrf.mxu0
    %v2989 = vadd.f32 %v2784, %v2988
    %v2990 = vpop.f32.mrf.mxu0
    %v2991 = vadd.f32 %v2784, %v2990
    %2992 = vdwg.mxu0
    %2993 = vmatpush.bf16.msra.mxu0 %v2940
    %2994 = vmatpush.bf16.msra.mxu0 %v2937
    %2995 = vmatpush.bf16.msra.mxu0 %v2934
    %2996 = vmatpush.bf16.msra.mxu0 %v2931
    %2997 = vmatpush.bf16.msra.mxu0 %v2928
    %2998 = vmatpush.bf16.msra.mxu0 %v2925
    %2999 = vmatpush.bf16.msra.mxu0 %v2922
    %3000 = vmatpush.bf16.msra.mxu0 %v2919
    %3001 = vmatmul.bf16.gmra.mxu0 %v2835
    %v3002 = vpop.f32.mrf.mxu0
    %v3003 = vadd.f32 %v2785, %v3002
    %v3004 = vpop.f32.mrf.mxu0
    %v3005 = vadd.f32 %v2785, %v3004
    %3006 = vdwg.mxu0
    %s3007 = scalar_lea.vmem %s33, 192
    %v3008 = vld [vmem:[%s3007] sm:$0xff]
    %v3009 = vld [vmem:[%s3007 + $0x8] sm:$0xf]
    %v3010 = vld [vmem:[%s3007 + $0xc] sm:$0xff]
    %v3011 = vld [vmem:[%s3007 + $0x14] sm:$0xf]
    %v3012 = vld [vmem:[%s3007 + $0x18] sm:$0xff]
    %v3013 = vld [vmem:[%s3007 + $0x20] sm:$0xf]
    %v3014 = vld [vmem:[%s3007 + $0x24] sm:$0xff]
    %v3015 = vld [vmem:[%s3007 + $0x2c] sm:$0xf]
    %v3016 = vld [vmem:[%s3007 + $0x30] sm:$0xff]
    %v3017 = vld [vmem:[%s3007 + $0x38] sm:$0xf]
    %v3018 = vld [vmem:[%s3007 + $0x3c] sm:$0xff]
    %v3019 = vld [vmem:[%s3007 + $0x44] sm:$0xf]
    %v3020 = vld [vmem:[%s3007 + $0x48] sm:$0xff]
    %v3021 = vld [vmem:[%s3007 + $0x50] sm:$0xf]
    %v3022 = vld [vmem:[%s3007 + $0x54] sm:$0xff]
    %v3023 = vld [vmem:[%s3007 + $0x5c] sm:$0xf]
    %v3024 = vld [vmem:[%s3007 + $0x60] sm:$0xff]
    %v3025 = vld [vmem:[%s3007 + $0x68] sm:$0xf]
    %v3026 = vld [vmem:[%s3007 + $0x6c] sm:$0xff]
    %v3027 = vld [vmem:[%s3007 + $0x74] sm:$0xf]
    %v3028 = vld [vmem:[%s3007 + $0x78] sm:$0xff]
    %v3029 = vld [vmem:[%s3007 + $0x80] sm:$0xf]
    %v3030 = vld [vmem:[%s3007 + $0x84] sm:$0xff]
    %v3031 = vld [vmem:[%s3007 + $0x8c] sm:$0xf]
    %v3032 = vld [vmem:[%s3007 + $0x90] sm:$0xff]
    %v3033 = vld [vmem:[%s3007 + $0x98] sm:$0xf]
    %v3034 = vld [vmem:[%s3007 + $0x9c] sm:$0xff]
    %v3035 = vld [vmem:[%s3007 + $0xa4] sm:$0xf]
    %v3036 = vld [vmem:[%s3007 + $0xa8] sm:$0xff]
    %v3037 = vld [vmem:[%s3007 + $0xb0] sm:$0xf]
    %v3038 = vld [vmem:[%s3007 + $0xb4] sm:$0xff]
    %v3039 = vld [vmem:[%s3007 + $0xbc] sm:$0xf]
    %v3040 = vpack.c.bf16 %v2048, %v2047
    %s3041 = scalar_lea.vmem %s37, 3
    %v3042 = vld [vmem:[%s3041] sm:$0x7]
    %v3044 = vperm.slane %v3042, 0
    %v3045 = vperm.slane %v3042, 1
    %v3046 = vperm.slane %v3042, 2
    %v3082 = vunpack.c.l.b16 %v3008
    %v3083 = vunpack.c.h.b16 %v3008
    %v3084 = vunpack.c.l.b16 %v3009
    %v3085 = vunpack.c.l.b16 %v3010
    %v3086 = vunpack.c.h.b16 %v3010
    %v3087 = vunpack.c.l.b16 %v3011
    %v3088 = vunpack.c.l.b16 %v3012
    %v3089 = vunpack.c.h.b16 %v3012
    %v3090 = vunpack.c.l.b16 %v3013
    %v3091 = vunpack.c.l.b16 %v3014
    %v3092 = vunpack.c.h.b16 %v3014
    %v3093 = vunpack.c.l.b16 %v3015
    %v3094 = vunpack.c.l.b16 %v3016
    %v3095 = vunpack.c.h.b16 %v3016
    %v3096 = vunpack.c.l.b16 %v3017
    %v3097 = vunpack.c.l.b16 %v3018
    %v3098 = vunpack.c.h.b16 %v3018
    %v3099 = vunpack.c.l.b16 %v3019
    %v3100 = vunpack.c.l.b16 %v3020
    %v3101 = vunpack.c.h.b16 %v3020
    %v3102 = vunpack.c.l.b16 %v3021
    %v3103 = vunpack.c.l.b16 %v3022
    %v3104 = vunpack.c.h.b16 %v3022
    %v3105 = vunpack.c.l.b16 %v3023
    %v3106 = vunpack.c.l.b16 %v3024
    %v3107 = vunpack.c.h.b16 %v3024
    %v3108 = vunpack.c.l.b16 %v3025
    %v3109 = vunpack.c.l.b16 %v3026
    %v3110 = vunpack.c.h.b16 %v3026
    %v3111 = vunpack.c.l.b16 %v3027
    %v3112 = vunpack.c.l.b16 %v3028
    %v3113 = vunpack.c.h.b16 %v3028
    %v3114 = vunpack.c.l.b16 %v3029
    %v3115 = vunpack.c.l.b16 %v3030
    %v3116 = vunpack.c.h.b16 %v3030
    %v3117 = vunpack.c.l.b16 %v3031
    %v3118 = vunpack.c.l.b16 %v3032
    %v3119 = vunpack.c.h.b16 %v3032
    %v3120 = vunpack.c.l.b16 %v3033
    %v3121 = vunpack.c.l.b16 %v3034
    %v3122 = vunpack.c.h.b16 %v3034
    %v3123 = vunpack.c.l.b16 %v3035
    %v3124 = vunpack.c.l.b16 %v3036
    %v3125 = vunpack.c.h.b16 %v3036
    %v3126 = vunpack.c.l.b16 %v3037
    %v3127 = vunpack.c.l.b16 %v3038
    %v3128 = vunpack.c.h.b16 %v3038
    %v3129 = vunpack.c.l.b16 %v3039
    %v3130 = vpack.c.b16 %v3085, %v3082
    %v3131 = vpack.c.b16 %v3086, %v3083
    %v3132 = vpack.c.b16 %v3087, %v3084
    %v3133 = vpack.c.b16 %v3091, %v3088
    %v3134 = vpack.c.b16 %v3092, %v3089
    %v3135 = vpack.c.b16 %v3093, %v3090
    %v3136 = vpack.c.b16 %v3097, %v3094
    %v3137 = vpack.c.b16 %v3098, %v3095
    %v3138 = vpack.c.b16 %v3099, %v3096
    %v3139 = vpack.c.b16 %v3103, %v3100
    %v3140 = vpack.c.b16 %v3104, %v3101
    %v3141 = vpack.c.b16 %v3105, %v3102
    %v3142 = vpack.c.b16 %v3109, %v3106
    %v3143 = vpack.c.b16 %v3110, %v3107
    %v3144 = vpack.c.b16 %v3111, %v3108
    %v3145 = vpack.c.b16 %v3115, %v3112
    %v3146 = vpack.c.b16 %v3116, %v3113
    %v3147 = vpack.c.b16 %v3117, %v3114
    %v3148 = vpack.c.b16 %v3121, %v3118
    %v3149 = vpack.c.b16 %v3122, %v3119
    %v3150 = vpack.c.b16 %v3123, %v3120
    %v3151 = vpack.c.b16 %v3127, %v3124
    %v3152 = vpack.c.b16 %v3128, %v3125
    %v3153 = vpack.c.b16 %v3129, %v3126
    %3178 = vmatpush.bf16.msra.mxu0 %v3151
    %3179 = vmatpush.bf16.msra.mxu0 %v3148
    %3180 = vmatpush.bf16.msra.mxu0 %v3145
    %3181 = vmatpush.bf16.msra.mxu0 %v3142
    %3182 = vmatpush.bf16.msra.mxu0 %v3139
    %3183 = vmatpush.bf16.msra.mxu0 %v3136
    %3184 = vmatpush.bf16.msra.mxu0 %v3133
    %3185 = vmatpush.bf16.msra.mxu0 %v3130
    %3186 = vmatmul.bf16.gmra.mxu0 %v3040
    %v3187 = vpop.f32.mrf.mxu0
    %v3188 = vadd.f32 %v3044, %v3187
    %v3189 = vpop.f32.mrf.mxu0
    %v3190 = vadd.f32 %v3044, %v3189
    %3191 = vdwg.mxu0
    %3192 = vmatpush.bf16.msra.mxu0 %v3152
    %3193 = vmatpush.bf16.msra.mxu0 %v3149
    %3194 = vmatpush.bf16.msra.mxu0 %v3146
    %3195 = vmatpush.bf16.msra.mxu0 %v3143
    %3196 = vmatpush.bf16.msra.mxu0 %v3140
    %3197 = vmatpush.bf16.msra.mxu0 %v3137
    %3198 = vmatpush.bf16.msra.mxu0 %v3134
    %3199 = vmatpush.bf16.msra.mxu0 %v3131
    %3200 = vmatmul.bf16.gmra.mxu0 %v3040
    %v3201 = vpop.f32.mrf.mxu0
    %v3202 = vadd.f32 %v3045, %v3201
    %v3203 = vpop.f32.mrf.mxu0
    %v3204 = vadd.f32 %v3045, %v3203
    %3205 = vdwg.mxu0
    %3206 = vmatpush.bf16.msra.mxu0 %v3153
    %3207 = vmatpush.bf16.msra.mxu0 %v3150
    %3208 = vmatpush.bf16.msra.mxu0 %v3147
    %3209 = vmatpush.bf16.msra.mxu0 %v3144
    %3210 = vmatpush.bf16.msra.mxu0 %v3141
    %3211 = vmatpush.bf16.msra.mxu0 %v3138
    %3212 = vmatpush.bf16.msra.mxu0 %v3135
    %3213 = vmatpush.bf16.msra.mxu0 %v3132
    %3214 = vmatmul.bf16.gmra.mxu0 %v3040
    %v3215 = vpop.f32.mrf.mxu0
    %v3216 = vadd.f32 %v3046, %v3215
    %v3217 = vpop.f32.mrf.mxu0
    %v3218 = vadd.f32 %v3046, %v3217
    %3219 = vdwg.mxu0
    %v3220 = vadd.f32 %v2975, %v3188
    %v3221 = vadd.f32 %v2977, %v3190
    %v3222 = vxor.u32 %v3220, 2147483648
    %v3223 = vxor.u32 %v3221, 2147483648
    %v3224 = vmul.f32 %v3222, 1.442695
    %v3225 = vpow.pop %v3224
    %v3226 = vmul.f32 %v3223, 1.442695
    %v3227 = vpow.pop %v3226
    %v3228 = vadd.f32 %v3225, 1.0
    %v3229 = vadd.f32 %v3227, 1.0
    %v3230 = vrcp.pop %v3228
    %v3231 = vmul.f32 %v3228, %v3230
    %v3232 = vsub.f32 1.0, %v3231
    %v3233 = vmul.f32 %v3230, %v3232
    %v3234 = vadd.f32 %v3230, %v3233
    %vm3235 = vweird.f32 %v3228
    %vm3236 = vweird.f32 %v3230
    %vm3237 = vmor %vm3235, %vm3236
    %v3238 = vsel %vm3237, %v3230, %v3234
    %v3239 = vand.u32 2147483647, %v3228
    %vm3240 = vcmp.eq.f32.partialorder %v3239, 8.507059e+37
    %v3241 = vand.u32 %v3228, 2147483648
    %v3242 = vor.u32 1.1754944e-38, %v3241
    %v3243 = vsel %vm3240, %v3242, %v3238
    %v3244 = vmul.f32 1.0, %v3243
    %v3245 = vrcp.pop %v3229
    %v3246 = vmul.f32 %v3229, %v3245
    %v3247 = vsub.f32 1.0, %v3246
    %v3248 = vmul.f32 %v3245, %v3247
    %v3249 = vadd.f32 %v3245, %v3248
    %vm3250 = vweird.f32 %v3229
    %vm3251 = vweird.f32 %v3245
    %vm3252 = vmor %vm3250, %vm3251
    %v3253 = vsel %vm3252, %v3245, %v3249
    %v3254 = vand.u32 2147483647, %v3229
    %vm3255 = vcmp.eq.f32.partialorder %v3254, 8.507059e+37
    %v3256 = vand.u32 %v3229, 2147483648
    %v3257 = vor.u32 1.1754944e-38, %v3256
    %v3258 = vsel %vm3255, %v3257, %v3253
    %v3259 = vmul.f32 1.0, %v3258
    %v3260 = vadd.f32 %v2989, %v3202
    %v3261 = vadd.f32 %v2991, %v3204
    %v3262 = vxor.u32 %v3260, 2147483648
    %v3263 = vxor.u32 %v3261, 2147483648
    %v3264 = vmul.f32 %v3262, 1.442695
    %v3265 = vpow.pop %v3264
    %v3266 = vmul.f32 %v3263, 1.442695
    %v3267 = vpow.pop %v3266
    %v3268 = vadd.f32 %v3265, 1.0
    %v3269 = vadd.f32 %v3267, 1.0
    %v3270 = vrcp.pop %v3268
    %v3271 = vmul.f32 %v3268, %v3270
    %v3272 = vsub.f32 1.0, %v3271
    %v3273 = vmul.f32 %v3270, %v3272
    %v3274 = vadd.f32 %v3270, %v3273
    %vm3275 = vweird.f32 %v3268
    %vm3276 = vweird.f32 %v3270
    %vm3277 = vmor %vm3275, %vm3276
    %v3278 = vsel %vm3277, %v3270, %v3274
    %v3279 = vand.u32 2147483647, %v3268
    %vm3280 = vcmp.eq.f32.partialorder %v3279, 8.507059e+37
    %v3281 = vand.u32 %v3268, 2147483648
    %v3282 = vor.u32 1.1754944e-38, %v3281
    %v3283 = vsel %vm3280, %v3282, %v3278
    %v3284 = vmul.f32 1.0, %v3283
    %v3285 = vrcp.pop %v3269
    %v3286 = vmul.f32 %v3269, %v3285
    %v3287 = vsub.f32 1.0, %v3286
    %v3288 = vmul.f32 %v3285, %v3287
    %v3289 = vadd.f32 %v3285, %v3288
    %vm3290 = vweird.f32 %v3269
    %vm3291 = vweird.f32 %v3285
    %vm3292 = vmor %vm3290, %vm3291
    %v3293 = vsel %vm3292, %v3285, %v3289
    %v3294 = vand.u32 2147483647, %v3269
    %vm3295 = vcmp.eq.f32.partialorder %v3294, 8.507059e+37
    %v3296 = vand.u32 %v3269, 2147483648
    %v3297 = vor.u32 1.1754944e-38, %v3296
    %v3298 = vsel %vm3295, %v3297, %v3293
    %v3299 = vmul.f32 1.0, %v3298
    %v3300 = vmul.f32 %v3244, %v3216
    %v3301 = vmul.f32 %v3259, %v3218
    %v3302 = vadd.f32 %v3003, %v3300
    %v3303 = vadd.f32 %v3005, %v3301
    %v3304 = vtanh.pop %v3302
    %v3305 = vtanh.pop %v3303
    %v3306 = vsub.f32 1.0, %v3284
    %v3307 = vsub.f32 1.0, %v3299
    %v3308 = vmul.f32 %v3306, %v3304
    %v3309 = vmul.f32 %v3307, %v3305
    %v3310 = vmul.f32 %v3284, %v2047
    %v3311 = vmul.f32 %v3299, %v2048
    %v3312 = vadd.f32 %v3308, %v3310
    %v3313 = vadd.f32 %v3309, %v3311
    %v3314 = vmax.f32 %v3312, 0.0
    %v3315 = vmax.f32 %v3313, 0.0
    %v3316 = vld [vmem:[%s9] sm:$0x3]
    %v3317 = vperm.slane %v3316, 0
    %v3318 = vlaneseq
    %v3319 = vshrl.u32 %v3318, 7
    %3321 = vset.pattern.permute.xlu0 %v3319
    %3322 = vperm.xlu0 %3321, %v3317
    %v3323 = vpop.permute.xlu0 %3322
    %v3324 = vperm.slane %v3316, 1
    %v3325 = vlaneseq
    %v3326 = vshrl.u32 %v3325, 7
    %3328 = vset.pattern.permute.xlu0 %v3326
    %3329 = vperm.xlu0 %3328, %v3324
    %v3330 = vpop.permute.xlu0 %3329
    %v3331 = vmul.f32 %v3314, %v3323
    %v3332 = vmul.f32 %v3315, %v3330
    %v3333 = vrot.slane %v3331, 4
    %v3334 = vadd.f32 %v3331, %v3333
    %v3335 = vrot.slane %v3334, 2
    %v3336 = vadd.f32 %v3334, %v3335
    %v3337 = vrot.slane %v3336, 1
    %v3338 = vadd.f32 %v3336, %v3337
    %v3339 = vrot.slane %v3332, 4
    %v3340 = vadd.f32 %v3332, %v3339
    %v3341 = vrot.slane %v3340, 2
    %v3342 = vadd.f32 %v3340, %v3341
    %v3343 = vrot.slane %v3342, 1
    %v3344 = vadd.f32 %v3342, %v3343
    %v3345 = vmax.f32 %v3338, 0.0
    %v3346 = vmax.f32 %v3344, 0.0
    %vm3347 = vcmp.eq.f32.partialorder %v3316, 0.0
    %v3348 = vsel %vm3347, -9e+08, 0.0
    %v3349 = vld [vmem:[%s45] sm:$0xf]
    %v3350 = vld [vmem:[%s45 + $0x4] sm:$0xf]
    %v3351 = vld [vmem:[%s45 + $0x8] sm:$0xf]
    %v3352 = vld [vmem:[%s45 + $0xc] sm:$0xf]
    %v3353 = vld [vmem:[%s45 + $0x10] sm:$0xf]
    %v3354 = vld [vmem:[%s45 + $0x14] sm:$0xf]
    %v3355 = vld [vmem:[%s45 + $0x18] sm:$0xf]
    %v3356 = vld [vmem:[%s45 + $0x1c] sm:$0xf]
    %v3357 = vld [vmem:[%s45 + $0x20] sm:$0xf]
    %v3358 = vld [vmem:[%s45 + $0x24] sm:$0xf]
    %v3359 = vld [vmem:[%s45 + $0x28] sm:$0xf]
    %v3360 = vld [vmem:[%s45 + $0x2c] sm:$0xf]
    %v3361 = vld [vmem:[%s45 + $0x30] sm:$0xf]
    %v3362 = vld [vmem:[%s45 + $0x34] sm:$0xf]
    %v3363 = vld [vmem:[%s45 + $0x38] sm:$0xf]
    %v3364 = vld [vmem:[%s45 + $0x3c] sm:$0xf]
    %v3365 = vpack.c.bf16 %v3315, %v3314
    %v3366 = vld [vmem:[%s47] sm:$0x1]
    %v3368 = vperm.slane %v3366, 0
    %v3386 = vunpack.c.l.b16 %v3349
    %v3387 = vunpack.c.l.b16 %v3350
    %v3388 = vunpack.c.l.b16 %v3351
    %v3389 = vunpack.c.l.b16 %v3352
    %v3390 = vunpack.c.l.b16 %v3353
    %v3391 = vunpack.c.l.b16 %v3354
    %v3392 = vunpack.c.l.b16 %v3355
    %v3393 = vunpack.c.l.b16 %v3356
    %v3394 = vunpack.c.l.b16 %v3357
    %v3395 = vunpack.c.l.b16 %v3358
    %v3396 = vunpack.c.l.b16 %v3359
    %v3397 = vunpack.c.l.b16 %v3360
    %v3398 = vunpack.c.l.b16 %v3361
    %v3399 = vunpack.c.l.b16 %v3362
    %v3400 = vunpack.c.l.b16 %v3363
    %v3401 = vunpack.c.l.b16 %v3364
    %v3402 = vpack.c.b16 %v3387, %v3386
    %v3403 = vpack.c.b16 %v3389, %v3388
    %v3404 = vpack.c.b16 %v3391, %v3390
    %v3405 = vpack.c.b16 %v3393, %v3392
    %v3406 = vpack.c.b16 %v3395, %v3394
    %v3407 = vpack.c.b16 %v3397, %v3396
    %v3408 = vpack.c.b16 %v3399, %v3398
    %v3409 = vpack.c.b16 %v3401, %v3400
    %3418 = vmatpush.bf16.msra.mxu0 %v3409
    %3419 = vmatpush.bf16.msra.mxu0 %v3408
    %3420 = vmatpush.bf16.msra.mxu0 %v3407
    %3421 = vmatpush.bf16.msra.mxu0 %v3406
    %3422 = vmatpush.bf16.msra.mxu0 %v3405
    %3423 = vmatpush.bf16.msra.mxu0 %v3404
    %3424 = vmatpush.bf16.msra.mxu0 %v3403
    %3425 = vmatpush.bf16.msra.mxu0 %v3402
    %3426 = vmatmul.bf16.gmra.mxu0 %v3365
    %v3427 = vpop.f32.mrf.mxu0
    %v3428 = vadd.f32 %v3368, %v3427
    %v3429 = vpop.f32.mrf.mxu0
    %v3430 = vadd.f32 %v3368, %v3429
    %3431 = vdwg.mxu0
    %v3432 = vld [vmem:[%s41] sm:$0x1]
    %v3434 = vperm.slane %v3432, 0
    %v3436 = vmul.f32 %v3314, %v3434
    %v3437 = vmul.f32 %v3315, %v3434
    %3438 = vadd.xlane.f32.xlu0 %v3436
    %v3439 = vpop.xlane.xlu0 %3438
    %3440 = vadd.xlane.f32.xlu0 %v3437
    %v3441 = vpop.xlane.xlu0 %3440
    %v3442 = vld [vmem:[#allocation2] sm:$0x1]
    %v3443 = vld [vmem:[%s39] sm:$0x1]
    %v3445 = vperm.slane %v3443, 0
    %v3447 = vmul.f32 %v3345, %v3445
    %v3448 = vmul.f32 %v3346, %v3445
    %v3451 = vrot.slane %v3448, 7
    %v3452 = vsel %vm945, %v3451, %v3447
    %vm3454 = vcmask 1041408
    %v3455 = vsel %vm3454, %v3452, 0.0
    %3456 = vadd.xlane.f32.xlu0 %v3455
    %v3457 = vpop.xlane.xlu0 %3456
    %v3460 = vperm.slane %v3439, %v141
    %v3461 = vperm.slane %v3441, %v141
    %v3462 = vsel %vm945, %v3461, %v3460
    %v3464 = vadd.f32 %v3457, %v3462
    %v3466 = vperm.slane %v3442, 0
    %3467 = vset.pattern.permute.xlu0 0
    %3468 = vperm.xlu0 %3467, %v3466
    %v3469 = vpop.permute.xlu0 %3468
    %v3471 = vadd.f32 %v3464, %v3469
    %vm3472 = vcmp.gt.f32.partialorder %v3471, 0.0
    %v3473 = vmul.f32 %v3471, 0.01
    %v3474 = vsel %vm3472, %v3471, %v3473
    %v3475 = vadd.f32 %v3474, %v3348
    %vm3476 = vcmask 58368
    %v3477 = vsel %vm3476, %v3475, -inf
    %3478 = vmax.xlane.f32.xlu0 %v3477
    %v3479 = vpop.xlane.xlu0 %3478
    %v3480 = vsub.f32 %v3475, %v3479
    %v3481 = vmul.f32 %v3480, 1.442695
    %v3482 = vpow.pop %v3481
    %v3483 = vsel %vm3476, %v3482, 0.0
    %3484 = vadd.xlane.f32.xlu0 %v3483
    %v3485 = vpop.xlane.xlu0 %3484
    %v3486 = vrcp.pop %v3485
    %v3487 = vmul.f32 %v3482, %v3486
    %v3488 = vmul.f32 %v3487, %v3316
    %v3489 = vperm.slane %v3488, 0
    %v3490 = vlaneseq
    %v3491 = vshrl.u32 %v3490, 7
    %3493 = vset.pattern.permute.xlu0 %v3491
    %3494 = vperm.xlu0 %3493, %v3489
    %v3495 = vpop.permute.xlu0 %3494
    %v3496 = vperm.slane %v3488, 1
    %v3497 = vlaneseq
    %v3498 = vshrl.u32 %v3497, 7
    %3500 = vset.pattern.permute.xlu0 %v3498
    %3501 = vperm.xlu0 %3500, %v3496
    %v3502 = vpop.permute.xlu0 %3501
    %v3503 = vmul.f32 %v3495, %v3428
    %v3504 = vmul.f32 %v3502, %v3430
    %v3505 = vrot.slane %v3503, 4
    %v3506 = vadd.f32 %v3503, %v3505
    %v3507 = vrot.slane %v3506, 2
    %v3508 = vadd.f32 %v3506, %v3507
    %v3509 = vrot.slane %v3508, 1
    %v3510 = vadd.f32 %v3508, %v3509
    %v3511 = vrot.slane %v3504, 4
    %v3512 = vadd.f32 %v3504, %v3511
    %v3513 = vrot.slane %v3512, 2
    %v3514 = vadd.f32 %v3512, %v3513
    %v3515 = vrot.slane %v3514, 1
    %v3516 = vadd.f32 %v3514, %v3515
    %vm3517 = vcmp.gt.f32.partialorder %v3510, 0.0
    %vm3518 = vcmp.gt.f32.partialorder %v3516, 0.0
    %v3519 = vmin.f32 %v3510, 0.0
    %v3520 = vmin.f32 %v3516, 0.0
    %v3521 = vmul.f32 %v3519, 1.442695
    %v3522 = vpow.pop %v3521
    %v3523 = vmul.f32 %v3520, 1.442695
    %v3524 = vpow.pop %v3523
    %v3525 = vsub.f32 %v3522, 1.0
    %v3526 = vsub.f32 %v3524, 1.0
    %v3527 = vsel %vm3517, %v3510, %v3525
    %v3528 = vsel %vm3518, %v3516, %v3526
    %v3529 = vld [vmem:[%s49] sm:$0xff]
    %v3530 = vld [vmem:[%s49 + $0x8] sm:$0xf]
    %v3531 = vld [vmem:[%s49 + $0xc] sm:$0xff]
    %v3532 = vld [vmem:[%s49 + $0x14] sm:$0xf]
    %v3533 = vld [vmem:[%s49 + $0x18] sm:$0xff]
    %v3534 = vld [vmem:[%s49 + $0x20] sm:$0xf]
    %v3535 = vld [vmem:[%s49 + $0x24] sm:$0xff]
    %v3536 = vld [vmem:[%s49 + $0x2c] sm:$0xf]
    %v3537 = vld [vmem:[%s49 + $0x30] sm:$0xff]
    %v3538 = vld [vmem:[%s49 + $0x38] sm:$0xf]
    %v3539 = vld [vmem:[%s49 + $0x3c] sm:$0xff]
    %v3540 = vld [vmem:[%s49 + $0x44] sm:$0xf]
    %v3541 = vld [vmem:[%s49 + $0x48] sm:$0xff]
    %v3542 = vld [vmem:[%s49 + $0x50] sm:$0xf]
    %v3543 = vld [vmem:[%s49 + $0x54] sm:$0xff]
    %v3544 = vld [vmem:[%s49 + $0x5c] sm:$0xf]
    %v3545 = vld [vmem:[%s49 + $0x60] sm:$0xff]
    %v3546 = vld [vmem:[%s49 + $0x68] sm:$0xf]
    %v3547 = vld [vmem:[%s49 + $0x6c] sm:$0xff]
    %v3548 = vld [vmem:[%s49 + $0x74] sm:$0xf]
    %v3549 = vld [vmem:[%s49 + $0x78] sm:$0xff]
    %v3550 = vld [vmem:[%s49 + $0x80] sm:$0xf]
    %v3551 = vld [vmem:[%s49 + $0x84] sm:$0xff]
    %v3552 = vld [vmem:[%s49 + $0x8c] sm:$0xf]
    %v3553 = vld [vmem:[%s49 + $0x90] sm:$0xff]
    %v3554 = vld [vmem:[%s49 + $0x98] sm:$0xf]
    %v3555 = vld [vmem:[%s49 + $0x9c] sm:$0xff]
    %v3556 = vld [vmem:[%s49 + $0xa4] sm:$0xf]
    %v3557 = vld [vmem:[%s49 + $0xa8] sm:$0xff]
    %v3558 = vld [vmem:[%s49 + $0xb0] sm:$0xf]
    %v3559 = vld [vmem:[%s49 + $0xb4] sm:$0xff]
    %v3560 = vld [vmem:[%s49 + $0xbc] sm:$0xf]
    %v3561 = vpack.c.bf16 %v3527, %v3527
    %v3562 = vpack.c.bf16 %v3528, %v3528
    %v3563 = vld [vmem:[%s53] sm:$0x7]
    %v3565 = vperm.slane %v3563, 0
    %v3566 = vperm.slane %v3563, 1
    %v3567 = vperm.slane %v3563, 2
    %v3573 = vunpack.c.l.b16 %v3561
    %v3574 = vunpack.c.l.b16 %v3562
    %v3575 = vsel %vm945, %v3574, %v3573
    %v3576 = vpack.c.b16 %v3575, %v3575
    %v3610 = vunpack.c.l.b16 %v3529
    %v3611 = vunpack.c.h.b16 %v3529
    %v3612 = vunpack.c.l.b16 %v3530
    %v3613 = vunpack.c.l.b16 %v3531
    %v3614 = vunpack.c.h.b16 %v3531
    %v3615 = vunpack.c.l.b16 %v3532
    %v3616 = vunpack.c.l.b16 %v3533
    %v3617 = vunpack.c.h.b16 %v3533
    %v3618 = vunpack.c.l.b16 %v3534
    %v3619 = vunpack.c.l.b16 %v3535
    %v3620 = vunpack.c.h.b16 %v3535
    %v3621 = vunpack.c.l.b16 %v3536
    %v3622 = vunpack.c.l.b16 %v3537
    %v3623 = vunpack.c.h.b16 %v3537
    %v3624 = vunpack.c.l.b16 %v3538
    %v3625 = vunpack.c.l.b16 %v3539
    %v3626 = vunpack.c.h.b16 %v3539
    %v3627 = vunpack.c.l.b16 %v3540
    %v3628 = vunpack.c.l.b16 %v3541
    %v3629 = vunpack.c.h.b16 %v3541
    %v3630 = vunpack.c.l.b16 %v3542
    %v3631 = vunpack.c.l.b16 %v3543
    %v3632 = vunpack.c.h.b16 %v3543
    %v3633 = vunpack.c.l.b16 %v3544
    %v3634 = vunpack.c.l.b16 %v3545
    %v3635 = vunpack.c.h.b16 %v3545
    %v3636 = vunpack.c.l.b16 %v3546
    %v3637 = vunpack.c.l.b16 %v3547
    %v3638 = vunpack.c.h.b16 %v3547
    %v3639 = vunpack.c.l.b16 %v3548
    %v3640 = vunpack.c.l.b16 %v3549
    %v3641 = vunpack.c.h.b16 %v3549
    %v3642 = vunpack.c.l.b16 %v3550
    %v3643 = vunpack.c.l.b16 %v3551
    %v3644 = vunpack.c.h.b16 %v3551
    %v3645 = vunpack.c.l.b16 %v3552
    %v3646 = vunpack.c.l.b16 %v3553
    %v3647 = vunpack.c.h.b16 %v3553
    %v3648 = vunpack.c.l.b16 %v3554
    %v3649 = vunpack.c.l.b16 %v3555
    %v3650 = vunpack.c.h.b16 %v3555
    %v3651 = vunpack.c.l.b16 %v3556
    %v3652 = vunpack.c.l.b16 %v3557
    %v3653 = vunpack.c.h.b16 %v3557
    %v3654 = vunpack.c.l.b16 %v3558
    %v3655 = vunpack.c.l.b16 %v3559
    %v3656 = vunpack.c.h.b16 %v3559
    %v3657 = vunpack.c.l.b16 %v3560
    %v3658 = vpack.c.b16 %v3613, %v3610
    %v3659 = vpack.c.b16 %v3614, %v3611
    %v3660 = vpack.c.b16 %v3615, %v3612
    %v3661 = vpack.c.b16 %v3619, %v3616
    %v3662 = vpack.c.b16 %v3620, %v3617
    %v3663 = vpack.c.b16 %v3621, %v3618
    %v3664 = vpack.c.b16 %v3625, %v3622
    %v3665 = vpack.c.b16 %v3626, %v3623
    %v3666 = vpack.c.b16 %v3627, %v3624
    %v3667 = vpack.c.b16 %v3631, %v3628
    %v3668 = vpack.c.b16 %v3632, %v3629
    %v3669 = vpack.c.b16 %v3633, %v3630
    %v3670 = vpack.c.b16 %v3637, %v3634
    %v3671 = vpack.c.b16 %v3638, %v3635
    %v3672 = vpack.c.b16 %v3639, %v3636
    %v3673 = vpack.c.b16 %v3643, %v3640
    %v3674 = vpack.c.b16 %v3644, %v3641
    %v3675 = vpack.c.b16 %v3645, %v3642
    %v3676 = vpack.c.b16 %v3649, %v3646
    %v3677 = vpack.c.b16 %v3650, %v3647
    %v3678 = vpack.c.b16 %v3651, %v3648
    %v3679 = vpack.c.b16 %v3655, %v3652
    %v3680 = vpack.c.b16 %v3656, %v3653
    %v3681 = vpack.c.b16 %v3657, %v3654
    %3706 = vmatpush.bf16.msra.mxu0 %v3679
    %3707 = vmatpush.bf16.msra.mxu0 %v3676
    %3708 = vmatpush.bf16.msra.mxu0 %v3673
    %3709 = vmatpush.bf16.msra.mxu0 %v3670
    %3710 = vmatpush.bf16.msra.mxu0 %v3667
    %3711 = vmatpush.bf16.msra.mxu0 %v3664
    %3712 = vmatpush.bf16.msra.mxu0 %v3661
    %3713 = vmatpush.bf16.msra.mxu0 %v3658
    %3714 = vmatmul.bf16.gmra.mxu0 %v3576
    %v3715 = vpop.f32.mrf.mxu0
    %v3716 = vadd.f32 %v3565, %v3715
    %v3717 = vpop.f32.mrf.mxu0
    %3718 = vdwg.mxu0
    %3719 = vmatpush.bf16.msra.mxu0 %v3680
    %3720 = vmatpush.bf16.msra.mxu0 %v3677
    %3721 = vmatpush.bf16.msra.mxu0 %v3674
    %3722 = vmatpush.bf16.msra.mxu0 %v3671
    %3723 = vmatpush.bf16.msra.mxu0 %v3668
    %3724 = vmatpush.bf16.msra.mxu0 %v3665
    %3725 = vmatpush.bf16.msra.mxu0 %v3662
    %3726 = vmatpush.bf16.msra.mxu0 %v3659
    %3727 = vmatmul.bf16.gmra.mxu0 %v3576
    %v3728 = vpop.f32.mrf.mxu0
    %v3729 = vadd.f32 %v3566, %v3728
    %v3730 = vpop.f32.mrf.mxu0
    %3731 = vdwg.mxu0
    %3732 = vmatpush.bf16.msra.mxu0 %v3681
    %3733 = vmatpush.bf16.msra.mxu0 %v3678
    %3734 = vmatpush.bf16.msra.mxu0 %v3675
    %3735 = vmatpush.bf16.msra.mxu0 %v3672
    %3736 = vmatpush.bf16.msra.mxu0 %v3669
    %3737 = vmatpush.bf16.msra.mxu0 %v3666
    %3738 = vmatpush.bf16.msra.mxu0 %v3663
    %3739 = vmatpush.bf16.msra.mxu0 %v3660
    %3740 = vmatmul.bf16.gmra.mxu0 %v3576
    %v3741 = vpop.f32.mrf.mxu0
    %v3742 = vadd.f32 %v3567, %v3741
    %v3743 = vpop.f32.mrf.mxu0
    %3744 = vdwg.mxu0
    %v3745 = vld [vmem:[%s51] sm:$0xff]
    %v3746 = vld [vmem:[%s51 + $0x8] sm:$0xf]
    %v3747 = vld [vmem:[%s51 + $0xc] sm:$0xff]
    %v3748 = vld [vmem:[%s51 + $0x14] sm:$0xf]
    %v3749 = vld [vmem:[%s51 + $0x18] sm:$0xff]
    %v3750 = vld [vmem:[%s51 + $0x20] sm:$0xf]
    %v3751 = vld [vmem:[%s51 + $0x24] sm:$0xff]
    %v3752 = vld [vmem:[%s51 + $0x2c] sm:$0xf]
    %v3753 = vld [vmem:[%s51 + $0x30] sm:$0xff]
    %v3754 = vld [vmem:[%s51 + $0x38] sm:$0xf]
    %v3755 = vld [vmem:[%s51 + $0x3c] sm:$0xff]
    %v3756 = vld [vmem:[%s51 + $0x44] sm:$0xf]
    %v3757 = vld [vmem:[%s51 + $0x48] sm:$0xff]
    %v3758 = vld [vmem:[%s51 + $0x50] sm:$0xf]
    %v3759 = vld [vmem:[%s51 + $0x54] sm:$0xff]
    %v3760 = vld [vmem:[%s51 + $0x5c] sm:$0xf]
    %v3761 = vld [vmem:[%s51 + $0x60] sm:$0xff]
    %v3762 = vld [vmem:[%s51 + $0x68] sm:$0xf]
    %v3763 = vld [vmem:[%s51 + $0x6c] sm:$0xff]
    %v3764 = vld [vmem:[%s51 + $0x74] sm:$0xf]
    %v3765 = vld [vmem:[%s51 + $0x78] sm:$0xff]
    %v3766 = vld [vmem:[%s51 + $0x80] sm:$0xf]
    %v3767 = vld [vmem:[%s51 + $0x84] sm:$0xff]
    %v3768 = vld [vmem:[%s51 + $0x8c] sm:$0xf]
    %v3769 = vld [vmem:[%s51 + $0x90] sm:$0xff]
    %v3770 = vld [vmem:[%s51 + $0x98] sm:$0xf]
    %v3771 = vld [vmem:[%s51 + $0x9c] sm:$0xff]
    %v3772 = vld [vmem:[%s51 + $0xa4] sm:$0xf]
    %v3773 = vld [vmem:[%s51 + $0xa8] sm:$0xff]
    %v3774 = vld [vmem:[%s51 + $0xb0] sm:$0xf]
    %v3775 = vld [vmem:[%s51 + $0xb4] sm:$0xff]
    %v3776 = vld [vmem:[%s51 + $0xbc] sm:$0xf]
    %v3777 = vpack.c.bf16 %v3338, %v3338
    %v3778 = vpack.c.bf16 %v3344, %v3344
    %v3779 = vld [vmem:[%s55] sm:$0x7]
    %v3781 = vperm.slane %v3779, 0
    %v3782 = vperm.slane %v3779, 1
    %v3783 = vperm.slane %v3779, 2
    %v3789 = vunpack.c.l.b16 %v3777
    %v3790 = vunpack.c.l.b16 %v3778
    %v3791 = vsel %vm945, %v3790, %v3789
    %v3792 = vpack.c.b16 %v3791, %v3791
    %v3826 = vunpack.c.l.b16 %v3745
    %v3827 = vunpack.c.h.b16 %v3745
    %v3828 = vunpack.c.l.b16 %v3746
    %v3829 = vunpack.c.l.b16 %v3747
    %v3830 = vunpack.c.h.b16 %v3747
    %v3831 = vunpack.c.l.b16 %v3748
    %v3832 = vunpack.c.l.b16 %v3749
    %v3833 = vunpack.c.h.b16 %v3749
    %v3834 = vunpack.c.l.b16 %v3750
    %v3835 = vunpack.c.l.b16 %v3751
    %v3836 = vunpack.c.h.b16 %v3751
    %v3837 = vunpack.c.l.b16 %v3752
    %v3838 = vunpack.c.l.b16 %v3753
    %v3839 = vunpack.c.h.b16 %v3753
    %v3840 = vunpack.c.l.b16 %v3754
    %v3841 = vunpack.c.l.b16 %v3755
    %v3842 = vunpack.c.h.b16 %v3755
    %v3843 = vunpack.c.l.b16 %v3756
    %v3844 = vunpack.c.l.b16 %v3757
    %v3845 = vunpack.c.h.b16 %v3757
    %v3846 = vunpack.c.l.b16 %v3758
    %v3847 = vunpack.c.l.b16 %v3759
    %v3848 = vunpack.c.h.b16 %v3759
    %v3849 = vunpack.c.l.b16 %v3760
    %v3850 = vunpack.c.l.b16 %v3761
    %v3851 = vunpack.c.h.b16 %v3761
    %v3852 = vunpack.c.l.b16 %v3762
    %v3853 = vunpack.c.l.b16 %v3763
    %v3854 = vunpack.c.h.b16 %v3763
    %v3855 = vunpack.c.l.b16 %v3764
    %v3856 = vunpack.c.l.b16 %v3765
    %v3857 = vunpack.c.h.b16 %v3765
    %v3858 = vunpack.c.l.b16 %v3766
    %v3859 = vunpack.c.l.b16 %v3767
    %v3860 = vunpack.c.h.b16 %v3767
    %v3861 = vunpack.c.l.b16 %v3768
    %v3862 = vunpack.c.l.b16 %v3769
    %v3863 = vunpack.c.h.b16 %v3769
    %v3864 = vunpack.c.l.b16 %v3770
    %v3865 = vunpack.c.l.b16 %v3771
    %v3866 = vunpack.c.h.b16 %v3771
    %v3867 = vunpack.c.l.b16 %v3772
    %v3868 = vunpack.c.l.b16 %v3773
    %v3869 = vunpack.c.h.b16 %v3773
    %v3870 = vunpack.c.l.b16 %v3774
    %v3871 = vunpack.c.l.b16 %v3775
    %v3872 = vunpack.c.h.b16 %v3775
    %v3873 = vunpack.c.l.b16 %v3776
    %v3874 = vpack.c.b16 %v3829, %v3826
    %v3875 = vpack.c.b16 %v3830, %v3827
    %v3876 = vpack.c.b16 %v3831, %v3828
    %v3877 = vpack.c.b16 %v3835, %v3832
    %v3878 = vpack.c.b16 %v3836, %v3833
    %v3879 = vpack.c.b16 %v3837, %v3834
    %v3880 = vpack.c.b16 %v3841, %v3838
    %v3881 = vpack.c.b16 %v3842, %v3839
    %v3882 = vpack.c.b16 %v3843, %v3840
    %v3883 = vpack.c.b16 %v3847, %v3844
    %v3884 = vpack.c.b16 %v3848, %v3845
    %v3885 = vpack.c.b16 %v3849, %v3846
    %v3886 = vpack.c.b16 %v3853, %v3850
    %v3887 = vpack.c.b16 %v3854, %v3851
    %v3888 = vpack.c.b16 %v3855, %v3852
    %v3889 = vpack.c.b16 %v3859, %v3856
    %v3890 = vpack.c.b16 %v3860, %v3857
    %v3891 = vpack.c.b16 %v3861, %v3858
    %v3892 = vpack.c.b16 %v3865, %v3862
    %v3893 = vpack.c.b16 %v3866, %v3863
    %v3894 = vpack.c.b16 %v3867, %v3864
    %v3895 = vpack.c.b16 %v3871, %v3868
    %v3896 = vpack.c.b16 %v3872, %v3869
    %v3897 = vpack.c.b16 %v3873, %v3870
    %3922 = vmatpush.bf16.msra.mxu0 %v3895
    %3923 = vmatpush.bf16.msra.mxu0 %v3892
    %3924 = vmatpush.bf16.msra.mxu0 %v3889
    %3925 = vmatpush.bf16.msra.mxu0 %v3886
    %3926 = vmatpush.bf16.msra.mxu0 %v3883
    %3927 = vmatpush.bf16.msra.mxu0 %v3880
    %3928 = vmatpush.bf16.msra.mxu0 %v3877
    %3929 = vmatpush.bf16.msra.mxu0 %v3874
    %3930 = vmatmul.bf16.gmra.mxu0 %v3792
    %v3931 = vpop.f32.mrf.mxu0
    %v3932 = vadd.f32 %v3781, %v3931
    %v3933 = vpop.f32.mrf.mxu0
    %3934 = vdwg.mxu0
    %3935 = vmatpush.bf16.msra.mxu0 %v3896
    %3936 = vmatpush.bf16.msra.mxu0 %v3893
    %3937 = vmatpush.bf16.msra.mxu0 %v3890
    %3938 = vmatpush.bf16.msra.mxu0 %v3887
    %3939 = vmatpush.bf16.msra.mxu0 %v3884
    %3940 = vmatpush.bf16.msra.mxu0 %v3881
    %3941 = vmatpush.bf16.msra.mxu0 %v3878
    %3942 = vmatpush.bf16.msra.mxu0 %v3875
    %3943 = vmatmul.bf16.gmra.mxu0 %v3792
    %v3944 = vpop.f32.mrf.mxu0
    %v3945 = vadd.f32 %v3782, %v3944
    %v3946 = vpop.f32.mrf.mxu0
    %3947 = vdwg.mxu0
    %3948 = vmatpush.bf16.msra.mxu0 %v3897
    %3949 = vmatpush.bf16.msra.mxu0 %v3894
    %3950 = vmatpush.bf16.msra.mxu0 %v3891
    %3951 = vmatpush.bf16.msra.mxu0 %v3888
    %3952 = vmatpush.bf16.msra.mxu0 %v3885
    %3953 = vmatpush.bf16.msra.mxu0 %v3882
    %3954 = vmatpush.bf16.msra.mxu0 %v3879
    %3955 = vmatpush.bf16.msra.mxu0 %v3876
    %3956 = vmatmul.bf16.gmra.mxu0 %v3792
    %v3957 = vpop.f32.mrf.mxu0
    %v3958 = vadd.f32 %v3783, %v3957
    %v3959 = vpop.f32.mrf.mxu0
    %3960 = vdwg.mxu0
    %v3961 = vadd.f32 %v3716, %v3932
    %v3962 = vxor.u32 %v3961, 2147483648
    %v3963 = vmul.f32 %v3962, 1.442695
    %v3964 = vpow.pop %v3963
    %v3965 = vadd.f32 %v3964, 1.0
    %v3966 = vrcp.pop %v3965
    %v3967 = vmul.f32 %v3965, %v3966
    %v3968 = vsub.f32 1.0, %v3967
    %v3969 = vmul.f32 %v3966, %v3968
    %v3970 = vadd.f32 %v3966, %v3969
    %vm3971 = vweird.f32 %v3965
    %vm3972 = vweird.f32 %v3966
    %vm3973 = vmor %vm3971, %vm3972
    %v3974 = vsel %vm3973, %v3966, %v3970
    %v3975 = vand.u32 2147483647, %v3965
    %vm3976 = vcmp.eq.f32.partialorder %v3975, 8.507059e+37
    %v3977 = vand.u32 %v3965, 2147483648
    %v3978 = vor.u32 1.1754944e-38, %v3977
    %v3979 = vsel %vm3976, %v3978, %v3974
    %v3980 = vmul.f32 1.0, %v3979
    %v3981 = vadd.f32 %v3729, %v3945
    %v3982 = vxor.u32 %v3981, 2147483648
    %v3983 = vmul.f32 %v3982, 1.442695
    %v3984 = vpow.pop %v3983
    %v3985 = vadd.f32 %v3984, 1.0
    %v3986 = vrcp.pop %v3985
    %v3987 = vmul.f32 %v3985, %v3986
    %v3988 = vsub.f32 1.0, %v3987
    %v3989 = vmul.f32 %v3986, %v3988
    %v3990 = vadd.f32 %v3986, %v3989
    %vm3991 = vweird.f32 %v3985
    %vm3992 = vweird.f32 %v3986
    %vm3993 = vmor %vm3991, %vm3992
    %v3994 = vsel %vm3993, %v3986, %v3990
    %v3995 = vand.u32 2147483647, %v3985
    %vm3996 = vcmp.eq.f32.partialorder %v3995, 8.507059e+37
    %v3997 = vand.u32 %v3985, 2147483648
    %v3998 = vor.u32 1.1754944e-38, %v3997
    %v3999 = vsel %vm3996, %v3998, %v3994
    %v4000 = vmul.f32 1.0, %v3999
    %v4001 = vmul.f32 %v3980, %v3958
    %v4002 = vadd.f32 %v3742, %v4001
    %v4003 = vtanh.pop %v4002
    %v4004 = vsub.f32 1.0, %v4000
    %v4005 = vmul.f32 %v4004, %v4003
    %v4008 = vsel %vm945, %v3344, %v3338
    %v4010 = vmul.f32 %v4000, %v4008
    %v4011 = vadd.f32 %v4005, %v4010
    %v4012 = vmax.f32 %v4011, 0.0
    %v4013 = vmul.f32 %v4012, %v3445
    %v4014 = vsel %vm3454, %v4013, 0.0
    %4015 = vadd.xlane.f32.xlu0 %v4014
    %v4016 = vpop.xlane.xlu0 %4015
    %v4017 = vadd.f32 %v4016, %v3462
    %v4018 = vadd.f32 %v4017, %v3469
    %vm4019 = vcmp.gt.f32.partialorder %v4018, 0.0
    %v4020 = vmul.f32 %v4018, 0.01
    %v4021 = vsel %vm4019, %v4018, %v4020
    %v4022 = vadd.f32 %v4021, %v3348
    %v4023 = vsel %vm3476, %v4022, -inf
    %4024 = vmax.xlane.f32.xlu0 %v4023
    %v4025 = vpop.xlane.xlu0 %4024
    %v4026 = vsub.f32 %v4022, %v4025
    %v4027 = vmul.f32 %v4026, 1.442695
    %v4028 = vpow.pop %v4027
    %v4029 = vsel %vm3476, %v4028, 0.0
    %4030 = vadd.xlane.f32.xlu0 %v4029
    %v4031 = vpop.xlane.xlu0 %4030
    %v4032 = vrcp.pop %v4031
    %v4033 = vmul.f32 %v4028, %v4032
    %v4034 = vmul.f32 %v4033, %v3316
    %v4035 = vperm.slane %v4034, 0
    %v4036 = vlaneseq
    %v4037 = vshrl.u32 %v4036, 7
    %4039 = vset.pattern.permute.xlu0 %v4037
    %4040 = vperm.xlu0 %4039, %v4035
    %v4041 = vpop.permute.xlu0 %4040
    %v4042 = vperm.slane %v4034, 1
    %v4043 = vlaneseq
    %v4044 = vshrl.u32 %v4043, 7
    %4046 = vset.pattern.permute.xlu0 %v4044
    %4047 = vperm.xlu0 %4046, %v4042
    %v4048 = vpop.permute.xlu0 %4047
    %v4049 = vmul.f32 %v4041, %v3428
    %v4050 = vmul.f32 %v4048, %v3430
    %v4051 = vrot.slane %v4049, 4
    %v4052 = vadd.f32 %v4049, %v4051
    %v4053 = vrot.slane %v4052, 2
    %v4054 = vadd.f32 %v4052, %v4053
    %v4055 = vrot.slane %v4054, 1
    %v4056 = vadd.f32 %v4054, %v4055
    %v4057 = vrot.slane %v4050, 4
    %v4058 = vadd.f32 %v4050, %v4057
    %v4059 = vrot.slane %v4058, 2
    %v4060 = vadd.f32 %v4058, %v4059
    %v4061 = vrot.slane %v4060, 1
    %v4062 = vadd.f32 %v4060, %v4061
    %vm4063 = vcmp.gt.f32.partialorder %v4056, 0.0
    %vm4064 = vcmp.gt.f32.partialorder %v4062, 0.0
    %v4065 = vmin.f32 %v4056, 0.0
    %v4066 = vmin.f32 %v4062, 0.0
    %v4067 = vmul.f32 %v4065, 1.442695
    %v4068 = vpow.pop %v4067
    %v4069 = vmul.f32 %v4066, 1.442695
    %v4070 = vpow.pop %v4069
    %v4071 = vsub.f32 %v4068, 1.0
    %v4072 = vsub.f32 %v4070, 1.0
    %v4073 = vsel %vm4063, %v4056, %v4071
    %v4074 = vsel %vm4064, %v4062, %v4072
    %v4075 = vpack.c.bf16 %v4073, %v4073
    %v4076 = vpack.c.bf16 %v4074, %v4074
    %v4079 = vunpack.c.l.b16 %v4075
    %v4080 = vunpack.c.l.b16 %v4076
    %v4081 = vsel %vm945, %v4080, %v4079
    %v4082 = vpack.c.b16 %v4081, %v4081
    %4084 = vmatpush.bf16.msra.mxu0 %v3679
    %4085 = vmatpush.bf16.msra.mxu0 %v3676
    %4086 = vmatpush.bf16.msra.mxu0 %v3673
    %4087 = vmatpush.bf16.msra.mxu0 %v3670
    %4088 = vmatpush.bf16.msra.mxu0 %v3667
    %4089 = vmatpush.bf16.msra.mxu0 %v3664
    %4090 = vmatpush.bf16.msra.mxu0 %v3661
    %4091 = vmatpush.bf16.msra.mxu0 %v3658
    %4092 = vmatmul.bf16.gmra.mxu0 %v4082
    %v4093 = vpop.f32.mrf.mxu0
    %v4094 = vadd.f32 %v3565, %v4093
    %v4095 = vpop.f32.mrf.mxu0
    %4096 = vdwg.mxu0
    %4097 = vmatpush.bf16.msra.mxu0 %v3680
    %4098 = vmatpush.bf16.msra.mxu0 %v3677
    %4099 = vmatpush.bf16.msra.mxu0 %v3674
    %4100 = vmatpush.bf16.msra.mxu0 %v3671
    %4101 = vmatpush.bf16.msra.mxu0 %v3668
    %4102 = vmatpush.bf16.msra.mxu0 %v3665
    %4103 = vmatpush.bf16.msra.mxu0 %v3662
    %4104 = vmatpush.bf16.msra.mxu0 %v3659
    %4105 = vmatmul.bf16.gmra.mxu0 %v4082
    %v4106 = vpop.f32.mrf.mxu0
    %v4107 = vadd.f32 %v3566, %v4106
    %v4108 = vpop.f32.mrf.mxu0
    %4109 = vdwg.mxu0
    %4110 = vmatpush.bf16.msra.mxu0 %v3681
    %4111 = vmatpush.bf16.msra.mxu0 %v3678
    %4112 = vmatpush.bf16.msra.mxu0 %v3675
    %4113 = vmatpush.bf16.msra.mxu0 %v3672
    %4114 = vmatpush.bf16.msra.mxu0 %v3669
    %4115 = vmatpush.bf16.msra.mxu0 %v3666
    %4116 = vmatpush.bf16.msra.mxu0 %v3663
    %4117 = vmatpush.bf16.msra.mxu0 %v3660
    %4118 = vmatmul.bf16.gmra.mxu0 %v4082
    %v4119 = vpop.f32.mrf.mxu0
    %v4120 = vadd.f32 %v3567, %v4119
    %v4121 = vpop.f32.mrf.mxu0
    %4122 = vdwg.mxu0
    %v4123 = vpack.c.bf16 %v4011, %v4011
    %4124 = vmatpush.bf16.msra.mxu0 %v3895
    %4125 = vmatpush.bf16.msra.mxu0 %v3892
    %4126 = vmatpush.bf16.msra.mxu0 %v3889
    %4127 = vmatpush.bf16.msra.mxu0 %v3886
    %4128 = vmatpush.bf16.msra.mxu0 %v3883
    %4129 = vmatpush.bf16.msra.mxu0 %v3880
    %4130 = vmatpush.bf16.msra.mxu0 %v3877
    %4131 = vmatpush.bf16.msra.mxu0 %v3874
    %4132 = vmatmul.bf16.gmra.mxu0 %v4123
    %v4133 = vpop.f32.mrf.mxu0
    %v4134 = vadd.f32 %v3781, %v4133
    %v4135 = vpop.f32.mrf.mxu0
    %4136 = vdwg.mxu0
    %4137 = vmatpush.bf16.msra.mxu0 %v3896
    %4138 = vmatpush.bf16.msra.mxu0 %v3893
    %4139 = vmatpush.bf16.msra.mxu0 %v3890
    %4140 = vmatpush.bf16.msra.mxu0 %v3887
    %4141 = vmatpush.bf16.msra.mxu0 %v3884
    %4142 = vmatpush.bf16.msra.mxu0 %v3881
    %4143 = vmatpush.bf16.msra.mxu0 %v3878
    %4144 = vmatpush.bf16.msra.mxu0 %v3875
    %4145 = vmatmul.bf16.gmra.mxu0 %v4123
    %v4146 = vpop.f32.mrf.mxu0
    %v4147 = vadd.f32 %v3782, %v4146
    %v4148 = vpop.f32.mrf.mxu0
    %4149 = vdwg.mxu0
    %4150 = vmatpush.bf16.msra.mxu0 %v3897
    %4151 = vmatpush.bf16.msra.mxu0 %v3894
    %4152 = vmatpush.bf16.msra.mxu0 %v3891
    %4153 = vmatpush.bf16.msra.mxu0 %v3888
    %4154 = vmatpush.bf16.msra.mxu0 %v3885
    %4155 = vmatpush.bf16.msra.mxu0 %v3882
    %4156 = vmatpush.bf16.msra.mxu0 %v3879
    %4157 = vmatpush.bf16.msra.mxu0 %v3876
    %4158 = vmatmul.bf16.gmra.mxu0 %v4123
    %v4159 = vpop.f32.mrf.mxu0
    %v4160 = vadd.f32 %v3783, %v4159
    %v4161 = vpop.f32.mrf.mxu0
    %4162 = vdwg.mxu0
    %v4163 = vadd.f32 %v4094, %v4134
    %v4164 = vxor.u32 %v4163, 2147483648
    %v4165 = vmul.f32 %v4164, 1.442695
    %v4166 = vpow.pop %v4165
    %v4167 = vadd.f32 %v4166, 1.0
    %v4168 = vrcp.pop %v4167
    %v4169 = vmul.f32 %v4167, %v4168
    %v4170 = vsub.f32 1.0, %v4169
    %v4171 = vmul.f32 %v4168, %v4170
    %v4172 = vadd.f32 %v4168, %v4171
    %vm4173 = vweird.f32 %v4167
    %vm4174 = vweird.f32 %v4168
    %vm4175 = vmor %vm4173, %vm4174
    %v4176 = vsel %vm4175, %v4168, %v4172
    %v4177 = vand.u32 2147483647, %v4167
    %vm4178 = vcmp.eq.f32.partialorder %v4177, 8.507059e+37
    %v4179 = vand.u32 %v4167, 2147483648
    %v4180 = vor.u32 1.1754944e-38, %v4179
    %v4181 = vsel %vm4178, %v4180, %v4176
    %v4182 = vmul.f32 1.0, %v4181
    %v4183 = vadd.f32 %v4107, %v4147
    %v4184 = vxor.u32 %v4183, 2147483648
    %v4185 = vmul.f32 %v4184, 1.442695
    %v4186 = vpow.pop %v4185
    %v4187 = vadd.f32 %v4186, 1.0
    %v4188 = vrcp.pop %v4187
    %v4189 = vmul.f32 %v4187, %v4188
    %v4190 = vsub.f32 1.0, %v4189
    %v4191 = vmul.f32 %v4188, %v4190
    %v4192 = vadd.f32 %v4188, %v4191
    %vm4193 = vweird.f32 %v4187
    %vm4194 = vweird.f32 %v4188
    %vm4195 = vmor %vm4193, %vm4194
    %v4196 = vsel %vm4195, %v4188, %v4192
    %v4197 = vand.u32 2147483647, %v4187
    %vm4198 = vcmp.eq.f32.partialorder %v4197, 8.507059e+37
    %v4199 = vand.u32 %v4187, 2147483648
    %v4200 = vor.u32 1.1754944e-38, %v4199
    %v4201 = vsel %vm4198, %v4200, %v4196
    %v4202 = vmul.f32 1.0, %v4201
    %v4203 = vmul.f32 %v4182, %v4160
    %v4204 = vadd.f32 %v4120, %v4203
    %v4205 = vtanh.pop %v4204
    %v4206 = vsub.f32 1.0, %v4202
    %v4207 = vmul.f32 %v4206, %v4205
    %v4208 = vmul.f32 %v4202, %v4011
    %v4209 = vadd.f32 %v4207, %v4208
    %v4210 = vld [vmem:[%s57] sm:$0xf]
    %v4211 = vld [vmem:[%s57 + $0x4] sm:$0xf]
    %v4212 = vld [vmem:[%s57 + $0x8] sm:$0xf]
    %v4213 = vld [vmem:[%s57 + $0xc] sm:$0xf]
    %v4214 = vld [vmem:[%s57 + $0x10] sm:$0xf]
    %v4215 = vld [vmem:[%s57 + $0x14] sm:$0xf]
    %v4216 = vld [vmem:[%s57 + $0x18] sm:$0xf]
    %v4217 = vld [vmem:[%s57 + $0x1c] sm:$0xf]
    %v4218 = vld [vmem:[%s57 + $0x20] sm:$0xf]
    %v4219 = vld [vmem:[%s57 + $0x24] sm:$0xf]
    %v4220 = vld [vmem:[%s57 + $0x28] sm:$0xf]
    %v4221 = vld [vmem:[%s57 + $0x2c] sm:$0xf]
    %v4222 = vld [vmem:[%s57 + $0x30] sm:$0xf]
    %v4223 = vld [vmem:[%s57 + $0x34] sm:$0xf]
    %v4224 = vld [vmem:[%s57 + $0x38] sm:$0xf]
    %v4225 = vld [vmem:[%s57 + $0x3c] sm:$0xf]
    %v4226 = vpack.c.bf16 %v4209, %v4209
    %v4227 = vld [vmem:[%s59] sm:$0x1]
    %v4229 = vperm.slane %v4227, 0
    %v4247 = vunpack.c.l.b16 %v4210
    %v4248 = vunpack.c.l.b16 %v4211
    %v4249 = vunpack.c.l.b16 %v4212
    %v4250 = vunpack.c.l.b16 %v4213
    %v4251 = vunpack.c.l.b16 %v4214
    %v4252 = vunpack.c.l.b16 %v4215
    %v4253 = vunpack.c.l.b16 %v4216
    %v4254 = vunpack.c.l.b16 %v4217
    %v4255 = vunpack.c.l.b16 %v4218
    %v4256 = vunpack.c.l.b16 %v4219
    %v4257 = vunpack.c.l.b16 %v4220
    %v4258 = vunpack.c.l.b16 %v4221
    %v4259 = vunpack.c.l.b16 %v4222
    %v4260 = vunpack.c.l.b16 %v4223
    %v4261 = vunpack.c.l.b16 %v4224
    %v4262 = vunpack.c.l.b16 %v4225
    %v4263 = vpack.c.b16 %v4248, %v4247
    %v4264 = vpack.c.b16 %v4250, %v4249
    %v4265 = vpack.c.b16 %v4252, %v4251
    %v4266 = vpack.c.b16 %v4254, %v4253
    %v4267 = vpack.c.b16 %v4256, %v4255
    %v4268 = vpack.c.b16 %v4258, %v4257
    %v4269 = vpack.c.b16 %v4260, %v4259
    %v4270 = vpack.c.b16 %v4262, %v4261
    %4279 = vmatpush.bf16.msra.mxu0 %v4270
    %4280 = vmatpush.bf16.msra.mxu0 %v4269
    %4281 = vmatpush.bf16.msra.mxu0 %v4268
    %4282 = vmatpush.bf16.msra.mxu0 %v4267
    %4283 = vmatpush.bf16.msra.mxu0 %v4266
    %4284 = vmatpush.bf16.msra.mxu0 %v4265
    %4285 = vmatpush.bf16.msra.mxu0 %v4264
    %4286 = vmatpush.bf16.msra.mxu0 %v4263
    %4287 = vmatmul.bf16.gmra.mxu0 %v4226
    %v4288 = vpop.f32.mrf.mxu0
    %v4289 = vadd.f32 %v4229, %v4288
    %v4290 = vpop.f32.mrf.mxu0
    %4291 = vdwg.mxu0
    %4292 = vst [vmem:[#allocation3] sm:$0x3] %v4289
    // Predicated region
    $region122: #{fingerprint_forward.1} parent=1 // pred_check
      _
    $region123: #{fingerprint_forward.1} parent=1 // pred_check_branch
      %4294 = sbr.rel (0) target = $region125
    $region124: #{fingerprint_forward.1} parent=1 // pred_region
      %4296 = vsyncadd [#allocation4], 0
      %s4298 = sshll.u32 [#allocation3], 4
      %s4299 = int_to_ptr.vmem [resolvable:$true] %s4298
      %s4300 = sshll.u32 %s61, 4
      %s4301 = int_to_ptr.hbm [resolvable:$true] %s4300
      %4303 = dma.vmem_to_hbm [thread:$0]  %s4299, 32, %s4301, [#allocation4]
    $region125: #{fingerprint_forward.1} parent=1 // pred_fallthru
      _
    // Predicated region
    $region126: #{fingerprint_forward.1} parent=1 // pred_check
      _
    $region127: #{fingerprint_forward.1} parent=1 // pred_check_branch
      %4305 = sbr.rel (0) target = $region129
    $region128: #{fingerprint_forward.1} parent=1 // pred_region
      %4307 = dma.done [#allocation4], 32
    $region129: #{fingerprint_forward.1} parent=1 // pred_fallthru
      _
    %4308 = vsyncpa [#allocation4], 1

</llo_original>
